<compile_context>
chip_gen: v6e
topology: v6e:2x2x1
jax: 0.10.0
libtpu: 0.0.40
codegen_flags: <defaults>
</compile_context>

<pallas_src>
import jax
import jax.numpy as jnp
from jax import lax
from jax.experimental import pallas as pl
from jax.experimental.pallas import tpu as pltpu

BJORCK_BETA = 0.5      # the order-2 update below assumes beta == 0.5
BJORCK_ITERS = 25
BJORCK_ORDER = 2


def _eye(m, dtype=jnp.float32):
    row = lax.broadcasted_iota(jnp.int32, (m, m), 0)
    col = lax.broadcasted_iota(jnp.int32, (m, m), 1)
    return (row == col).astype(dtype)


def _bjorck_orthonormalize(w):
    """Order-2 Bjorck (beta=0.5), Horner-factored, small-side Gram, fully unrolled.

    Mathematically identical to
      w <- (15/8) w - (5/4) w (w^T w) + (3/8) w (w^T w)^2
    using w (w^T w)^k == (w w^T)^k w, but with only 3 MXU matmuls per iteration
    and the Gram matrix taken on the smaller of the two dimensions.
    """
    r, c = w.shape
    if r <= c:
        ident = _eye(r)

        def body(_, w):
            g = lax.dot_general(w, w, (((1,), (1,)), ((), ())),
                                preferred_element_type=jnp.float32)   # (r, r)
            t = (3.0 / 8.0) * g - (5.0 / 4.0) * ident
            p = jnp.dot(g, t, preferred_element_type=jnp.float32) + (15.0 / 8.0) * ident
            return jnp.dot(p, w, preferred_element_type=jnp.float32)
    else:
        ident = _eye(c)

        def body(_, w):
            g = lax.dot_general(w, w, (((0,), (0,)), ((), ())),
                                preferred_element_type=jnp.float32)   # (c, c)
            t = (3.0 / 8.0) * g - (5.0 / 4.0) * ident
            p = jnp.dot(g, t, preferred_element_type=jnp.float32) + (15.0 / 8.0) * ident
            return jnp.dot(w, p, preferred_element_type=jnp.float32)

    return lax.fori_loop(0, BJORCK_ITERS, body, w, unroll=True)


# ---------------------------------------------------------------------------
# Fused kernel: Bjorck orthonormalization + x@w (once, into scratch) and
#               per-row-tile adj_tile @ h + ReLU.
# ---------------------------------------------------------------------------
def _gcorn_fused_kernel(w0_ref, x_ref, adj_ref, o_ref, h_ref):
    # w0_ref : (f_in, f_out_p)  pre-scaled weight.T / scaling, zero-padded lanes
    # x_ref  : (n, f_in)        full node features
    # adj_ref: (tn, n)          adjacency row tile
    # o_ref  : (tn, f_out_p)    output row tile (lane-dense)
    # h_ref  : VMEM scratch (n, f_out_p) = x @ bjorck(w0), written on step 0 only
    @pl.when(pl.program_id(0) == 0)
    def _():
        w_ortho = _bjorck_orthonormalize(w0_ref[...])          # (f_in, f_out_p)
        h_ref[...] = jnp.dot(x_ref[...], w_ortho,
                             preferred_element_type=jnp.float32)

    out = jnp.dot(adj_ref[...], h_ref[...], preferred_element_type=jnp.float32)
    o_ref[...] = jnp.maximum(out, 0.0).astype(o_ref.dtype)      # activation = ReLU


def conv_class_forward(x, adj, weight, *, row_tile=512):
    """x: (N, F_in) f32, adj: (N, N) f32, weight: (F_out, F_in) f32."""
    n, f_in = x.shape
    f_out = weight.shape[0]

    # Safe scaling: sqrt(||W||_1 * ||W||_inf) >= ||W||_2 (spectral-norm bound).
    # TODO(synk): GCORN's scale_values() source was not included in the module
    # snippet; this is the standard safe Bjorck scaling used by Bjorck layers.
    abs_w = jnp.abs(weight)
    scaling = jnp.sqrt(jnp.max(jnp.sum(abs_w, axis=0)) * jnp.max(jnp.sum(abs_w, axis=1)))
    inv_scale = (1.0 / scaling).astype(jnp.float32)

    # Pre-scale and lane-pad F_out up to a multiple of 128. Zero columns are
    # exact pass-throughs of the Bjorck iteration and both matmuls, and are
    # sliced off below, so results are bit-identical on the real columns.
    f_out_p = pl.cdiv(f_out, 128) * 128
    w0 = jnp.zeros((f_in, f_out_p), jnp.float32)
    w0 = w0.at[:, :f_out].set(weight.T.astype(jnp.float32) * inv_scale)

    # Row-tile the adjacency; at the demo size this is a single grid step.
    # (For large graphs n should be a multiple of row_tile.)
    tn = n if n <= row_tile else row_tile
    grid = (pl.cdiv(n, tn),)
    # TODO(synk): for very large N add a K grid axis over adj columns with a
    # VMEM accumulator so tiles stay bounded on v7x's 64 MiB VMEM.

    out_p = pl.pallas_call(
        _gcorn_fused_kernel,
        out_shape=jax.ShapeDtypeStruct((n, f_out_p), jnp.float32),
        grid_spec=pltpu.PrefetchScalarGridSpec(
            num_scalar_prefetch=0,
            grid=grid,
            in_specs=[
                pl.BlockSpec((f_in, f_out_p), lambda i: (0, 0)),  # w0 (fetched once)
                pl.BlockSpec((n, f_in), lambda i: (0, 0)),        # full x (fetched once)
                pl.BlockSpec((tn, n), lambda i: (i, 0)),          # adj row tile
            ],
            out_specs=pl.BlockSpec((tn, f_out_p), lambda i: (i, 0)),
            scratch_shapes=[pltpu.VMEM((n, f_out_p), jnp.float32)],
        ),
        # "arbitrary": grid step 0 writes the shared h scratch read by later
        # steps, so the row axis must run sequentially (grid is (1,) at demo size).
        compiler_params=pltpu.CompilerParams(
            dimension_semantics=("arbitrary",)),
    )(w0, x.astype(jnp.float32), adj.astype(jnp.float32))

    return out_p[:, :f_out]


# ---------------------------------------------------------------------------
# Pure-JAX reference (mirrors the PyTorch forward, standard Bjorck form)
# ---------------------------------------------------------------------------
def reference_forward(x, adj, weight):
    abs_w = jnp.abs(weight)
    scaling = jnp.sqrt(jnp.max(jnp.sum(abs_w, axis=0)) * jnp.max(jnp.sum(abs_w, axis=1)))
    w = weight.T / scaling
    for _ in range(BJORCK_ITERS):
        wtw = w.T @ w
        w = (15.0 / 8.0) * w - (5.0 / 4.0) * (w @ wtw) + (3.0 / 8.0) * (w @ (wtw @ wtw))
    ortho_w = w.T                         # (F_out, F_in)
    h = x @ ortho_w.T                     # F.linear(x, ortho_w)
    return jnp.maximum(adj @ h, 0.0)      # activation(torch.mm(adj, h))


def orthogonal_init(key, rows, cols, gain):
    """Deterministic equivalent of nn.init.orthogonal_(W, gain)."""
    n, m = max(rows, cols), min(rows, cols)
    a = jax.random.normal(key, (n, m), dtype=jnp.float32)
    q, r = jnp.linalg.qr(a)
    q = q * jnp.sign(jnp.diagonal(r))
    if rows < cols:
        q = q.T
    return gain * q[:rows, :cols]


if __name__ == "__main__":
    N, INPUT_DIM, OUTPUT_DIM = 16, 8, 32

    key = jax.random.PRNGKey(0)
    k_w, k_x, k_a = jax.random.split(key, 3)

    # weight: (output_dim, input_dim), orthogonal init with gain 1/sqrt(input_dim)
    stdv = 1.0 / jnp.sqrt(jnp.float32(INPUT_DIM))
    weight = orthogonal_init(k_w, OUTPUT_DIM, INPUT_DIM, stdv)

    x = jax.random.normal(k_x, (N, INPUT_DIM), dtype=jnp.float32)

    # Symmetric 0/1 adjacency with self loops, row-normalized.
    a = (jax.random.uniform(k_a, (N, N)) < 0.3).astype(jnp.float32)
    a = jnp.maximum(a, a.T) + jnp.eye(N, dtype=jnp.float32)
    adj = a / jnp.sum(a, axis=1, keepdims=True)

    out = conv_class_forward(x, adj, weight)
    jax.block_until_ready(out)

    ref = reference_forward(x, adj, weight)
    assert out.shape == (N, OUTPUT_DIM)
    assert jnp.allclose(out, ref, atol=1e-4, rtol=1e-4), "mismatch vs reference"

    print("KERNEL_OK")
</pallas_src>

<mosaic_0001>
module attributes {stable_mosaic.version = 11 : i64} {
  func.func @_gcorn_fused_kernel(%arg0: i32, %arg1: memref<8x128xf32, #tpu.memory_space<vmem>>, %arg2: memref<16x8xf32, #tpu.memory_space<vmem>>, %arg3: memref<16x16xf32, #tpu.memory_space<vmem>>, %arg4: memref<16x128xf32, #tpu.memory_space<vmem>>, %arg5: memref<16x128xf32, #tpu.memory_space<vmem>>) attributes {dimension_semantics = [#tpu.dimension_semantics<arbitrary>], iteration_bounds = array<i64: 1>, scalar_prefetch = 0 : i64, scratch_operands = 1 : i64, tpu.core_type = #tpu.core_type<tc>, window_params = [{pipeline_mode = #tpu.pipeline_mode<synchronous>, transform_indices = @transform_0, window_bounds = array<i64: 8, 128>}, {pipeline_mode = #tpu.pipeline_mode<synchronous>, transform_indices = @transform_1, window_bounds = array<i64: 16, 8>}, {transform_indices = @transform_2, window_bounds = array<i64: 16, 16>}, {transform_indices = @transform_3, window_bounds = array<i64: 16, 128>}]} {
    %c0_i32 = arith.constant 0 : i32
    %0 = arith.cmpi eq, %arg0, %c0_i32 : i32
    %1 = arith.extui %0 : i1 to i32
    %c0_i32_0 = arith.constant 0 : i32
    %2 = arith.cmpi ne, %1, %c0_i32_0 : i32
    scf.if %2 {
      %c0_7 = arith.constant 0 : index
      %c0_8 = arith.constant 0 : index
      %9 = vector.load %arg1[%c0_7, %c0_8] : memref<8x128xf32, #tpu.memory_space<vmem>>, vector<8x128xf32>
      %10 = tpu.iota {dimensions = array<i32: 0>} : vector<8x8xi32>
      %11 = tpu.iota {dimensions = array<i32: 1>} : vector<8x8xi32>
      %12 = arith.cmpi eq, %10, %11 : vector<8x8xi32>
      %13 = arith.extui %12 : vector<8x8xi1> to vector<8x8xi32>
      %14 = arith.sitofp %13 : vector<8x8xi32> to vector<8x8xf32>
      %c0_i32_9 = arith.constant 0 : i32
      %cst_10 = arith.constant dense<0.000000e+00> : vector<8x8xf32>
      %15 = tpu.matmul %9, %9, %cst_10 {dimension_numbers = #tpu.dot_dimension_numbers<[1], [1], [0], [0], [0, 0, 1, 0], [], []>} : vector<8x128xf32>, vector<8x128xf32>, vector<8x8xf32> -> vector<8x8xf32>
      %cst_11 = arith.constant 3.750000e-01 : f32
      %16 = vector.broadcast %cst_11 : f32 to vector<8x8xf32>
      %17 = arith.mulf %16, %15 : vector<8x8xf32>
      %cst_12 = arith.constant 1.250000e+00 : f32
      %18 = vector.broadcast %cst_12 : f32 to vector<8x8xf32>
      %19 = arith.mulf %18, %14 : vector<8x8xf32>
      %20 = arith.subf %17, %19 : vector<8x8xf32>
      %cst_13 = arith.constant dense<0.000000e+00> : vector<8x8xf32>
      %21 = tpu.matmul %15, %20, %cst_13 {dimension_numbers = #tpu.dot_dimension_numbers<[1], [0], [0], [1], [0, 0, 1, 1], [], []>} : vector<8x8xf32>, vector<8x8xf32>, vector<8x8xf32> -> vector<8x8xf32>
      %cst_14 = arith.constant 1.875000e+00 : f32
      %22 = vector.broadcast %cst_14 : f32 to vector<8x8xf32>
      %23 = arith.mulf %22, %14 : vector<8x8xf32>
      %24 = arith.addf %21, %23 : vector<8x8xf32>
      %cst_15 = arith.constant dense<0.000000e+00> : vector<8x128xf32>
      %25 = tpu.matmul %24, %9, %cst_15 {dimension_numbers = #tpu.dot_dimension_numbers<[1], [0], [0], [1], [0, 0, 1, 1], [], []>} : vector<8x8xf32>, vector<8x128xf32>, vector<8x128xf32> -> vector<8x128xf32>
      %c1_i32 = arith.constant 1 : i32
      %cst_16 = arith.constant dense<0.000000e+00> : vector<8x8xf32>
      %26 = tpu.matmul %25, %25, %cst_16 {dimension_numbers = #tpu.dot_dimension_numbers<[1], [1], [0], [0], [0, 0, 1, 0], [], []>} : vector<8x128xf32>, vector<8x128xf32>, vector<8x8xf32> -> vector<8x8xf32>
      %cst_17 = arith.constant 3.750000e-01 : f32
      %27 = vector.broadcast %cst_17 : f32 to vector<8x8xf32>
      %28 = arith.mulf %27, %26 : vector<8x8xf32>
      %cst_18 = arith.constant 1.250000e+00 : f32
      %29 = vector.broadcast %cst_18 : f32 to vector<8x8xf32>
      %30 = arith.mulf %29, %14 : vector<8x8xf32>
      %31 = arith.subf %28, %30 : vector<8x8xf32>
      %cst_19 = arith.constant dense<0.000000e+00> : vector<8x8xf32>
      %32 = tpu.matmul %26, %31, %cst_19 {dimension_numbers = #tpu.dot_dimension_numbers<[1], [0], [0], [1], [0, 0, 1, 1], [], []>} : vector<8x8xf32>, vector<8x8xf32>, vector<8x8xf32> -> vector<8x8xf32>
      %cst_20 = arith.constant 1.875000e+00 : f32
      %33 = vector.broadcast %cst_20 : f32 to vector<8x8xf32>
      %34 = arith.mulf %33, %14 : vector<8x8xf32>
      %35 = arith.addf %32, %34 : vector<8x8xf32>
      %cst_21 = arith.constant dense<0.000000e+00> : vector<8x128xf32>
      %36 = tpu.matmul %35, %25, %cst_21 {dimension_numbers = #tpu.dot_dimension_numbers<[1], [0], [0], [1], [0, 0, 1, 1], [], []>} : vector<8x8xf32>, vector<8x128xf32>, vector<8x128xf32> -> vector<8x128xf32>
      %c2_i32 = arith.constant 2 : i32
      %cst_22 = arith.constant dense<0.000000e+00> : vector<8x8xf32>
      %37 = tpu.matmul %36, %36, %cst_22 {dimension_numbers = #tpu.dot_dimension_numbers<[1], [1], [0], [0], [0, 0, 1, 0], [], []>} : vector<8x128xf32>, vector<8x128xf32>, vector<8x8xf32> -> vector<8x8xf32>
      %cst_23 = arith.constant 3.750000e-01 : f32
      %38 = vector.broadcast %cst_23 : f32 to vector<8x8xf32>
      %39 = arith.mulf %38, %37 : vector<8x8xf32>
      %cst_24 = arith.constant 1.250000e+00 : f32
      %40 = vector.broadcast %cst_24 : f32 to vector<8x8xf32>
      %41 = arith.mulf %40, %14 : vector<8x8xf32>
      %42 = arith.subf %39, %41 : vector<8x8xf32>
      %cst_25 = arith.constant dense<0.000000e+00> : vector<8x8xf32>
      %43 = tpu.matmul %37, %42, %cst_25 {dimension_numbers = #tpu.dot_dimension_numbers<[1], [0], [0], [1], [0, 0, 1, 1], [], []>} : vector<8x8xf32>, vector<8x8xf32>, vector<8x8xf32> -> vector<8x8xf32>
      %cst_26 = arith.constant 1.875000e+00 : f32
      %44 = vector.broadcast %cst_26 : f32 to vector<8x8xf32>
      %45 = arith.mulf %44, %14 : vector<8x8xf32>
      %46 = arith.addf %43, %45 : vector<8x8xf32>
      %cst_27 = arith.constant dense<0.000000e+00> : vector<8x128xf32>
      %47 = tpu.matmul %46, %36, %cst_27 {dimension_numbers = #tpu.dot_dimension_numbers<[1], [0], [0], [1], [0, 0, 1, 1], [], []>} : vector<8x8xf32>, vector<8x128xf32>, vector<8x128xf32> -> vector<8x128xf32>
      %c3_i32 = arith.constant 3 : i32
      %cst_28 = arith.constant dense<0.000000e+00> : vector<8x8xf32>
      %48 = tpu.matmul %47, %47, %cst_28 {dimension_numbers = #tpu.dot_dimension_numbers<[1], [1], [0], [0], [0, 0, 1, 0], [], []>} : vector<8x128xf32>, vector<8x128xf32>, vector<8x8xf32> -> vector<8x8xf32>
      %cst_29 = arith.constant 3.750000e-01 : f32
      %49 = vector.broadcast %cst_29 : f32 to vector<8x8xf32>
      %50 = arith.mulf %49, %48 : vector<8x8xf32>
      %cst_30 = arith.constant 1.250000e+00 : f32
      %51 = vector.broadcast %cst_30 : f32 to vector<8x8xf32>
      %52 = arith.mulf %51, %14 : vector<8x8xf32>
      %53 = arith.subf %50, %52 : vector<8x8xf32>
      %cst_31 = arith.constant dense<0.000000e+00> : vector<8x8xf32>
      %54 = tpu.matmul %48, %53, %cst_31 {dimension_numbers = #tpu.dot_dimension_numbers<[1], [0], [0], [1], [0, 0, 1, 1], [], []>} : vector<8x8xf32>, vector<8x8xf32>, vector<8x8xf32> -> vector<8x8xf32>
      %cst_32 = arith.constant 1.875000e+00 : f32
      %55 = vector.broadcast %cst_32 : f32 to vector<8x8xf32>
      %56 = arith.mulf %55, %14 : vector<8x8xf32>
      %57 = arith.addf %54, %56 : vector<8x8xf32>
      %cst_33 = arith.constant dense<0.000000e+00> : vector<8x128xf32>
      %58 = tpu.matmul %57, %47, %cst_33 {dimension_numbers = #tpu.dot_dimension_numbers<[1], [0], [0], [1], [0, 0, 1, 1], [], []>} : vector<8x8xf32>, vector<8x128xf32>, vector<8x128xf32> -> vector<8x128xf32>
      %c4_i32 = arith.constant 4 : i32
      %cst_34 = arith.constant dense<0.000000e+00> : vector<8x8xf32>
      %59 = tpu.matmul %58, %58, %cst_34 {dimension_numbers = #tpu.dot_dimension_numbers<[1], [1], [0], [0], [0, 0, 1, 0], [], []>} : vector<8x128xf32>, vector<8x128xf32>, vector<8x8xf32> -> vector<8x8xf32>
      %cst_35 = arith.constant 3.750000e-01 : f32
      %60 = vector.broadcast %cst_35 : f32 to vector<8x8xf32>
      %61 = arith.mulf %60, %59 : vector<8x8xf32>
      %cst_36 = arith.constant 1.250000e+00 : f32
      %62 = vector.broadcast %cst_36 : f32 to vector<8x8xf32>
      %63 = arith.mulf %62, %14 : vector<8x8xf32>
      %64 = arith.subf %61, %63 : vector<8x8xf32>
      %cst_37 = arith.constant dense<0.000000e+00> : vector<8x8xf32>
      %65 = tpu.matmul %59, %64, %cst_37 {dimension_numbers = #tpu.dot_dimension_numbers<[1], [0], [0], [1], [0, 0, 1, 1], [], []>} : vector<8x8xf32>, vector<8x8xf32>, vector<8x8xf32> -> vector<8x8xf32>
      %cst_38 = arith.constant 1.875000e+00 : f32
      %66 = vector.broadcast %cst_38 : f32 to vector<8x8xf32>
      %67 = arith.mulf %66, %14 : vector<8x8xf32>
      %68 = arith.addf %65, %67 : vector<8x8xf32>
      %cst_39 = arith.constant dense<0.000000e+00> : vector<8x128xf32>
      %69 = tpu.matmul %68, %58, %cst_39 {dimension_numbers = #tpu.dot_dimension_numbers<[1], [0], [0], [1], [0, 0, 1, 1], [], []>} : vector<8x8xf32>, vector<8x128xf32>, vector<8x128xf32> -> vector<8x128xf32>
      %c5_i32 = arith.constant 5 : i32
      %cst_40 = arith.constant dense<0.000000e+00> : vector<8x8xf32>
      %70 = tpu.matmul %69, %69, %cst_40 {dimension_numbers = #tpu.dot_dimension_numbers<[1], [1], [0], [0], [0, 0, 1, 0], [], []>} : vector<8x128xf32>, vector<8x128xf32>, vector<8x8xf32> -> vector<8x8xf32>
      %cst_41 = arith.constant 3.750000e-01 : f32
      %71 = vector.broadcast %cst_41 : f32 to vector<8x8xf32>
      %72 = arith.mulf %71, %70 : vector<8x8xf32>
      %cst_42 = arith.constant 1.250000e+00 : f32
      %73 = vector.broadcast %cst_42 : f32 to vector<8x8xf32>
      %74 = arith.mulf %73, %14 : vector<8x8xf32>
      %75 = arith.subf %72, %74 : vector<8x8xf32>
      %cst_43 = arith.constant dense<0.000000e+00> : vector<8x8xf32>
      %76 = tpu.matmul %70, %75, %cst_43 {dimension_numbers = #tpu.dot_dimension_numbers<[1], [0], [0], [1], [0, 0, 1, 1], [], []>} : vector<8x8xf32>, vector<8x8xf32>, vector<8x8xf32> -> vector<8x8xf32>
      %cst_44 = arith.constant 1.875000e+00 : f32
      %77 = vector.broadcast %cst_44 : f32 to vector<8x8xf32>
      %78 = arith.mulf %77, %14 : vector<8x8xf32>
      %79 = arith.addf %76, %78 : vector<8x8xf32>
      %cst_45 = arith.constant dense<0.000000e+00> : vector<8x128xf32>
      %80 = tpu.matmul %79, %69, %cst_45 {dimension_numbers = #tpu.dot_dimension_numbers<[1], [0], [0], [1], [0, 0, 1, 1], [], []>} : vector<8x8xf32>, vector<8x128xf32>, vector<8x128xf32> -> vector<8x128xf32>
      %c6_i32 = arith.constant 6 : i32
      %cst_46 = arith.constant dense<0.000000e+00> : vector<8x8xf32>
      %81 = tpu.matmul %80, %80, %cst_46 {dimension_numbers = #tpu.dot_dimension_numbers<[1], [1], [0], [0], [0, 0, 1, 0], [], []>} : vector<8x128xf32>, vector<8x128xf32>, vector<8x8xf32> -> vector<8x8xf32>
      %cst_47 = arith.constant 3.750000e-01 : f32
      %82 = vector.broadcast %cst_47 : f32 to vector<8x8xf32>
      %83 = arith.mulf %82, %81 : vector<8x8xf32>
      %cst_48 = arith.constant 1.250000e+00 : f32
      %84 = vector.broadcast %cst_48 : f32 to vector<8x8xf32>
      %85 = arith.mulf %84, %14 : vector<8x8xf32>
      %86 = arith.subf %83, %85 : vector<8x8xf32>
      %cst_49 = arith.constant dense<0.000000e+00> : vector<8x8xf32>
      %87 = tpu.matmul %81, %86, %cst_49 {dimension_numbers = #tpu.dot_dimension_numbers<[1], [0], [0], [1], [0, 0, 1, 1], [], []>} : vector<8x8xf32>, vector<8x8xf32>, vector<8x8xf32> -> vector<8x8xf32>
      %cst_50 = arith.constant 1.875000e+00 : f32
      %88 = vector.broadcast %cst_50 : f32 to vector<8x8xf32>
      %89 = arith.mulf %88, %14 : vector<8x8xf32>
      %90 = arith.addf %87, %89 : vector<8x8xf32>
      %cst_51 = arith.constant dense<0.000000e+00> : vector<8x128xf32>
      %91 = tpu.matmul %90, %80, %cst_51 {dimension_numbers = #tpu.dot_dimension_numbers<[1], [0], [0], [1], [0, 0, 1, 1], [], []>} : vector<8x8xf32>, vector<8x128xf32>, vector<8x128xf32> -> vector<8x128xf32>
      %c7_i32 = arith.constant 7 : i32
      %cst_52 = arith.constant dense<0.000000e+00> : vector<8x8xf32>
      %92 = tpu.matmul %91, %91, %cst_52 {dimension_numbers = #tpu.dot_dimension_numbers<[1], [1], [0], [0], [0, 0, 1, 0], [], []>} : vector<8x128xf32>, vector<8x128xf32>, vector<8x8xf32> -> vector<8x8xf32>
      %cst_53 = arith.constant 3.750000e-01 : f32
      %93 = vector.broadcast %cst_53 : f32 to vector<8x8xf32>
      %94 = arith.mulf %93, %92 : vector<8x8xf32>
      %cst_54 = arith.constant 1.250000e+00 : f32
      %95 = vector.broadcast %cst_54 : f32 to vector<8x8xf32>
      %96 = arith.mulf %95, %14 : vector<8x8xf32>
      %97 = arith.subf %94, %96 : vector<8x8xf32>
      %cst_55 = arith.constant dense<0.000000e+00> : vector<8x8xf32>
      %98 = tpu.matmul %92, %97, %cst_55 {dimension_numbers = #tpu.dot_dimension_numbers<[1], [0], [0], [1], [0, 0, 1, 1], [], []>} : vector<8x8xf32>, vector<8x8xf32>, vector<8x8xf32> -> vector<8x8xf32>
      %cst_56 = arith.constant 1.875000e+00 : f32
      %99 = vector.broadcast %cst_56 : f32 to vector<8x8xf32>
      %100 = arith.mulf %99, %14 : vector<8x8xf32>
      %101 = arith.addf %98, %100 : vector<8x8xf32>
      %cst_57 = arith.constant dense<0.000000e+00> : vector<8x128xf32>
      %102 = tpu.matmul %101, %91, %cst_57 {dimension_numbers = #tpu.dot_dimension_numbers<[1], [0], [0], [1], [0, 0, 1, 1], [], []>} : vector<8x8xf32>, vector<8x128xf32>, vector<8x128xf32> -> vector<8x128xf32>
      %c8_i32 = arith.constant 8 : i32
      %cst_58 = arith.constant dense<0.000000e+00> : vector<8x8xf32>
      %103 = tpu.matmul %102, %102, %cst_58 {dimension_numbers = #tpu.dot_dimension_numbers<[1], [1], [0], [0], [0, 0, 1, 0], [], []>} : vector<8x128xf32>, vector<8x128xf32>, vector<8x8xf32> -> vector<8x8xf32>
      %cst_59 = arith.constant 3.750000e-01 : f32
      %104 = vector.broadcast %cst_59 : f32 to vector<8x8xf32>
      %105 = arith.mulf %104, %103 : vector<8x8xf32>
      %cst_60 = arith.constant 1.250000e+00 : f32
      %106 = vector.broadcast %cst_60 : f32 to vector<8x8xf32>
      %107 = arith.mulf %106, %14 : vector<8x8xf32>
      %108 = arith.subf %105, %107 : vector<8x8xf32>
      %cst_61 = arith.constant dense<0.000000e+00> : vector<8x8xf32>
      %109 = tpu.matmul %103, %108, %cst_61 {dimension_numbers = #tpu.dot_dimension_numbers<[1], [0], [0], [1], [0, 0, 1, 1], [], []>} : vector<8x8xf32>, vector<8x8xf32>, vector<8x8xf32> -> vector<8x8xf32>
      %cst_62 = arith.constant 1.875000e+00 : f32
      %110 = vector.broadcast %cst_62 : f32 to vector<8x8xf32>
      %111 = arith.mulf %110, %14 : vector<8x8xf32>
      %112 = arith.addf %109, %111 : vector<8x8xf32>
      %cst_63 = arith.constant dense<0.000000e+00> : vector<8x128xf32>
      %113 = tpu.matmul %112, %102, %cst_63 {dimension_numbers = #tpu.dot_dimension_numbers<[1], [0], [0], [1], [0, 0, 1, 1], [], []>} : vector<8x8xf32>, vector<8x128xf32>, vector<8x128xf32> -> vector<8x128xf32>
      %c9_i32 = arith.constant 9 : i32
      %cst_64 = arith.constant dense<0.000000e+00> : vector<8x8xf32>
      %114 = tpu.matmul %113, %113, %cst_64 {dimension_numbers = #tpu.dot_dimension_numbers<[1], [1], [0], [0], [0, 0, 1, 0], [], []>} : vector<8x128xf32>, vector<8x128xf32>, vector<8x8xf32> -> vector<8x8xf32>
      %cst_65 = arith.constant 3.750000e-01 : f32
      %115 = vector.broadcast %cst_65 : f32 to vector<8x8xf32>
      %116 = arith.mulf %115, %114 : vector<8x8xf32>
      %cst_66 = arith.constant 1.250000e+00 : f32
      %117 = vector.broadcast %cst_66 : f32 to vector<8x8xf32>
      %118 = arith.mulf %117, %14 : vector<8x8xf32>
      %119 = arith.subf %116, %118 : vector<8x8xf32>
      %cst_67 = arith.constant dense<0.000000e+00> : vector<8x8xf32>
      %120 = tpu.matmul %114, %119, %cst_67 {dimension_numbers = #tpu.dot_dimension_numbers<[1], [0], [0], [1], [0, 0, 1, 1], [], []>} : vector<8x8xf32>, vector<8x8xf32>, vector<8x8xf32> -> vector<8x8xf32>
      %cst_68 = arith.constant 1.875000e+00 : f32
      %121 = vector.broadcast %cst_68 : f32 to vector<8x8xf32>
      %122 = arith.mulf %121, %14 : vector<8x8xf32>
      %123 = arith.addf %120, %122 : vector<8x8xf32>
      %cst_69 = arith.constant dense<0.000000e+00> : vector<8x128xf32>
      %124 = tpu.matmul %123, %113, %cst_69 {dimension_numbers = #tpu.dot_dimension_numbers<[1], [0], [0], [1], [0, 0, 1, 1], [], []>} : vector<8x8xf32>, vector<8x128xf32>, vector<8x128xf32> -> vector<8x128xf32>
      %c10_i32 = arith.constant 10 : i32
      %cst_70 = arith.constant dense<0.000000e+00> : vector<8x8xf32>
      %125 = tpu.matmul %124, %124, %cst_70 {dimension_numbers = #tpu.dot_dimension_numbers<[1], [1], [0], [0], [0, 0, 1, 0], [], []>} : vector<8x128xf32>, vector<8x128xf32>, vector<8x8xf32> -> vector<8x8xf32>
      %cst_71 = arith.constant 3.750000e-01 : f32
      %126 = vector.broadcast %cst_71 : f32 to vector<8x8xf32>
      %127 = arith.mulf %126, %125 : vector<8x8xf32>
      %cst_72 = arith.constant 1.250000e+00 : f32
      %128 = vector.broadcast %cst_72 : f32 to vector<8x8xf32>
      %129 = arith.mulf %128, %14 : vector<8x8xf32>
      %130 = arith.subf %127, %129 : vector<8x8xf32>
      %cst_73 = arith.constant dense<0.000000e+00> : vector<8x8xf32>
      %131 = tpu.matmul %125, %130, %cst_73 {dimension_numbers = #tpu.dot_dimension_numbers<[1], [0], [0], [1], [0, 0, 1, 1], [], []>} : vector<8x8xf32>, vector<8x8xf32>, vector<8x8xf32> -> vector<8x8xf32>
      %cst_74 = arith.constant 1.875000e+00 : f32
      %132 = vector.broadcast %cst_74 : f32 to vector<8x8xf32>
      %133 = arith.mulf %132, %14 : vector<8x8xf32>
      %134 = arith.addf %131, %133 : vector<8x8xf32>
      %cst_75 = arith.constant dense<0.000000e+00> : vector<8x128xf32>
      %135 = tpu.matmul %134, %124, %cst_75 {dimension_numbers = #tpu.dot_dimension_numbers<[1], [0], [0], [1], [0, 0, 1, 1], [], []>} : vector<8x8xf32>, vector<8x128xf32>, vector<8x128xf32> -> vector<8x128xf32>
      %c11_i32 = arith.constant 11 : i32
      %cst_76 = arith.constant dense<0.000000e+00> : vector<8x8xf32>
      %136 = tpu.matmul %135, %135, %cst_76 {dimension_numbers = #tpu.dot_dimension_numbers<[1], [1], [0], [0], [0, 0, 1, 0], [], []>} : vector<8x128xf32>, vector<8x128xf32>, vector<8x8xf32> -> vector<8x8xf32>
      %cst_77 = arith.constant 3.750000e-01 : f32
      %137 = vector.broadcast %cst_77 : f32 to vector<8x8xf32>
      %138 = arith.mulf %137, %136 : vector<8x8xf32>
      %cst_78 = arith.constant 1.250000e+00 : f32
      %139 = vector.broadcast %cst_78 : f32 to vector<8x8xf32>
      %140 = arith.mulf %139, %14 : vector<8x8xf32>
      %141 = arith.subf %138, %140 : vector<8x8xf32>
      %cst_79 = arith.constant dense<0.000000e+00> : vector<8x8xf32>
      %142 = tpu.matmul %136, %141, %cst_79 {dimension_numbers = #tpu.dot_dimension_numbers<[1], [0], [0], [1], [0, 0, 1, 1], [], []>} : vector<8x8xf32>, vector<8x8xf32>, vector<8x8xf32> -> vector<8x8xf32>
      %cst_80 = arith.constant 1.875000e+00 : f32
      %143 = vector.broadcast %cst_80 : f32 to vector<8x8xf32>
      %144 = arith.mulf %143, %14 : vector<8x8xf32>
      %145 = arith.addf %142, %144 : vector<8x8xf32>
      %cst_81 = arith.constant dense<0.000000e+00> : vector<8x128xf32>
      %146 = tpu.matmul %145, %135, %cst_81 {dimension_numbers = #tpu.dot_dimension_numbers<[1], [0], [0], [1], [0, 0, 1, 1], [], []>} : vector<8x8xf32>, vector<8x128xf32>, vector<8x128xf32> -> vector<8x128xf32>
      %c12_i32 = arith.constant 12 : i32
      %cst_82 = arith.constant dense<0.000000e+00> : vector<8x8xf32>
      %147 = tpu.matmul %146, %146, %cst_82 {dimension_numbers = #tpu.dot_dimension_numbers<[1], [1], [0], [0], [0, 0, 1, 0], [], []>} : vector<8x128xf32>, vector<8x128xf32>, vector<8x8xf32> -> vector<8x8xf32>
      %cst_83 = arith.constant 3.750000e-01 : f32
      %148 = vector.broadcast %cst_83 : f32 to vector<8x8xf32>
      %149 = arith.mulf %148, %147 : vector<8x8xf32>
      %cst_84 = arith.constant 1.250000e+00 : f32
      %150 = vector.broadcast %cst_84 : f32 to vector<8x8xf32>
      %151 = arith.mulf %150, %14 : vector<8x8xf32>
      %152 = arith.subf %149, %151 : vector<8x8xf32>
      %cst_85 = arith.constant dense<0.000000e+00> : vector<8x8xf32>
      %153 = tpu.matmul %147, %152, %cst_85 {dimension_numbers = #tpu.dot_dimension_numbers<[1], [0], [0], [1], [0, 0, 1, 1], [], []>} : vector<8x8xf32>, vector<8x8xf32>, vector<8x8xf32> -> vector<8x8xf32>
      %cst_86 = arith.constant 1.875000e+00 : f32
      %154 = vector.broadcast %cst_86 : f32 to vector<8x8xf32>
      %155 = arith.mulf %154, %14 : vector<8x8xf32>
      %156 = arith.addf %153, %155 : vector<8x8xf32>
      %cst_87 = arith.constant dense<0.000000e+00> : vector<8x128xf32>
      %157 = tpu.matmul %156, %146, %cst_87 {dimension_numbers = #tpu.dot_dimension_numbers<[1], [0], [0], [1], [0, 0, 1, 1], [], []>} : vector<8x8xf32>, vector<8x128xf32>, vector<8x128xf32> -> vector<8x128xf32>
      %c13_i32 = arith.constant 13 : i32
      %cst_88 = arith.constant dense<0.000000e+00> : vector<8x8xf32>
      %158 = tpu.matmul %157, %157, %cst_88 {dimension_numbers = #tpu.dot_dimension_numbers<[1], [1], [0], [0], [0, 0, 1, 0], [], []>} : vector<8x128xf32>, vector<8x128xf32>, vector<8x8xf32> -> vector<8x8xf32>
      %cst_89 = arith.constant 3.750000e-01 : f32
      %159 = vector.broadcast %cst_89 : f32 to vector<8x8xf32>
      %160 = arith.mulf %159, %158 : vector<8x8xf32>
      %cst_90 = arith.constant 1.250000e+00 : f32
      %161 = vector.broadcast %cst_90 : f32 to vector<8x8xf32>
      %162 = arith.mulf %161, %14 : vector<8x8xf32>
      %163 = arith.subf %160, %162 : vector<8x8xf32>
      %cst_91 = arith.constant dense<0.000000e+00> : vector<8x8xf32>
      %164 = tpu.matmul %158, %163, %cst_91 {dimension_numbers = #tpu.dot_dimension_numbers<[1], [0], [0], [1], [0, 0, 1, 1], [], []>} : vector<8x8xf32>, vector<8x8xf32>, vector<8x8xf32> -> vector<8x8xf32>
      %cst_92 = arith.constant 1.875000e+00 : f32
      %165 = vector.broadcast %cst_92 : f32 to vector<8x8xf32>
      %166 = arith.mulf %165, %14 : vector<8x8xf32>
      %167 = arith.addf %164, %166 : vector<8x8xf32>
      %cst_93 = arith.constant dense<0.000000e+00> : vector<8x128xf32>
      %168 = tpu.matmul %167, %157, %cst_93 {dimension_numbers = #tpu.dot_dimension_numbers<[1], [0], [0], [1], [0, 0, 1, 1], [], []>} : vector<8x8xf32>, vector<8x128xf32>, vector<8x128xf32> -> vector<8x128xf32>
      %c14_i32 = arith.constant 14 : i32
      %cst_94 = arith.constant dense<0.000000e+00> : vector<8x8xf32>
      %169 = tpu.matmul %168, %168, %cst_94 {dimension_numbers = #tpu.dot_dimension_numbers<[1], [1], [0], [0], [0, 0, 1, 0], [], []>} : vector<8x128xf32>, vector<8x128xf32>, vector<8x8xf32> -> vector<8x8xf32>
      %cst_95 = arith.constant 3.750000e-01 : f32
      %170 = vector.broadcast %cst_95 : f32 to vector<8x8xf32>
      %171 = arith.mulf %170, %169 : vector<8x8xf32>
      %cst_96 = arith.constant 1.250000e+00 : f32
      %172 = vector.broadcast %cst_96 : f32 to vector<8x8xf32>
      %173 = arith.mulf %172, %14 : vector<8x8xf32>
      %174 = arith.subf %171, %173 : vector<8x8xf32>
      %cst_97 = arith.constant dense<0.000000e+00> : vector<8x8xf32>
      %175 = tpu.matmul %169, %174, %cst_97 {dimension_numbers = #tpu.dot_dimension_numbers<[1], [0], [0], [1], [0, 0, 1, 1], [], []>} : vector<8x8xf32>, vector<8x8xf32>, vector<8x8xf32> -> vector<8x8xf32>
      %cst_98 = arith.constant 1.875000e+00 : f32
      %176 = vector.broadcast %cst_98 : f32 to vector<8x8xf32>
      %177 = arith.mulf %176, %14 : vector<8x8xf32>
      %178 = arith.addf %175, %177 : vector<8x8xf32>
      %cst_99 = arith.constant dense<0.000000e+00> : vector<8x128xf32>
      %179 = tpu.matmul %178, %168, %cst_99 {dimension_numbers = #tpu.dot_dimension_numbers<[1], [0], [0], [1], [0, 0, 1, 1], [], []>} : vector<8x8xf32>, vector<8x128xf32>, vector<8x128xf32> -> vector<8x128xf32>
      %c15_i32 = arith.constant 15 : i32
      %cst_100 = arith.constant dense<0.000000e+00> : vector<8x8xf32>
      %180 = tpu.matmul %179, %179, %cst_100 {dimension_numbers = #tpu.dot_dimension_numbers<[1], [1], [0], [0], [0, 0, 1, 0], [], []>} : vector<8x128xf32>, vector<8x128xf32>, vector<8x8xf32> -> vector<8x8xf32>
      %cst_101 = arith.constant 3.750000e-01 : f32
      %181 = vector.broadcast %cst_101 : f32 to vector<8x8xf32>
      %182 = arith.mulf %181, %180 : vector<8x8xf32>
      %cst_102 = arith.constant 1.250000e+00 : f32
      %183 = vector.broadcast %cst_102 : f32 to vector<8x8xf32>
      %184 = arith.mulf %183, %14 : vector<8x8xf32>
      %185 = arith.subf %182, %184 : vector<8x8xf32>
      %cst_103 = arith.constant dense<0.000000e+00> : vector<8x8xf32>
      %186 = tpu.matmul %180, %185, %cst_103 {dimension_numbers = #tpu.dot_dimension_numbers<[1], [0], [0], [1], [0, 0, 1, 1], [], []>} : vector<8x8xf32>, vector<8x8xf32>, vector<8x8xf32> -> vector<8x8xf32>
      %cst_104 = arith.constant 1.875000e+00 : f32
      %187 = vector.broadcast %cst_104 : f32 to vector<8x8xf32>
      %188 = arith.mulf %187, %14 : vector<8x8xf32>
      %189 = arith.addf %186, %188 : vector<8x8xf32>
      %cst_105 = arith.constant dense<0.000000e+00> : vector<8x128xf32>
      %190 = tpu.matmul %189, %179, %cst_105 {dimension_numbers = #tpu.dot_dimension_numbers<[1], [0], [0], [1], [0, 0, 1, 1], [], []>} : vector<8x8xf32>, vector<8x128xf32>, vector<8x128xf32> -> vector<8x128xf32>
      %c16_i32 = arith.constant 16 : i32
      %cst_106 = arith.constant dense<0.000000e+00> : vector<8x8xf32>
      %191 = tpu.matmul %190, %190, %cst_106 {dimension_numbers = #tpu.dot_dimension_numbers<[1], [1], [0], [0], [0, 0, 1, 0], [], []>} : vector<8x128xf32>, vector<8x128xf32>, vector<8x8xf32> -> vector<8x8xf32>
      %cst_107 = arith.constant 3.750000e-01 : f32
      %192 = vector.broadcast %cst_107 : f32 to vector<8x8xf32>
      %193 = arith.mulf %192, %191 : vector<8x8xf32>
      %cst_108 = arith.constant 1.250000e+00 : f32
      %194 = vector.broadcast %cst_108 : f32 to vector<8x8xf32>
      %195 = arith.mulf %194, %14 : vector<8x8xf32>
      %196 = arith.subf %193, %195 : vector<8x8xf32>
      %cst_109 = arith.constant dense<0.000000e+00> : vector<8x8xf32>
      %197 = tpu.matmul %191, %196, %cst_109 {dimension_numbers = #tpu.dot_dimension_numbers<[1], [0], [0], [1], [0, 0, 1, 1], [], []>} : vector<8x8xf32>, vector<8x8xf32>, vector<8x8xf32> -> vector<8x8xf32>
      %cst_110 = arith.constant 1.875000e+00 : f32
      %198 = vector.broadcast %cst_110 : f32 to vector<8x8xf32>
      %199 = arith.mulf %198, %14 : vector<8x8xf32>
      %200 = arith.addf %197, %199 : vector<8x8xf32>
      %cst_111 = arith.constant dense<0.000000e+00> : vector<8x128xf32>
      %201 = tpu.matmul %200, %190, %cst_111 {dimension_numbers = #tpu.dot_dimension_numbers<[1], [0], [0], [1], [0, 0, 1, 1], [], []>} : vector<8x8xf32>, vector<8x128xf32>, vector<8x128xf32> -> vector<8x128xf32>
      %c17_i32 = arith.constant 17 : i32
      %cst_112 = arith.constant dense<0.000000e+00> : vector<8x8xf32>
      %202 = tpu.matmul %201, %201, %cst_112 {dimension_numbers = #tpu.dot_dimension_numbers<[1], [1], [0], [0], [0, 0, 1, 0], [], []>} : vector<8x128xf32>, vector<8x128xf32>, vector<8x8xf32> -> vector<8x8xf32>
      %cst_113 = arith.constant 3.750000e-01 : f32
      %203 = vector.broadcast %cst_113 : f32 to vector<8x8xf32>
      %204 = arith.mulf %203, %202 : vector<8x8xf32>
      %cst_114 = arith.constant 1.250000e+00 : f32
      %205 = vector.broadcast %cst_114 : f32 to vector<8x8xf32>
      %206 = arith.mulf %205, %14 : vector<8x8xf32>
      %207 = arith.subf %204, %206 : vector<8x8xf32>
      %cst_115 = arith.constant dense<0.000000e+00> : vector<8x8xf32>
      %208 = tpu.matmul %202, %207, %cst_115 {dimension_numbers = #tpu.dot_dimension_numbers<[1], [0], [0], [1], [0, 0, 1, 1], [], []>} : vector<8x8xf32>, vector<8x8xf32>, vector<8x8xf32> -> vector<8x8xf32>
      %cst_116 = arith.constant 1.875000e+00 : f32
      %209 = vector.broadcast %cst_116 : f32 to vector<8x8xf32>
      %210 = arith.mulf %209, %14 : vector<8x8xf32>
      %211 = arith.addf %208, %210 : vector<8x8xf32>
      %cst_117 = arith.constant dense<0.000000e+00> : vector<8x128xf32>
      %212 = tpu.matmul %211, %201, %cst_117 {dimension_numbers = #tpu.dot_dimension_numbers<[1], [0], [0], [1], [0, 0, 1, 1], [], []>} : vector<8x8xf32>, vector<8x128xf32>, vector<8x128xf32> -> vector<8x128xf32>
      %c18_i32 = arith.constant 18 : i32
      %cst_118 = arith.constant dense<0.000000e+00> : vector<8x8xf32>
      %213 = tpu.matmul %212, %212, %cst_118 {dimension_numbers = #tpu.dot_dimension_numbers<[1], [1], [0], [0], [0, 0, 1, 0], [], []>} : vector<8x128xf32>, vector<8x128xf32>, vector<8x8xf32> -> vector<8x8xf32>
      %cst_119 = arith.constant 3.750000e-01 : f32
      %214 = vector.broadcast %cst_119 : f32 to vector<8x8xf32>
      %215 = arith.mulf %214, %213 : vector<8x8xf32>
      %cst_120 = arith.constant 1.250000e+00 : f32
      %216 = vector.broadcast %cst_120 : f32 to vector<8x8xf32>
      %217 = arith.mulf %216, %14 : vector<8x8xf32>
      %218 = arith.subf %215, %217 : vector<8x8xf32>
      %cst_121 = arith.constant dense<0.000000e+00> : vector<8x8xf32>
      %219 = tpu.matmul %213, %218, %cst_121 {dimension_numbers = #tpu.dot_dimension_numbers<[1], [0], [0], [1], [0, 0, 1, 1], [], []>} : vector<8x8xf32>, vector<8x8xf32>, vector<8x8xf32> -> vector<8x8xf32>
      %cst_122 = arith.constant 1.875000e+00 : f32
      %220 = vector.broadcast %cst_122 : f32 to vector<8x8xf32>
      %221 = arith.mulf %220, %14 : vector<8x8xf32>
      %222 = arith.addf %219, %221 : vector<8x8xf32>
      %cst_123 = arith.constant dense<0.000000e+00> : vector<8x128xf32>
      %223 = tpu.matmul %222, %212, %cst_123 {dimension_numbers = #tpu.dot_dimension_numbers<[1], [0], [0], [1], [0, 0, 1, 1], [], []>} : vector<8x8xf32>, vector<8x128xf32>, vector<8x128xf32> -> vector<8x128xf32>
      %c19_i32 = arith.constant 19 : i32
      %cst_124 = arith.constant dense<0.000000e+00> : vector<8x8xf32>
      %224 = tpu.matmul %223, %223, %cst_124 {dimension_numbers = #tpu.dot_dimension_numbers<[1], [1], [0], [0], [0, 0, 1, 0], [], []>} : vector<8x128xf32>, vector<8x128xf32>, vector<8x8xf32> -> vector<8x8xf32>
      %cst_125 = arith.constant 3.750000e-01 : f32
      %225 = vector.broadcast %cst_125 : f32 to vector<8x8xf32>
      %226 = arith.mulf %225, %224 : vector<8x8xf32>
      %cst_126 = arith.constant 1.250000e+00 : f32
      %227 = vector.broadcast %cst_126 : f32 to vector<8x8xf32>
      %228 = arith.mulf %227, %14 : vector<8x8xf32>
      %229 = arith.subf %226, %228 : vector<8x8xf32>
      %cst_127 = arith.constant dense<0.000000e+00> : vector<8x8xf32>
      %230 = tpu.matmul %224, %229, %cst_127 {dimension_numbers = #tpu.dot_dimension_numbers<[1], [0], [0], [1], [0, 0, 1, 1], [], []>} : vector<8x8xf32>, vector<8x8xf32>, vector<8x8xf32> -> vector<8x8xf32>
      %cst_128 = arith.constant 1.875000e+00 : f32
      %231 = vector.broadcast %cst_128 : f32 to vector<8x8xf32>
      %232 = arith.mulf %231, %14 : vector<8x8xf32>
      %233 = arith.addf %230, %232 : vector<8x8xf32>
      %cst_129 = arith.constant dense<0.000000e+00> : vector<8x128xf32>
      %234 = tpu.matmul %233, %223, %cst_129 {dimension_numbers = #tpu.dot_dimension_numbers<[1], [0], [0], [1], [0, 0, 1, 1], [], []>} : vector<8x8xf32>, vector<8x128xf32>, vector<8x128xf32> -> vector<8x128xf32>
      %c20_i32 = arith.constant 20 : i32
      %cst_130 = arith.constant dense<0.000000e+00> : vector<8x8xf32>
      %235 = tpu.matmul %234, %234, %cst_130 {dimension_numbers = #tpu.dot_dimension_numbers<[1], [1], [0], [0], [0, 0, 1, 0], [], []>} : vector<8x128xf32>, vector<8x128xf32>, vector<8x8xf32> -> vector<8x8xf32>
      %cst_131 = arith.constant 3.750000e-01 : f32
      %236 = vector.broadcast %cst_131 : f32 to vector<8x8xf32>
      %237 = arith.mulf %236, %235 : vector<8x8xf32>
      %cst_132 = arith.constant 1.250000e+00 : f32
      %238 = vector.broadcast %cst_132 : f32 to vector<8x8xf32>
      %239 = arith.mulf %238, %14 : vector<8x8xf32>
      %240 = arith.subf %237, %239 : vector<8x8xf32>
      %cst_133 = arith.constant dense<0.000000e+00> : vector<8x8xf32>
      %241 = tpu.matmul %235, %240, %cst_133 {dimension_numbers = #tpu.dot_dimension_numbers<[1], [0], [0], [1], [0, 0, 1, 1], [], []>} : vector<8x8xf32>, vector<8x8xf32>, vector<8x8xf32> -> vector<8x8xf32>
      %cst_134 = arith.constant 1.875000e+00 : f32
      %242 = vector.broadcast %cst_134 : f32 to vector<8x8xf32>
      %243 = arith.mulf %242, %14 : vector<8x8xf32>
      %244 = arith.addf %241, %243 : vector<8x8xf32>
      %cst_135 = arith.constant dense<0.000000e+00> : vector<8x128xf32>
      %245 = tpu.matmul %244, %234, %cst_135 {dimension_numbers = #tpu.dot_dimension_numbers<[1], [0], [0], [1], [0, 0, 1, 1], [], []>} : vector<8x8xf32>, vector<8x128xf32>, vector<8x128xf32> -> vector<8x128xf32>
      %c21_i32 = arith.constant 21 : i32
      %cst_136 = arith.constant dense<0.000000e+00> : vector<8x8xf32>
      %246 = tpu.matmul %245, %245, %cst_136 {dimension_numbers = #tpu.dot_dimension_numbers<[1], [1], [0], [0], [0, 0, 1, 0], [], []>} : vector<8x128xf32>, vector<8x128xf32>, vector<8x8xf32> -> vector<8x8xf32>
      %cst_137 = arith.constant 3.750000e-01 : f32
      %247 = vector.broadcast %cst_137 : f32 to vector<8x8xf32>
      %248 = arith.mulf %247, %246 : vector<8x8xf32>
      %cst_138 = arith.constant 1.250000e+00 : f32
      %249 = vector.broadcast %cst_138 : f32 to vector<8x8xf32>
      %250 = arith.mulf %249, %14 : vector<8x8xf32>
      %251 = arith.subf %248, %250 : vector<8x8xf32>
      %cst_139 = arith.constant dense<0.000000e+00> : vector<8x8xf32>
      %252 = tpu.matmul %246, %251, %cst_139 {dimension_numbers = #tpu.dot_dimension_numbers<[1], [0], [0], [1], [0, 0, 1, 1], [], []>} : vector<8x8xf32>, vector<8x8xf32>, vector<8x8xf32> -> vector<8x8xf32>
      %cst_140 = arith.constant 1.875000e+00 : f32
      %253 = vector.broadcast %cst_140 : f32 to vector<8x8xf32>
      %254 = arith.mulf %253, %14 : vector<8x8xf32>
      %255 = arith.addf %252, %254 : vector<8x8xf32>
      %cst_141 = arith.constant dense<0.000000e+00> : vector<8x128xf32>
      %256 = tpu.matmul %255, %245, %cst_141 {dimension_numbers = #tpu.dot_dimension_numbers<[1], [0], [0], [1], [0, 0, 1, 1], [], []>} : vector<8x8xf32>, vector<8x128xf32>, vector<8x128xf32> -> vector<8x128xf32>
      %c22_i32 = arith.constant 22 : i32
      %cst_142 = arith.constant dense<0.000000e+00> : vector<8x8xf32>
      %257 = tpu.matmul %256, %256, %cst_142 {dimension_numbers = #tpu.dot_dimension_numbers<[1], [1], [0], [0], [0, 0, 1, 0], [], []>} : vector<8x128xf32>, vector<8x128xf32>, vector<8x8xf32> -> vector<8x8xf32>
      %cst_143 = arith.constant 3.750000e-01 : f32
      %258 = vector.broadcast %cst_143 : f32 to vector<8x8xf32>
      %259 = arith.mulf %258, %257 : vector<8x8xf32>
      %cst_144 = arith.constant 1.250000e+00 : f32
      %260 = vector.broadcast %cst_144 : f32 to vector<8x8xf32>
      %261 = arith.mulf %260, %14 : vector<8x8xf32>
      %262 = arith.subf %259, %261 : vector<8x8xf32>
      %cst_145 = arith.constant dense<0.000000e+00> : vector<8x8xf32>
      %263 = tpu.matmul %257, %262, %cst_145 {dimension_numbers = #tpu.dot_dimension_numbers<[1], [0], [0], [1], [0, 0, 1, 1], [], []>} : vector<8x8xf32>, vector<8x8xf32>, vector<8x8xf32> -> vector<8x8xf32>
      %cst_146 = arith.constant 1.875000e+00 : f32
      %264 = vector.broadcast %cst_146 : f32 to vector<8x8xf32>
      %265 = arith.mulf %264, %14 : vector<8x8xf32>
      %266 = arith.addf %263, %265 : vector<8x8xf32>
      %cst_147 = arith.constant dense<0.000000e+00> : vector<8x128xf32>
      %267 = tpu.matmul %266, %256, %cst_147 {dimension_numbers = #tpu.dot_dimension_numbers<[1], [0], [0], [1], [0, 0, 1, 1], [], []>} : vector<8x8xf32>, vector<8x128xf32>, vector<8x128xf32> -> vector<8x128xf32>
      %c23_i32 = arith.constant 23 : i32
      %cst_148 = arith.constant dense<0.000000e+00> : vector<8x8xf32>
      %268 = tpu.matmul %267, %267, %cst_148 {dimension_numbers = #tpu.dot_dimension_numbers<[1], [1], [0], [0], [0, 0, 1, 0], [], []>} : vector<8x128xf32>, vector<8x128xf32>, vector<8x8xf32> -> vector<8x8xf32>
      %cst_149 = arith.constant 3.750000e-01 : f32
      %269 = vector.broadcast %cst_149 : f32 to vector<8x8xf32>
      %270 = arith.mulf %269, %268 : vector<8x8xf32>
      %cst_150 = arith.constant 1.250000e+00 : f32
      %271 = vector.broadcast %cst_150 : f32 to vector<8x8xf32>
      %272 = arith.mulf %271, %14 : vector<8x8xf32>
      %273 = arith.subf %270, %272 : vector<8x8xf32>
      %cst_151 = arith.constant dense<0.000000e+00> : vector<8x8xf32>
      %274 = tpu.matmul %268, %273, %cst_151 {dimension_numbers = #tpu.dot_dimension_numbers<[1], [0], [0], [1], [0, 0, 1, 1], [], []>} : vector<8x8xf32>, vector<8x8xf32>, vector<8x8xf32> -> vector<8x8xf32>
      %cst_152 = arith.constant 1.875000e+00 : f32
      %275 = vector.broadcast %cst_152 : f32 to vector<8x8xf32>
      %276 = arith.mulf %275, %14 : vector<8x8xf32>
      %277 = arith.addf %274, %276 : vector<8x8xf32>
      %cst_153 = arith.constant dense<0.000000e+00> : vector<8x128xf32>
      %278 = tpu.matmul %277, %267, %cst_153 {dimension_numbers = #tpu.dot_dimension_numbers<[1], [0], [0], [1], [0, 0, 1, 1], [], []>} : vector<8x8xf32>, vector<8x128xf32>, vector<8x128xf32> -> vector<8x128xf32>
      %c24_i32 = arith.constant 24 : i32
      %cst_154 = arith.constant dense<0.000000e+00> : vector<8x8xf32>
      %279 = tpu.matmul %278, %278, %cst_154 {dimension_numbers = #tpu.dot_dimension_numbers<[1], [1], [0], [0], [0, 0, 1, 0], [], []>} : vector<8x128xf32>, vector<8x128xf32>, vector<8x8xf32> -> vector<8x8xf32>
      %cst_155 = arith.constant 3.750000e-01 : f32
      %280 = vector.broadcast %cst_155 : f32 to vector<8x8xf32>
      %281 = arith.mulf %280, %279 : vector<8x8xf32>
      %cst_156 = arith.constant 1.250000e+00 : f32
      %282 = vector.broadcast %cst_156 : f32 to vector<8x8xf32>
      %283 = arith.mulf %282, %14 : vector<8x8xf32>
      %284 = arith.subf %281, %283 : vector<8x8xf32>
      %cst_157 = arith.constant dense<0.000000e+00> : vector<8x8xf32>
      %285 = tpu.matmul %279, %284, %cst_157 {dimension_numbers = #tpu.dot_dimension_numbers<[1], [0], [0], [1], [0, 0, 1, 1], [], []>} : vector<8x8xf32>, vector<8x8xf32>, vector<8x8xf32> -> vector<8x8xf32>
      %cst_158 = arith.constant 1.875000e+00 : f32
      %286 = vector.broadcast %cst_158 : f32 to vector<8x8xf32>
      %287 = arith.mulf %286, %14 : vector<8x8xf32>
      %288 = arith.addf %285, %287 : vector<8x8xf32>
      %cst_159 = arith.constant dense<0.000000e+00> : vector<8x128xf32>
      %289 = tpu.matmul %288, %278, %cst_159 {dimension_numbers = #tpu.dot_dimension_numbers<[1], [0], [0], [1], [0, 0, 1, 1], [], []>} : vector<8x8xf32>, vector<8x128xf32>, vector<8x128xf32> -> vector<8x128xf32>
      %c0_160 = arith.constant 0 : index
      %c0_161 = arith.constant 0 : index
      %290 = vector.load %arg2[%c0_160, %c0_161] : memref<16x8xf32, #tpu.memory_space<vmem>>, vector<16x8xf32>
      %cst_162 = arith.constant dense<0.000000e+00> : vector<16x128xf32>
      %291 = tpu.matmul %290, %289, %cst_162 {dimension_numbers = #tpu.dot_dimension_numbers<[1], [0], [0], [1], [0, 0, 1, 1], [], []>} : vector<16x8xf32>, vector<8x128xf32>, vector<16x128xf32> -> vector<16x128xf32>
      %c0_163 = arith.constant 0 : index
      %c0_164 = arith.constant 0 : index
      %292 = vector.load %arg5[%c0_163, %c0_164] : memref<16x128xf32, #tpu.memory_space<vmem>>, vector<16x128xf32>
      tpu.vector_store %arg5[%c0_163, %c0_164], %291 {strides = array<i32>} : memref<16x128xf32, #tpu.memory_space<vmem>>, vector<16x128xf32>,
    } else {
    }
    %c0 = arith.constant 0 : index
    %c0_1 = arith.constant 0 : index
    %3 = vector.load %arg3[%c0, %c0_1] : memref<16x16xf32, #tpu.memory_space<vmem>>, vector<16x16xf32>
    %c0_2 = arith.constant 0 : index
    %c0_3 = arith.constant 0 : index
    %4 = vector.load %arg5[%c0_2, %c0_3] : memref<16x128xf32, #tpu.memory_space<vmem>>, vector<16x128xf32>
    %cst = arith.constant dense<0.000000e+00> : vector<16x128xf32>
    %5 = tpu.matmul %3, %4, %cst {dimension_numbers = #tpu.dot_dimension_numbers<[1], [0], [0], [1], [0, 0, 1, 1], [], []>} : vector<16x16xf32>, vector<16x128xf32>, vector<16x128xf32> -> vector<16x128xf32>
    %cst_4 = arith.constant 0.000000e+00 : f32
    %6 = vector.broadcast %cst_4 : f32 to vector<16x128xf32>
    %7 = arith.maximumf %5, %6 : vector<16x128xf32>
    %c0_5 = arith.constant 0 : index
    %c0_6 = arith.constant 0 : index
    %8 = vector.load %arg4[%c0_5, %c0_6] : memref<16x128xf32, #tpu.memory_space<vmem>>, vector<16x128xf32>
    tpu.vector_store %arg4[%c0_5, %c0_6], %7 {strides = array<i32>} : memref<16x128xf32, #tpu.memory_space<vmem>>, vector<16x128xf32>,
    return
  }
  func.func @transform_0(%arg0: i32) -> (i32, i32) {
    %c0_i32 = arith.constant 0 : i32
    %c0_i32_0 = arith.constant 0 : i32
    %c0_i32_1 = arith.constant 0 : i32
    return %c0_i32, %c0_i32_0 : i32, i32
  }
  func.func @transform_1(%arg0: i32) -> (i32, i32) {
    %c0_i32 = arith.constant 0 : i32
    %c0_i32_0 = arith.constant 0 : i32
    %c0_i32_1 = arith.constant 0 : i32
    return %c0_i32, %c0_i32_0 : i32, i32
  }
  func.func @transform_2(%arg0: i32) -> (i32, i32) {
    %c0_i32 = arith.constant 0 : i32
    %c0_i32_0 = arith.constant 0 : i32
    return %arg0, %c0_i32 : i32, i32
  }
  func.func @transform_3(%arg0: i32) -> (i32, i32) {
    %c0_i32 = arith.constant 0 : i32
    %c0_i32_0 = arith.constant 0 : i32
    return %arg0, %c0_i32 : i32, i32
  }
}

</mosaic_0001>

<llo_original>
// kernel: tpu_custom_call.1
$region0: #{tpu_custom_call.1}
  #allocation0 [shape = 'u32[]', space=smem, size = 0x4, offset = 0x4, fixed_abs, tag = 'smem constant byte address 0x4 - core index']
  #allocation1 [shape = 'u32[144,128]{1,0:T(1,128)}', space=vmem, size = 0x12000, scoped, tag = 'internal scratch']
  #allocation2 [shape = 'f32[16,128]{1,0:T(8,128)}', space=vmem, size = 0x2000, scoped, tag = 'scratch operand']
  %s0 = inlined_call_operand.vmem [shape: f32[8,128], index: 0, kind: input, shape index: {}]
  %s1 = inlined_call_operand.vmem [shape: f32[16,8], index: 1, kind: input, shape index: {}]
  %s2 = inlined_call_operand.vmem [shape: f32[16,16], index: 2, kind: input, shape index: {}]
  %s3 = inlined_call_operand.hbm [shape: f32[16,128], index: 3, kind: output, shape index: {}]
  %s4 = sld [smem:[#allocation0]]
  $region26: #{tpu_custom_call.1} parent=0
    _
  %s6 = ssub.s32 1, %s4
  %s7 = scalar_select 0, %s6, %s4
  $region1: #{tpu_custom_call.1} parent=0
    #allocation3 [shape = 'u8[8192]{0}', space=vmem, size = 0x2000, scoped, tag = 'output window, operand 0, single buffered']
    #allocation4 [shape = 's32[1]{0}', space=sflag, size = 0x4, scoped, tag = 'scoped memory for tpu_custom_call.1']
    %8 = vsyncpa [#allocation4], 0
    // Predicated region
    $region2: #{tpu_custom_call.1} parent=1 // pred_check
      _
    $region3: #{tpu_custom_call.1} parent=1 // pred_check_branch
      %10 = sbr.rel (0) target = $region5
    $region4: #{tpu_custom_call.1} parent=1 // pred_region
      _
    $region5: #{tpu_custom_call.1} parent=1 // pred_fallthru
      _
    // Predicated region
    $region6: #{tpu_custom_call.1} parent=1 // pred_check
      _
    $region7: #{tpu_custom_call.1} parent=1 // pred_check_branch
      %12 = sbr.rel (0) target = $region9
    $region8: #{tpu_custom_call.1} parent=1 // pred_region
      _
    $region9: #{tpu_custom_call.1} parent=1 // pred_fallthru
      _
    // Predicated region
    $region10: #{tpu_custom_call.1} parent=1 // pred_check
      _
    $region11: #{tpu_custom_call.1} parent=1 // pred_check_branch
      %14 = sbr.rel (0) target = $region13
    $region12: #{tpu_custom_call.1} parent=1 // pred_region
      _
    $region13: #{tpu_custom_call.1} parent=1 // pred_fallthru
      _
    %p15 = scmp.eq.s32.totalorder 0, 0
    // Predicated region
    $region14: #{tpu_custom_call.1} parent=1 // pred_check
      %p16 = pneg %p15
    $region15: #{tpu_custom_call.1} parent=1 // pred_check_branch
      %18 = sbr.rel (%p16) target = $region17
    $region16: #{tpu_custom_call.1} parent=1 // pred_region
      %v19 = vld [vmem:[%s0] sm:$0xff]
      %v20 = vlaneseq
      %v21 = vshrl.u32 %v20, 7
      %v22 = vlaneseq
      %v23 = vand.u32 %v22, 127
      %vm24 = vcmp.eq.s32.totalorder %v21, %v23
      %v25 = vsel %vm24, 1, 0
      %v26 = vcvt.s32.f32 %v25
      %27 = vmatprep.subr.mxu0 0.0
      %28 = vmatpush1.xpose.msra.mxu0 0.0
      %29 = vmatprep.subr.mxu0 0.0
      %30 = vmatpush1.xpose.msra.mxu0 0.0
      %31 = vmatprep.subr.mxu0 0.0
      %32 = vmatpush1.xpose.msra.mxu0 0.0
      %33 = vmatprep.subr.mxu0 0.0
      %34 = vmatpush1.xpose.msra.mxu0 0.0
      %35 = vmatprep.subr.mxu0 0.0
      %36 = vmatpush1.xpose.msra.mxu0 0.0
      %37 = vmatprep.subr.mxu0 0.0
      %38 = vmatpush1.xpose.msra.mxu0 0.0
      %39 = vmatprep.subr.mxu0 0.0
      %40 = vmatpush1.xpose.msra.mxu0 0.0
      %41 = vmatprep.subr.mxu0 0.0
      %42 = vmatpush1.xpose.msra.mxu0 0.0
      %43 = vmatprep.subr.mxu0 0.0
      %44 = vmatpush1.xpose.msra.mxu0 0.0
      %45 = vmatprep.subr.mxu0 0.0
      %46 = vmatpush1.xpose.msra.mxu0 0.0
      %47 = vmatprep.subr.mxu0 0.0
      %48 = vmatpush1.xpose.msra.mxu0 0.0
      %49 = vmatprep.subr.mxu0 0.0
      %50 = vmatpush1.xpose.msra.mxu0 0.0
      %51 = vmatprep.subr.mxu0 0.0
      %52 = vmatpush1.xpose.msra.mxu0 0.0
      %53 = vmatprep.subr.mxu0 0.0
      %54 = vmatpush1.xpose.msra.mxu0 0.0
      %55 = vmatprep.subr.mxu0 0.0
      %56 = vmatpush1.xpose.msra.mxu0 0.0
      %57 = vmatprep.subr.mxu0 0.0
      %58 = vmatpush1.xpose.msra.mxu0 %v19
      %59 = vmatprep.subr.mxu0 0.0
      %60 = vmatpush2.xpose.msra.mxu0 0.0
      %61 = vmatprep.subr.mxu0 0.0
      %62 = vmatpush2.xpose.msra.mxu0 0.0
      %63 = vmatprep.subr.mxu0 0.0
      %64 = vmatpush2.xpose.msra.mxu0 0.0
      %65 = vmatprep.subr.mxu0 0.0
      %66 = vmatpush2.xpose.msra.mxu0 0.0
      %67 = vmatprep.subr.mxu0 0.0
      %68 = vmatpush2.xpose.msra.mxu0 0.0
      %69 = vmatprep.subr.mxu0 0.0
      %70 = vmatpush2.xpose.msra.mxu0 0.0
      %71 = vmatprep.subr.mxu0 0.0
      %72 = vmatpush2.xpose.msra.mxu0 0.0
      %73 = vmatprep.subr.mxu0 0.0
      %74 = vmatpush2.xpose.msra.mxu0 0.0
      %75 = vmatprep.subr.mxu0 0.0
      %76 = vmatpush2.xpose.msra.mxu0 0.0
      %77 = vmatprep.subr.mxu0 0.0
      %78 = vmatpush2.xpose.msra.mxu0 0.0
      %79 = vmatprep.subr.mxu0 0.0
      %80 = vmatpush2.xpose.msra.mxu0 0.0
      %81 = vmatprep.subr.mxu0 0.0
      %82 = vmatpush2.xpose.msra.mxu0 0.0
      %83 = vmatprep.subr.mxu0 0.0
      %84 = vmatpush2.xpose.msra.mxu0 0.0
      %85 = vmatprep.subr.mxu0 0.0
      %86 = vmatpush2.xpose.msra.mxu0 0.0
      %87 = vmatprep.subr.mxu0 0.0
      %88 = vmatpush2.xpose.msra.mxu0 0.0
      %89 = vmatprep.subr.mxu0 0.0
      %90 = vmatpush2.xpose.msra.mxu0 0.0
      %91 = vmatprep.mubr.f32.mxu0 0.0
      %92 = vmatmul.mubr.f32.gmra.mxu0 %v19
      %v93 = vpop.f32.mrf.mxu0
      %v94 = vadd.f32 0.0, %v93
      %v95 = vpop.f32.mrf.mxu0
      %96 = vdwg.mxu0
      %v97 = vmul.f32 %v94, 0.375
      %v98 = vmul.f32 %v26, 1.25
      %v99 = vsub.f32 %v97, %v98
      %v100 = vmul.f32 %v26, 1.875
      %vm101 = vcmask 64512
      %v103 = vsel %vm101, %v94, 0
      %105 = vmatprep.subr.mxu0 0.0
      %106 = vmatpush1.msra.mxu0 0.0
      %107 = vmatprep.subr.mxu0 0.0
      %108 = vmatpush1.msra.mxu0 0.0
      %109 = vmatprep.subr.mxu0 0.0
      %110 = vmatpush1.msra.mxu0 0.0
      %111 = vmatprep.subr.mxu0 0.0
      %112 = vmatpush1.msra.mxu0 0.0
      %113 = vmatprep.subr.mxu0 0.0
      %114 = vmatpush1.msra.mxu0 0.0
      %115 = vmatprep.subr.mxu0 0.0
      %116 = vmatpush1.msra.mxu0 0.0
      %117 = vmatprep.subr.mxu0 0.0
      %118 = vmatpush1.msra.mxu0 0.0
      %119 = vmatprep.subr.mxu0 0.0
      %120 = vmatpush1.msra.mxu0 0.0
      %121 = vmatprep.subr.mxu0 0.0
      %122 = vmatpush1.msra.mxu0 0.0
      %123 = vmatprep.subr.mxu0 0.0
      %124 = vmatpush1.msra.mxu0 0.0
      %125 = vmatprep.subr.mxu0 0.0
      %126 = vmatpush1.msra.mxu0 0.0
      %127 = vmatprep.subr.mxu0 0.0
      %128 = vmatpush1.msra.mxu0 0.0
      %129 = vmatprep.subr.mxu0 0.0
      %130 = vmatpush1.msra.mxu0 0.0
      %131 = vmatprep.subr.mxu0 0.0
      %132 = vmatpush1.msra.mxu0 0.0
      %133 = vmatprep.subr.mxu0 0.0
      %134 = vmatpush1.msra.mxu0 0.0
      %135 = vmatprep.subr.mxu0 0.0
      %136 = vmatpush1.msra.mxu0 %v99
      %137 = vmatprep.subr.mxu0 0.0
      %138 = vmatpush2.msra.mxu0 0.0
      %139 = vmatprep.subr.mxu0 0.0
      %140 = vmatpush2.msra.mxu0 0.0
      %141 = vmatprep.subr.mxu0 0.0
      %142 = vmatpush2.msra.mxu0 0.0
      %143 = vmatprep.subr.mxu0 0.0
      %144 = vmatpush2.msra.mxu0 0.0
      %145 = vmatprep.subr.mxu0 0.0
      %146 = vmatpush2.msra.mxu0 0.0
      %147 = vmatprep.subr.mxu0 0.0
      %148 = vmatpush2.msra.mxu0 0.0
      %149 = vmatprep.subr.mxu0 0.0
      %150 = vmatpush2.msra.mxu0 0.0
      %151 = vmatprep.subr.mxu0 0.0
      %152 = vmatpush2.msra.mxu0 0.0
      %153 = vmatprep.subr.mxu0 0.0
      %154 = vmatpush2.msra.mxu0 0.0
      %155 = vmatprep.subr.mxu0 0.0
      %156 = vmatpush2.msra.mxu0 0.0
      %157 = vmatprep.subr.mxu0 0.0
      %158 = vmatpush2.msra.mxu0 0.0
      %159 = vmatprep.subr.mxu0 0.0
      %160 = vmatpush2.msra.mxu0 0.0
      %161 = vmatprep.subr.mxu0 0.0
      %162 = vmatpush2.msra.mxu0 0.0
      %163 = vmatprep.subr.mxu0 0.0
      %164 = vmatpush2.msra.mxu0 0.0
      %165 = vmatprep.subr.mxu0 0.0
      %166 = vmatpush2.msra.mxu0 0.0
      %167 = vmatprep.subr.mxu0 0.0
      %168 = vmatpush2.msra.mxu0 0.0
      %169 = vmatprep.mubr.f32.mxu0 0.0
      %170 = vmatmul.mubr.f32.gmra.mxu0 %v103
      %v171 = vpop.f32.mrf.mxu0
      %v172 = vadd.f32 %v100, %v171
      %v173 = vpop.f32.mrf.mxu0
      %174 = vdwg.mxu0
      %v176 = vsel %vm101, %v172, 0
      %178 = vmatprep.subr.mxu0 0.0
      %179 = vmatpush1.msra.mxu0 0.0
      %180 = vmatprep.subr.mxu0 0.0
      %181 = vmatpush1.msra.mxu0 0.0
      %182 = vmatprep.subr.mxu0 0.0
      %183 = vmatpush1.msra.mxu0 0.0
      %184 = vmatprep.subr.mxu0 0.0
      %185 = vmatpush1.msra.mxu0 0.0
      %186 = vmatprep.subr.mxu0 0.0
      %187 = vmatpush1.msra.mxu0 0.0
      %188 = vmatprep.subr.mxu0 0.0
      %189 = vmatpush1.msra.mxu0 0.0
      %190 = vmatprep.subr.mxu0 0.0
      %191 = vmatpush1.msra.mxu0 0.0
      %192 = vmatprep.subr.mxu0 0.0
      %193 = vmatpush1.msra.mxu0 0.0
      %194 = vmatprep.subr.mxu0 0.0
      %195 = vmatpush1.msra.mxu0 0.0
      %196 = vmatprep.subr.mxu0 0.0
      %197 = vmatpush1.msra.mxu0 0.0
      %198 = vmatprep.subr.mxu0 0.0
      %199 = vmatpush1.msra.mxu0 0.0
      %200 = vmatprep.subr.mxu0 0.0
      %201 = vmatpush1.msra.mxu0 0.0
      %202 = vmatprep.subr.mxu0 0.0
      %203 = vmatpush1.msra.mxu0 0.0
      %204 = vmatprep.subr.mxu0 0.0
      %205 = vmatpush1.msra.mxu0 0.0
      %206 = vmatprep.subr.mxu0 0.0
      %207 = vmatpush1.msra.mxu0 0.0
      %208 = vmatprep.subr.mxu0 0.0
      %209 = vmatpush1.msra.mxu0 %v19
      %210 = vmatprep.subr.mxu0 0.0
      %211 = vmatpush2.msra.mxu0 0.0
      %212 = vmatprep.subr.mxu0 0.0
      %213 = vmatpush2.msra.mxu0 0.0
      %214 = vmatprep.subr.mxu0 0.0
      %215 = vmatpush2.msra.mxu0 0.0
      %216 = vmatprep.subr.mxu0 0.0
      %217 = vmatpush2.msra.mxu0 0.0
      %218 = vmatprep.subr.mxu0 0.0
      %219 = vmatpush2.msra.mxu0 0.0
      %220 = vmatprep.subr.mxu0 0.0
      %221 = vmatpush2.msra.mxu0 0.0
      %222 = vmatprep.subr.mxu0 0.0
      %223 = vmatpush2.msra.mxu0 0.0
      %224 = vmatprep.subr.mxu0 0.0
      %225 = vmatpush2.msra.mxu0 0.0
      %226 = vmatprep.subr.mxu0 0.0
      %227 = vmatpush2.msra.mxu0 0.0
      %228 = vmatprep.subr.mxu0 0.0
      %229 = vmatpush2.msra.mxu0 0.0
      %230 = vmatprep.subr.mxu0 0.0
      %231 = vmatpush2.msra.mxu0 0.0
      %232 = vmatprep.subr.mxu0 0.0
      %233 = vmatpush2.msra.mxu0 0.0
      %234 = vmatprep.subr.mxu0 0.0
      %235 = vmatpush2.msra.mxu0 0.0
      %236 = vmatprep.subr.mxu0 0.0
      %237 = vmatpush2.msra.mxu0 0.0
      %238 = vmatprep.subr.mxu0 0.0
      %239 = vmatpush2.msra.mxu0 0.0
      %240 = vmatprep.subr.mxu0 0.0
      %241 = vmatpush2.msra.mxu0 0.0
      %242 = vmatprep.mubr.f32.mxu0 0.0
      %243 = vmatmul.mubr.f32.gmra.mxu0 %v176
      %v244 = vpop.f32.mrf.mxu0
      %v245 = vadd.f32 0.0, %v244
      %v246 = vpop.f32.mrf.mxu0
      %247 = vdwg.mxu0
      %248 = vmatprep.subr.mxu0 0.0
      %249 = vmatpush1.xpose.msra.mxu0 0.0
      %250 = vmatprep.subr.mxu0 0.0
      %251 = vmatpush1.xpose.msra.mxu0 0.0
      %252 = vmatprep.subr.mxu0 0.0
      %253 = vmatpush1.xpose.msra.mxu0 0.0
      %254 = vmatprep.subr.mxu0 0.0
      %255 = vmatpush1.xpose.msra.mxu0 0.0
      %256 = vmatprep.subr.mxu0 0.0
      %257 = vmatpush1.xpose.msra.mxu0 0.0
      %258 = vmatprep.subr.mxu0 0.0
      %259 = vmatpush1.xpose.msra.mxu0 0.0
      %260 = vmatprep.subr.mxu0 0.0
      %261 = vmatpush1.xpose.msra.mxu0 0.0
      %262 = vmatprep.subr.mxu0 0.0
      %263 = vmatpush1.xpose.msra.mxu0 0.0
      %264 = vmatprep.subr.mxu0 0.0
      %265 = vmatpush1.xpose.msra.mxu0 0.0
      %266 = vmatprep.subr.mxu0 0.0
      %267 = vmatpush1.xpose.msra.mxu0 0.0
      %268 = vmatprep.subr.mxu0 0.0
      %269 = vmatpush1.xpose.msra.mxu0 0.0
      %270 = vmatprep.subr.mxu0 0.0
      %271 = vmatpush1.xpose.msra.mxu0 0.0
      %272 = vmatprep.subr.mxu0 0.0
      %273 = vmatpush1.xpose.msra.mxu0 0.0
      %274 = vmatprep.subr.mxu0 0.0
      %275 = vmatpush1.xpose.msra.mxu0 0.0
      %276 = vmatprep.subr.mxu0 0.0
      %277 = vmatpush1.xpose.msra.mxu0 0.0
      %278 = vmatprep.subr.mxu0 0.0
      %279 = vmatpush1.xpose.msra.mxu0 %v245
      %280 = vmatprep.subr.mxu0 0.0
      %281 = vmatpush2.xpose.msra.mxu0 0.0
      %282 = vmatprep.subr.mxu0 0.0
      %283 = vmatpush2.xpose.msra.mxu0 0.0
      %284 = vmatprep.subr.mxu0 0.0
      %285 = vmatpush2.xpose.msra.mxu0 0.0
      %286 = vmatprep.subr.mxu0 0.0
      %287 = vmatpush2.xpose.msra.mxu0 0.0
      %288 = vmatprep.subr.mxu0 0.0
      %289 = vmatpush2.xpose.msra.mxu0 0.0
      %290 = vmatprep.subr.mxu0 0.0
      %291 = vmatpush2.xpose.msra.mxu0 0.0
      %292 = vmatprep.subr.mxu0 0.0
      %293 = vmatpush2.xpose.msra.mxu0 0.0
      %294 = vmatprep.subr.mxu0 0.0
      %295 = vmatpush2.xpose.msra.mxu0 0.0
      %296 = vmatprep.subr.mxu0 0.0
      %297 = vmatpush2.xpose.msra.mxu0 0.0
      %298 = vmatprep.subr.mxu0 0.0
      %299 = vmatpush2.xpose.msra.mxu0 0.0
      %300 = vmatprep.subr.mxu0 0.0
      %301 = vmatpush2.xpose.msra.mxu0 0.0
      %302 = vmatprep.subr.mxu0 0.0
      %303 = vmatpush2.xpose.msra.mxu0 0.0
      %304 = vmatprep.subr.mxu0 0.0
      %305 = vmatpush2.xpose.msra.mxu0 0.0
      %306 = vmatprep.subr.mxu0 0.0
      %307 = vmatpush2.xpose.msra.mxu0 0.0
      %308 = vmatprep.subr.mxu0 0.0
      %309 = vmatpush2.xpose.msra.mxu0 0.0
      %310 = vmatprep.subr.mxu0 0.0
      %311 = vmatpush2.xpose.msra.mxu0 0.0
      %312 = vmatprep.mubr.f32.mxu0 0.0
      %313 = vmatmul.mubr.f32.gmra.mxu0 %v245
      %v314 = vpop.f32.mrf.mxu0
      %v315 = vadd.f32 0.0, %v314
      %v316 = vpop.f32.mrf.mxu0
      %317 = vdwg.mxu0
      %v318 = vmul.f32 %v315, 0.375
      %v319 = vsub.f32 %v318, %v98
      %v321 = vsel %vm101, %v315, 0
      %323 = vmatprep.subr.mxu0 0.0
      %324 = vmatpush1.msra.mxu0 0.0
      %325 = vmatprep.subr.mxu0 0.0
      %326 = vmatpush1.msra.mxu0 0.0
      %327 = vmatprep.subr.mxu0 0.0
      %328 = vmatpush1.msra.mxu0 0.0
      %329 = vmatprep.subr.mxu0 0.0
      %330 = vmatpush1.msra.mxu0 0.0
      %331 = vmatprep.subr.mxu0 0.0
      %332 = vmatpush1.msra.mxu0 0.0
      %333 = vmatprep.subr.mxu0 0.0
      %334 = vmatpush1.msra.mxu0 0.0
      %335 = vmatprep.subr.mxu0 0.0
      %336 = vmatpush1.msra.mxu0 0.0
      %337 = vmatprep.subr.mxu0 0.0
      %338 = vmatpush1.msra.mxu0 0.0
      %339 = vmatprep.subr.mxu0 0.0
      %340 = vmatpush1.msra.mxu0 0.0
      %341 = vmatprep.subr.mxu0 0.0
      %342 = vmatpush1.msra.mxu0 0.0
      %343 = vmatprep.subr.mxu0 0.0
      %344 = vmatpush1.msra.mxu0 0.0
      %345 = vmatprep.subr.mxu0 0.0
      %346 = vmatpush1.msra.mxu0 0.0
      %347 = vmatprep.subr.mxu0 0.0
      %348 = vmatpush1.msra.mxu0 0.0
      %349 = vmatprep.subr.mxu0 0.0
      %350 = vmatpush1.msra.mxu0 0.0
      %351 = vmatprep.subr.mxu0 0.0
      %352 = vmatpush1.msra.mxu0 0.0
      %353 = vmatprep.subr.mxu0 0.0
      %354 = vmatpush1.msra.mxu0 %v319
      %355 = vmatprep.subr.mxu0 0.0
      %356 = vmatpush2.msra.mxu0 0.0
      %357 = vmatprep.subr.mxu0 0.0
      %358 = vmatpush2.msra.mxu0 0.0
      %359 = vmatprep.subr.mxu0 0.0
      %360 = vmatpush2.msra.mxu0 0.0
      %361 = vmatprep.subr.mxu0 0.0
      %362 = vmatpush2.msra.mxu0 0.0
      %363 = vmatprep.subr.mxu0 0.0
      %364 = vmatpush2.msra.mxu0 0.0
      %365 = vmatprep.subr.mxu0 0.0
      %366 = vmatpush2.msra.mxu0 0.0
      %367 = vmatprep.subr.mxu0 0.0
      %368 = vmatpush2.msra.mxu0 0.0
      %369 = vmatprep.subr.mxu0 0.0
      %370 = vmatpush2.msra.mxu0 0.0
      %371 = vmatprep.subr.mxu0 0.0
      %372 = vmatpush2.msra.mxu0 0.0
      %373 = vmatprep.subr.mxu0 0.0
      %374 = vmatpush2.msra.mxu0 0.0
      %375 = vmatprep.subr.mxu0 0.0
      %376 = vmatpush2.msra.mxu0 0.0
      %377 = vmatprep.subr.mxu0 0.0
      %378 = vmatpush2.msra.mxu0 0.0
      %379 = vmatprep.subr.mxu0 0.0
      %380 = vmatpush2.msra.mxu0 0.0
      %381 = vmatprep.subr.mxu0 0.0
      %382 = vmatpush2.msra.mxu0 0.0
      %383 = vmatprep.subr.mxu0 0.0
      %384 = vmatpush2.msra.mxu0 0.0
      %385 = vmatprep.subr.mxu0 0.0
      %386 = vmatpush2.msra.mxu0 0.0
      %387 = vmatprep.mubr.f32.mxu0 0.0
      %388 = vmatmul.mubr.f32.gmra.mxu0 %v321
      %v389 = vpop.f32.mrf.mxu0
      %v390 = vadd.f32 %v100, %v389
      %v391 = vpop.f32.mrf.mxu0
      %392 = vdwg.mxu0
      %v394 = vsel %vm101, %v390, 0
      %396 = vmatprep.subr.mxu0 0.0
      %397 = vmatpush1.msra.mxu0 0.0
      %398 = vmatprep.subr.mxu0 0.0
      %399 = vmatpush1.msra.mxu0 0.0
      %400 = vmatprep.subr.mxu0 0.0
      %401 = vmatpush1.msra.mxu0 0.0
      %402 = vmatprep.subr.mxu0 0.0
      %403 = vmatpush1.msra.mxu0 0.0
      %404 = vmatprep.subr.mxu0 0.0
      %405 = vmatpush1.msra.mxu0 0.0
      %406 = vmatprep.subr.mxu0 0.0
      %407 = vmatpush1.msra.mxu0 0.0
      %408 = vmatprep.subr.mxu0 0.0
      %409 = vmatpush1.msra.mxu0 0.0
      %410 = vmatprep.subr.mxu0 0.0
      %411 = vmatpush1.msra.mxu0 0.0
      %412 = vmatprep.subr.mxu0 0.0
      %413 = vmatpush1.msra.mxu0 0.0
      %414 = vmatprep.subr.mxu0 0.0
      %415 = vmatpush1.msra.mxu0 0.0
      %416 = vmatprep.subr.mxu0 0.0
      %417 = vmatpush1.msra.mxu0 0.0
      %418 = vmatprep.subr.mxu0 0.0
      %419 = vmatpush1.msra.mxu0 0.0
      %420 = vmatprep.subr.mxu0 0.0
      %421 = vmatpush1.msra.mxu0 0.0
      %422 = vmatprep.subr.mxu0 0.0
      %423 = vmatpush1.msra.mxu0 0.0
      %424 = vmatprep.subr.mxu0 0.0
      %425 = vmatpush1.msra.mxu0 0.0
      %426 = vmatprep.subr.mxu0 0.0
      %427 = vmatpush1.msra.mxu0 %v245
      %428 = vmatprep.subr.mxu0 0.0
      %429 = vmatpush2.msra.mxu0 0.0
      %430 = vmatprep.subr.mxu0 0.0
      %431 = vmatpush2.msra.mxu0 0.0
      %432 = vmatprep.subr.mxu0 0.0
      %433 = vmatpush2.msra.mxu0 0.0
      %434 = vmatprep.subr.mxu0 0.0
      %435 = vmatpush2.msra.mxu0 0.0
      %436 = vmatprep.subr.mxu0 0.0
      %437 = vmatpush2.msra.mxu0 0.0
      %438 = vmatprep.subr.mxu0 0.0
      %439 = vmatpush2.msra.mxu0 0.0
      %440 = vmatprep.subr.mxu0 0.0
      %441 = vmatpush2.msra.mxu0 0.0
      %442 = vmatprep.subr.mxu0 0.0
      %443 = vmatpush2.msra.mxu0 0.0
      %444 = vmatprep.subr.mxu0 0.0
      %445 = vmatpush2.msra.mxu0 0.0
      %446 = vmatprep.subr.mxu0 0.0
      %447 = vmatpush2.msra.mxu0 0.0
      %448 = vmatprep.subr.mxu0 0.0
      %449 = vmatpush2.msra.mxu0 0.0
      %450 = vmatprep.subr.mxu0 0.0
      %451 = vmatpush2.msra.mxu0 0.0
      %452 = vmatprep.subr.mxu0 0.0
      %453 = vmatpush2.msra.mxu0 0.0
      %454 = vmatprep.subr.mxu0 0.0
      %455 = vmatpush2.msra.mxu0 0.0
      %456 = vmatprep.subr.mxu0 0.0
      %457 = vmatpush2.msra.mxu0 0.0
      %458 = vmatprep.subr.mxu0 0.0
      %459 = vmatpush2.msra.mxu0 0.0
      %460 = vmatprep.mubr.f32.mxu0 0.0
      %461 = vmatmul.mubr.f32.gmra.mxu0 %v394
      %v462 = vpop.f32.mrf.mxu0
      %v463 = vadd.f32 0.0, %v462
      %v464 = vpop.f32.mrf.mxu0
      %465 = vdwg.mxu0
      %466 = vmatprep.subr.mxu0 0.0
      %467 = vmatpush1.xpose.msra.mxu0 0.0
      %468 = vmatprep.subr.mxu0 0.0
      %469 = vmatpush1.xpose.msra.mxu0 0.0
      %470 = vmatprep.subr.mxu0 0.0
      %471 = vmatpush1.xpose.msra.mxu0 0.0
      %472 = vmatprep.subr.mxu0 0.0
      %473 = vmatpush1.xpose.msra.mxu0 0.0
      %474 = vmatprep.subr.mxu0 0.0
      %475 = vmatpush1.xpose.msra.mxu0 0.0
      %476 = vmatprep.subr.mxu0 0.0
      %477 = vmatpush1.xpose.msra.mxu0 0.0
      %478 = vmatprep.subr.mxu0 0.0
      %479 = vmatpush1.xpose.msra.mxu0 0.0
      %480 = vmatprep.subr.mxu0 0.0
      %481 = vmatpush1.xpose.msra.mxu0 0.0
      %482 = vmatprep.subr.mxu0 0.0
      %483 = vmatpush1.xpose.msra.mxu0 0.0
      %484 = vmatprep.subr.mxu0 0.0
      %485 = vmatpush1.xpose.msra.mxu0 0.0
      %486 = vmatprep.subr.mxu0 0.0
      %487 = vmatpush1.xpose.msra.mxu0 0.0
      %488 = vmatprep.subr.mxu0 0.0
      %489 = vmatpush1.xpose.msra.mxu0 0.0
      %490 = vmatprep.subr.mxu0 0.0
      %491 = vmatpush1.xpose.msra.mxu0 0.0
      %492 = vmatprep.subr.mxu0 0.0
      %493 = vmatpush1.xpose.msra.mxu0 0.0
      %494 = vmatprep.subr.mxu0 0.0
      %495 = vmatpush1.xpose.msra.mxu0 0.0
      %496 = vmatprep.subr.mxu0 0.0
      %497 = vmatpush1.xpose.msra.mxu0 %v463
      %498 = vmatprep.subr.mxu0 0.0
      %499 = vmatpush2.xpose.msra.mxu0 0.0
      %500 = vmatprep.subr.mxu0 0.0
      %501 = vmatpush2.xpose.msra.mxu0 0.0
      %502 = vmatprep.subr.mxu0 0.0
      %503 = vmatpush2.xpose.msra.mxu0 0.0
      %504 = vmatprep.subr.mxu0 0.0
      %505 = vmatpush2.xpose.msra.mxu0 0.0
      %506 = vmatprep.subr.mxu0 0.0
      %507 = vmatpush2.xpose.msra.mxu0 0.0
      %508 = vmatprep.subr.mxu0 0.0
      %509 = vmatpush2.xpose.msra.mxu0 0.0
      %510 = vmatprep.subr.mxu0 0.0
      %511 = vmatpush2.xpose.msra.mxu0 0.0
      %512 = vmatprep.subr.mxu0 0.0
      %513 = vmatpush2.xpose.msra.mxu0 0.0
      %514 = vmatprep.subr.mxu0 0.0
      %515 = vmatpush2.xpose.msra.mxu0 0.0
      %516 = vmatprep.subr.mxu0 0.0
      %517 = vmatpush2.xpose.msra.mxu0 0.0
      %518 = vmatprep.subr.mxu0 0.0
      %519 = vmatpush2.xpose.msra.mxu0 0.0
      %520 = vmatprep.subr.mxu0 0.0
      %521 = vmatpush2.xpose.msra.mxu0 0.0
      %522 = vmatprep.subr.mxu0 0.0
      %523 = vmatpush2.xpose.msra.mxu0 0.0
      %524 = vmatprep.subr.mxu0 0.0
      %525 = vmatpush2.xpose.msra.mxu0 0.0
      %526 = vmatprep.subr.mxu0 0.0
      %527 = vmatpush2.xpose.msra.mxu0 0.0
      %528 = vmatprep.subr.mxu0 0.0
      %529 = vmatpush2.xpose.msra.mxu0 0.0
      %530 = vmatprep.mubr.f32.mxu0 0.0
      %531 = vmatmul.mubr.f32.gmra.mxu0 %v463
      %v532 = vpop.f32.mrf.mxu0
      %v533 = vadd.f32 0.0, %v532
      %v534 = vpop.f32.mrf.mxu0
      %535 = vdwg.mxu0
      %v536 = vmul.f32 %v533, 0.375
      %v537 = vsub.f32 %v536, %v98
      %v539 = vsel %vm101, %v533, 0
      %541 = vmatprep.subr.mxu0 0.0
      %542 = vmatpush1.msra.mxu0 0.0
      %543 = vmatprep.subr.mxu0 0.0
      %544 = vmatpush1.msra.mxu0 0.0
      %545 = vmatprep.subr.mxu0 0.0
      %546 = vmatpush1.msra.mxu0 0.0
      %547 = vmatprep.subr.mxu0 0.0
      %548 = vmatpush1.msra.mxu0 0.0
      %549 = vmatprep.subr.mxu0 0.0
      %550 = vmatpush1.msra.mxu0 0.0
      %551 = vmatprep.subr.mxu0 0.0
      %552 = vmatpush1.msra.mxu0 0.0
      %553 = vmatprep.subr.mxu0 0.0
      %554 = vmatpush1.msra.mxu0 0.0
      %555 = vmatprep.subr.mxu0 0.0
      %556 = vmatpush1.msra.mxu0 0.0
      %557 = vmatprep.subr.mxu0 0.0
      %558 = vmatpush1.msra.mxu0 0.0
      %559 = vmatprep.subr.mxu0 0.0
      %560 = vmatpush1.msra.mxu0 0.0
      %561 = vmatprep.subr.mxu0 0.0
      %562 = vmatpush1.msra.mxu0 0.0
      %563 = vmatprep.subr.mxu0 0.0
      %564 = vmatpush1.msra.mxu0 0.0
      %565 = vmatprep.subr.mxu0 0.0
      %566 = vmatpush1.msra.mxu0 0.0
      %567 = vmatprep.subr.mxu0 0.0
      %568 = vmatpush1.msra.mxu0 0.0
      %569 = vmatprep.subr.mxu0 0.0
      %570 = vmatpush1.msra.mxu0 0.0
      %571 = vmatprep.subr.mxu0 0.0
      %572 = vmatpush1.msra.mxu0 %v537
      %573 = vmatprep.subr.mxu0 0.0
      %574 = vmatpush2.msra.mxu0 0.0
      %575 = vmatprep.subr.mxu0 0.0
      %576 = vmatpush2.msra.mxu0 0.0
      %577 = vmatprep.subr.mxu0 0.0
      %578 = vmatpush2.msra.mxu0 0.0
      %579 = vmatprep.subr.mxu0 0.0
      %580 = vmatpush2.msra.mxu0 0.0
      %581 = vmatprep.subr.mxu0 0.0
      %582 = vmatpush2.msra.mxu0 0.0
      %583 = vmatprep.subr.mxu0 0.0
      %584 = vmatpush2.msra.mxu0 0.0
      %585 = vmatprep.subr.mxu0 0.0
      %586 = vmatpush2.msra.mxu0 0.0
      %587 = vmatprep.subr.mxu0 0.0
      %588 = vmatpush2.msra.mxu0 0.0
      %589 = vmatprep.subr.mxu0 0.0
      %590 = vmatpush2.msra.mxu0 0.0
      %591 = vmatprep.subr.mxu0 0.0
      %592 = vmatpush2.msra.mxu0 0.0
      %593 = vmatprep.subr.mxu0 0.0
      %594 = vmatpush2.msra.mxu0 0.0
      %595 = vmatprep.subr.mxu0 0.0
      %596 = vmatpush2.msra.mxu0 0.0
      %597 = vmatprep.subr.mxu0 0.0
      %598 = vmatpush2.msra.mxu0 0.0
      %599 = vmatprep.subr.mxu0 0.0
      %600 = vmatpush2.msra.mxu0 0.0
      %601 = vmatprep.subr.mxu0 0.0
      %602 = vmatpush2.msra.mxu0 0.0
      %603 = vmatprep.subr.mxu0 0.0
      %604 = vmatpush2.msra.mxu0 0.0
      %605 = vmatprep.mubr.f32.mxu0 0.0
      %606 = vmatmul.mubr.f32.gmra.mxu0 %v539
      %v607 = vpop.f32.mrf.mxu0
      %v608 = vadd.f32 %v100, %v607
      %v609 = vpop.f32.mrf.mxu0
      %610 = vdwg.mxu0
      %v612 = vsel %vm101, %v608, 0
      %614 = vmatprep.subr.mxu0 0.0
      %615 = vmatpush1.msra.mxu0 0.0
      %616 = vmatprep.subr.mxu0 0.0
      %617 = vmatpush1.msra.mxu0 0.0
      %618 = vmatprep.subr.mxu0 0.0
      %619 = vmatpush1.msra.mxu0 0.0
      %620 = vmatprep.subr.mxu0 0.0
      %621 = vmatpush1.msra.mxu0 0.0
      %622 = vmatprep.subr.mxu0 0.0
      %623 = vmatpush1.msra.mxu0 0.0
      %624 = vmatprep.subr.mxu0 0.0
      %625 = vmatpush1.msra.mxu0 0.0
      %626 = vmatprep.subr.mxu0 0.0
      %627 = vmatpush1.msra.mxu0 0.0
      %628 = vmatprep.subr.mxu0 0.0
      %629 = vmatpush1.msra.mxu0 0.0
      %630 = vmatprep.subr.mxu0 0.0
      %631 = vmatpush1.msra.mxu0 0.0
      %632 = vmatprep.subr.mxu0 0.0
      %633 = vmatpush1.msra.mxu0 0.0
      %634 = vmatprep.subr.mxu0 0.0
      %635 = vmatpush1.msra.mxu0 0.0
      %636 = vmatprep.subr.mxu0 0.0
      %637 = vmatpush1.msra.mxu0 0.0
      %638 = vmatprep.subr.mxu0 0.0
      %639 = vmatpush1.msra.mxu0 0.0
      %640 = vmatprep.subr.mxu0 0.0
      %641 = vmatpush1.msra.mxu0 0.0
      %642 = vmatprep.subr.mxu0 0.0
      %643 = vmatpush1.msra.mxu0 0.0
      %644 = vmatprep.subr.mxu0 0.0
      %645 = vmatpush1.msra.mxu0 %v463
      %646 = vmatprep.subr.mxu0 0.0
      %647 = vmatpush2.msra.mxu0 0.0
      %648 = vmatprep.subr.mxu0 0.0
      %649 = vmatpush2.msra.mxu0 0.0
      %650 = vmatprep.subr.mxu0 0.0
      %651 = vmatpush2.msra.mxu0 0.0
      %652 = vmatprep.subr.mxu0 0.0
      %653 = vmatpush2.msra.mxu0 0.0
      %654 = vmatprep.subr.mxu0 0.0
      %655 = vmatpush2.msra.mxu0 0.0
      %656 = vmatprep.subr.mxu0 0.0
      %657 = vmatpush2.msra.mxu0 0.0
      %658 = vmatprep.subr.mxu0 0.0
      %659 = vmatpush2.msra.mxu0 0.0
      %660 = vmatprep.subr.mxu0 0.0
      %661 = vmatpush2.msra.mxu0 0.0
      %662 = vmatprep.subr.mxu0 0.0
      %663 = vmatpush2.msra.mxu0 0.0
      %664 = vmatprep.subr.mxu0 0.0
      %665 = vmatpush2.msra.mxu0 0.0
      %666 = vmatprep.subr.mxu0 0.0
      %667 = vmatpush2.msra.mxu0 0.0
      %668 = vmatprep.subr.mxu0 0.0
      %669 = vmatpush2.msra.mxu0 0.0
      %670 = vmatprep.subr.mxu0 0.0
      %671 = vmatpush2.msra.mxu0 0.0
      %672 = vmatprep.subr.mxu0 0.0
      %673 = vmatpush2.msra.mxu0 0.0
      %674 = vmatprep.subr.mxu0 0.0
      %675 = vmatpush2.msra.mxu0 0.0
      %676 = vmatprep.subr.mxu0 0.0
      %677 = vmatpush2.msra.mxu0 0.0
      %678 = vmatprep.mubr.f32.mxu0 0.0
      %679 = vmatmul.mubr.f32.gmra.mxu0 %v612
      %v680 = vpop.f32.mrf.mxu0
      %v681 = vadd.f32 0.0, %v680
      %v682 = vpop.f32.mrf.mxu0
      %683 = vdwg.mxu0
      %684 = vmatprep.subr.mxu0 0.0
      %685 = vmatpush1.xpose.msra.mxu0 0.0
      %686 = vmatprep.subr.mxu0 0.0
      %687 = vmatpush1.xpose.msra.mxu0 0.0
      %688 = vmatprep.subr.mxu0 0.0
      %689 = vmatpush1.xpose.msra.mxu0 0.0
      %690 = vmatprep.subr.mxu0 0.0
      %691 = vmatpush1.xpose.msra.mxu0 0.0
      %692 = vmatprep.subr.mxu0 0.0
      %693 = vmatpush1.xpose.msra.mxu0 0.0
      %694 = vmatprep.subr.mxu0 0.0
      %695 = vmatpush1.xpose.msra.mxu0 0.0
      %696 = vmatprep.subr.mxu0 0.0
      %697 = vmatpush1.xpose.msra.mxu0 0.0
      %698 = vmatprep.subr.mxu0 0.0
      %699 = vmatpush1.xpose.msra.mxu0 0.0
      %700 = vmatprep.subr.mxu0 0.0
      %701 = vmatpush1.xpose.msra.mxu0 0.0
      %702 = vmatprep.subr.mxu0 0.0
      %703 = vmatpush1.xpose.msra.mxu0 0.0
      %704 = vmatprep.subr.mxu0 0.0
      %705 = vmatpush1.xpose.msra.mxu0 0.0
      %706 = vmatprep.subr.mxu0 0.0
      %707 = vmatpush1.xpose.msra.mxu0 0.0
      %708 = vmatprep.subr.mxu0 0.0
      %709 = vmatpush1.xpose.msra.mxu0 0.0
      %710 = vmatprep.subr.mxu0 0.0
      %711 = vmatpush1.xpose.msra.mxu0 0.0
      %712 = vmatprep.subr.mxu0 0.0
      %713 = vmatpush1.xpose.msra.mxu0 0.0
      %714 = vmatprep.subr.mxu0 0.0
      %715 = vmatpush1.xpose.msra.mxu0 %v681
      %716 = vmatprep.subr.mxu0 0.0
      %717 = vmatpush2.xpose.msra.mxu0 0.0
      %718 = vmatprep.subr.mxu0 0.0
      %719 = vmatpush2.xpose.msra.mxu0 0.0
      %720 = vmatprep.subr.mxu0 0.0
      %721 = vmatpush2.xpose.msra.mxu0 0.0
      %722 = vmatprep.subr.mxu0 0.0
      %723 = vmatpush2.xpose.msra.mxu0 0.0
      %724 = vmatprep.subr.mxu0 0.0
      %725 = vmatpush2.xpose.msra.mxu0 0.0
      %726 = vmatprep.subr.mxu0 0.0
      %727 = vmatpush2.xpose.msra.mxu0 0.0
      %728 = vmatprep.subr.mxu0 0.0
      %729 = vmatpush2.xpose.msra.mxu0 0.0
      %730 = vmatprep.subr.mxu0 0.0
      %731 = vmatpush2.xpose.msra.mxu0 0.0
      %732 = vmatprep.subr.mxu0 0.0
      %733 = vmatpush2.xpose.msra.mxu0 0.0
      %734 = vmatprep.subr.mxu0 0.0
      %735 = vmatpush2.xpose.msra.mxu0 0.0
      %736 = vmatprep.subr.mxu0 0.0
      %737 = vmatpush2.xpose.msra.mxu0 0.0
      %738 = vmatprep.subr.mxu0 0.0
      %739 = vmatpush2.xpose.msra.mxu0 0.0
      %740 = vmatprep.subr.mxu0 0.0
      %741 = vmatpush2.xpose.msra.mxu0 0.0
      %742 = vmatprep.subr.mxu0 0.0
      %743 = vmatpush2.xpose.msra.mxu0 0.0
      %744 = vmatprep.subr.mxu0 0.0
      %745 = vmatpush2.xpose.msra.mxu0 0.0
      %746 = vmatprep.subr.mxu0 0.0
      %747 = vmatpush2.xpose.msra.mxu0 0.0
      %748 = vmatprep.mubr.f32.mxu0 0.0
      %749 = vmatmul.mubr.f32.gmra.mxu0 %v681
      %v750 = vpop.f32.mrf.mxu0
      %v751 = vadd.f32 0.0, %v750
      %v752 = vpop.f32.mrf.mxu0
      %753 = vdwg.mxu0
      %v754 = vmul.f32 %v751, 0.375
      %v755 = vsub.f32 %v754, %v98
      %v757 = vsel %vm101, %v751, 0
      %759 = vmatprep.subr.mxu0 0.0
      %760 = vmatpush1.msra.mxu0 0.0
      %761 = vmatprep.subr.mxu0 0.0
      %762 = vmatpush1.msra.mxu0 0.0
      %763 = vmatprep.subr.mxu0 0.0
      %764 = vmatpush1.msra.mxu0 0.0
      %765 = vmatprep.subr.mxu0 0.0
      %766 = vmatpush1.msra.mxu0 0.0
      %767 = vmatprep.subr.mxu0 0.0
      %768 = vmatpush1.msra.mxu0 0.0
      %769 = vmatprep.subr.mxu0 0.0
      %770 = vmatpush1.msra.mxu0 0.0
      %771 = vmatprep.subr.mxu0 0.0
      %772 = vmatpush1.msra.mxu0 0.0
      %773 = vmatprep.subr.mxu0 0.0
      %774 = vmatpush1.msra.mxu0 0.0
      %775 = vmatprep.subr.mxu0 0.0
      %776 = vmatpush1.msra.mxu0 0.0
      %777 = vmatprep.subr.mxu0 0.0
      %778 = vmatpush1.msra.mxu0 0.0
      %779 = vmatprep.subr.mxu0 0.0
      %780 = vmatpush1.msra.mxu0 0.0
      %781 = vmatprep.subr.mxu0 0.0
      %782 = vmatpush1.msra.mxu0 0.0
      %783 = vmatprep.subr.mxu0 0.0
      %784 = vmatpush1.msra.mxu0 0.0
      %785 = vmatprep.subr.mxu0 0.0
      %786 = vmatpush1.msra.mxu0 0.0
      %787 = vmatprep.subr.mxu0 0.0
      %788 = vmatpush1.msra.mxu0 0.0
      %789 = vmatprep.subr.mxu0 0.0
      %790 = vmatpush1.msra.mxu0 %v755
      %791 = vmatprep.subr.mxu0 0.0
      %792 = vmatpush2.msra.mxu0 0.0
      %793 = vmatprep.subr.mxu0 0.0
      %794 = vmatpush2.msra.mxu0 0.0
      %795 = vmatprep.subr.mxu0 0.0
      %796 = vmatpush2.msra.mxu0 0.0
      %797 = vmatprep.subr.mxu0 0.0
      %798 = vmatpush2.msra.mxu0 0.0
      %799 = vmatprep.subr.mxu0 0.0
      %800 = vmatpush2.msra.mxu0 0.0
      %801 = vmatprep.subr.mxu0 0.0
      %802 = vmatpush2.msra.mxu0 0.0
      %803 = vmatprep.subr.mxu0 0.0
      %804 = vmatpush2.msra.mxu0 0.0
      %805 = vmatprep.subr.mxu0 0.0
      %806 = vmatpush2.msra.mxu0 0.0
      %807 = vmatprep.subr.mxu0 0.0
      %808 = vmatpush2.msra.mxu0 0.0
      %809 = vmatprep.subr.mxu0 0.0
      %810 = vmatpush2.msra.mxu0 0.0
      %811 = vmatprep.subr.mxu0 0.0
      %812 = vmatpush2.msra.mxu0 0.0
      %813 = vmatprep.subr.mxu0 0.0
      %814 = vmatpush2.msra.mxu0 0.0
      %815 = vmatprep.subr.mxu0 0.0
      %816 = vmatpush2.msra.mxu0 0.0
      %817 = vmatprep.subr.mxu0 0.0
      %818 = vmatpush2.msra.mxu0 0.0
      %819 = vmatprep.subr.mxu0 0.0
      %820 = vmatpush2.msra.mxu0 0.0
      %821 = vmatprep.subr.mxu0 0.0
      %822 = vmatpush2.msra.mxu0 0.0
      %823 = vmatprep.mubr.f32.mxu0 0.0
      %824 = vmatmul.mubr.f32.gmra.mxu0 %v757
      %v825 = vpop.f32.mrf.mxu0
      %v826 = vadd.f32 %v100, %v825
      %v827 = vpop.f32.mrf.mxu0
      %828 = vdwg.mxu0
      %v830 = vsel %vm101, %v826, 0
      %832 = vmatprep.subr.mxu0 0.0
      %833 = vmatpush1.msra.mxu0 0.0
      %834 = vmatprep.subr.mxu0 0.0
      %835 = vmatpush1.msra.mxu0 0.0
      %836 = vmatprep.subr.mxu0 0.0
      %837 = vmatpush1.msra.mxu0 0.0
      %838 = vmatprep.subr.mxu0 0.0
      %839 = vmatpush1.msra.mxu0 0.0
      %840 = vmatprep.subr.mxu0 0.0
      %841 = vmatpush1.msra.mxu0 0.0
      %842 = vmatprep.subr.mxu0 0.0
      %843 = vmatpush1.msra.mxu0 0.0
      %844 = vmatprep.subr.mxu0 0.0
      %845 = vmatpush1.msra.mxu0 0.0
      %846 = vmatprep.subr.mxu0 0.0
      %847 = vmatpush1.msra.mxu0 0.0
      %848 = vmatprep.subr.mxu0 0.0
      %849 = vmatpush1.msra.mxu0 0.0
      %850 = vmatprep.subr.mxu0 0.0
      %851 = vmatpush1.msra.mxu0 0.0
      %852 = vmatprep.subr.mxu0 0.0
      %853 = vmatpush1.msra.mxu0 0.0
      %854 = vmatprep.subr.mxu0 0.0
      %855 = vmatpush1.msra.mxu0 0.0
      %856 = vmatprep.subr.mxu0 0.0
      %857 = vmatpush1.msra.mxu0 0.0
      %858 = vmatprep.subr.mxu0 0.0
      %859 = vmatpush1.msra.mxu0 0.0
      %860 = vmatprep.subr.mxu0 0.0
      %861 = vmatpush1.msra.mxu0 0.0
      %862 = vmatprep.subr.mxu0 0.0
      %863 = vmatpush1.msra.mxu0 %v681
      %864 = vmatprep.subr.mxu0 0.0
      %865 = vmatpush2.msra.mxu0 0.0
      %866 = vmatprep.subr.mxu0 0.0
      %867 = vmatpush2.msra.mxu0 0.0
      %868 = vmatprep.subr.mxu0 0.0
      %869 = vmatpush2.msra.mxu0 0.0
      %870 = vmatprep.subr.mxu0 0.0
      %871 = vmatpush2.msra.mxu0 0.0
      %872 = vmatprep.subr.mxu0 0.0
      %873 = vmatpush2.msra.mxu0 0.0
      %874 = vmatprep.subr.mxu0 0.0
      %875 = vmatpush2.msra.mxu0 0.0
      %876 = vmatprep.subr.mxu0 0.0
      %877 = vmatpush2.msra.mxu0 0.0
      %878 = vmatprep.subr.mxu0 0.0
      %879 = vmatpush2.msra.mxu0 0.0
      %880 = vmatprep.subr.mxu0 0.0
      %881 = vmatpush2.msra.mxu0 0.0
      %882 = vmatprep.subr.mxu0 0.0
      %883 = vmatpush2.msra.mxu0 0.0
      %884 = vmatprep.subr.mxu0 0.0
      %885 = vmatpush2.msra.mxu0 0.0
      %886 = vmatprep.subr.mxu0 0.0
      %887 = vmatpush2.msra.mxu0 0.0
      %888 = vmatprep.subr.mxu0 0.0
      %889 = vmatpush2.msra.mxu0 0.0
      %890 = vmatprep.subr.mxu0 0.0
      %891 = vmatpush2.msra.mxu0 0.0
      %892 = vmatprep.subr.mxu0 0.0
      %893 = vmatpush2.msra.mxu0 0.0
      %894 = vmatprep.subr.mxu0 0.0
      %895 = vmatpush2.msra.mxu0 0.0
      %896 = vmatprep.mubr.f32.mxu0 0.0
      %897 = vmatmul.mubr.f32.gmra.mxu0 %v830
      %v898 = vpop.f32.mrf.mxu0
      %v899 = vadd.f32 0.0, %v898
      %v900 = vpop.f32.mrf.mxu0
      %901 = vdwg.mxu0
      %902 = vmatprep.subr.mxu0 0.0
      %903 = vmatpush1.xpose.msra.mxu0 0.0
      %904 = vmatprep.subr.mxu0 0.0
      %905 = vmatpush1.xpose.msra.mxu0 0.0
      %906 = vmatprep.subr.mxu0 0.0
      %907 = vmatpush1.xpose.msra.mxu0 0.0
      %908 = vmatprep.subr.mxu0 0.0
      %909 = vmatpush1.xpose.msra.mxu0 0.0
      %910 = vmatprep.subr.mxu0 0.0
      %911 = vmatpush1.xpose.msra.mxu0 0.0
      %912 = vmatprep.subr.mxu0 0.0
      %913 = vmatpush1.xpose.msra.mxu0 0.0
      %914 = vmatprep.subr.mxu0 0.0
      %915 = vmatpush1.xpose.msra.mxu0 0.0
      %916 = vmatprep.subr.mxu0 0.0
      %917 = vmatpush1.xpose.msra.mxu0 0.0
      %918 = vmatprep.subr.mxu0 0.0
      %919 = vmatpush1.xpose.msra.mxu0 0.0
      %920 = vmatprep.subr.mxu0 0.0
      %921 = vmatpush1.xpose.msra.mxu0 0.0
      %922 = vmatprep.subr.mxu0 0.0
      %923 = vmatpush1.xpose.msra.mxu0 0.0
      %924 = vmatprep.subr.mxu0 0.0
      %925 = vmatpush1.xpose.msra.mxu0 0.0
      %926 = vmatprep.subr.mxu0 0.0
      %927 = vmatpush1.xpose.msra.mxu0 0.0
      %928 = vmatprep.subr.mxu0 0.0
      %929 = vmatpush1.xpose.msra.mxu0 0.0
      %930 = vmatprep.subr.mxu0 0.0
      %931 = vmatpush1.xpose.msra.mxu0 0.0
      %932 = vmatprep.subr.mxu0 0.0
      %933 = vmatpush1.xpose.msra.mxu0 %v899
      %934 = vmatprep.subr.mxu0 0.0
      %935 = vmatpush2.xpose.msra.mxu0 0.0
      %936 = vmatprep.subr.mxu0 0.0
      %937 = vmatpush2.xpose.msra.mxu0 0.0
      %938 = vmatprep.subr.mxu0 0.0
      %939 = vmatpush2.xpose.msra.mxu0 0.0
      %940 = vmatprep.subr.mxu0 0.0
      %941 = vmatpush2.xpose.msra.mxu0 0.0
      %942 = vmatprep.subr.mxu0 0.0
      %943 = vmatpush2.xpose.msra.mxu0 0.0
      %944 = vmatprep.subr.mxu0 0.0
      %945 = vmatpush2.xpose.msra.mxu0 0.0
      %946 = vmatprep.subr.mxu0 0.0
      %947 = vmatpush2.xpose.msra.mxu0 0.0
      %948 = vmatprep.subr.mxu0 0.0
      %949 = vmatpush2.xpose.msra.mxu0 0.0
      %950 = vmatprep.subr.mxu0 0.0
      %951 = vmatpush2.xpose.msra.mxu0 0.0
      %952 = vmatprep.subr.mxu0 0.0
      %953 = vmatpush2.xpose.msra.mxu0 0.0
      %954 = vmatprep.subr.mxu0 0.0
      %955 = vmatpush2.xpose.msra.mxu0 0.0
      %956 = vmatprep.subr.mxu0 0.0
      %957 = vmatpush2.xpose.msra.mxu0 0.0
      %958 = vmatprep.subr.mxu0 0.0
      %959 = vmatpush2.xpose.msra.mxu0 0.0
      %960 = vmatprep.subr.mxu0 0.0
      %961 = vmatpush2.xpose.msra.mxu0 0.0
      %962 = vmatprep.subr.mxu0 0.0
      %963 = vmatpush2.xpose.msra.mxu0 0.0
      %964 = vmatprep.subr.mxu0 0.0
      %965 = vmatpush2.xpose.msra.mxu0 0.0
      %966 = vmatprep.mubr.f32.mxu0 0.0
      %967 = vmatmul.mubr.f32.gmra.mxu0 %v899
      %v968 = vpop.f32.mrf.mxu0
      %v969 = vadd.f32 0.0, %v968
      %v970 = vpop.f32.mrf.mxu0
      %971 = vdwg.mxu0
      %v972 = vmul.f32 %v969, 0.375
      %v973 = vsub.f32 %v972, %v98
      %v975 = vsel %vm101, %v969, 0
      %977 = vmatprep.subr.mxu0 0.0
      %978 = vmatpush1.msra.mxu0 0.0
      %979 = vmatprep.subr.mxu0 0.0
      %980 = vmatpush1.msra.mxu0 0.0
      %981 = vmatprep.subr.mxu0 0.0
      %982 = vmatpush1.msra.mxu0 0.0
      %983 = vmatprep.subr.mxu0 0.0
      %984 = vmatpush1.msra.mxu0 0.0
      %985 = vmatprep.subr.mxu0 0.0
      %986 = vmatpush1.msra.mxu0 0.0
      %987 = vmatprep.subr.mxu0 0.0
      %988 = vmatpush1.msra.mxu0 0.0
      %989 = vmatprep.subr.mxu0 0.0
      %990 = vmatpush1.msra.mxu0 0.0
      %991 = vmatprep.subr.mxu0 0.0
      %992 = vmatpush1.msra.mxu0 0.0
      %993 = vmatprep.subr.mxu0 0.0
      %994 = vmatpush1.msra.mxu0 0.0
      %995 = vmatprep.subr.mxu0 0.0
      %996 = vmatpush1.msra.mxu0 0.0
      %997 = vmatprep.subr.mxu0 0.0
      %998 = vmatpush1.msra.mxu0 0.0
      %999 = vmatprep.subr.mxu0 0.0
      %1000 = vmatpush1.msra.mxu0 0.0
      %1001 = vmatprep.subr.mxu0 0.0
      %1002 = vmatpush1.msra.mxu0 0.0
      %1003 = vmatprep.subr.mxu0 0.0
      %1004 = vmatpush1.msra.mxu0 0.0
      %1005 = vmatprep.subr.mxu0 0.0
      %1006 = vmatpush1.msra.mxu0 0.0
      %1007 = vmatprep.subr.mxu0 0.0
      %1008 = vmatpush1.msra.mxu0 %v973
      %1009 = vmatprep.subr.mxu0 0.0
      %1010 = vmatpush2.msra.mxu0 0.0
      %1011 = vmatprep.subr.mxu0 0.0
      %1012 = vmatpush2.msra.mxu0 0.0
      %1013 = vmatprep.subr.mxu0 0.0
      %1014 = vmatpush2.msra.mxu0 0.0
      %1015 = vmatprep.subr.mxu0 0.0
      %1016 = vmatpush2.msra.mxu0 0.0
      %1017 = vmatprep.subr.mxu0 0.0
      %1018 = vmatpush2.msra.mxu0 0.0
      %1019 = vmatprep.subr.mxu0 0.0
      %1020 = vmatpush2.msra.mxu0 0.0
      %1021 = vmatprep.subr.mxu0 0.0
      %1022 = vmatpush2.msra.mxu0 0.0
      %1023 = vmatprep.subr.mxu0 0.0
      %1024 = vmatpush2.msra.mxu0 0.0
      %1025 = vmatprep.subr.mxu0 0.0
      %1026 = vmatpush2.msra.mxu0 0.0
      %1027 = vmatprep.subr.mxu0 0.0
      %1028 = vmatpush2.msra.mxu0 0.0
      %1029 = vmatprep.subr.mxu0 0.0
      %1030 = vmatpush2.msra.mxu0 0.0
      %1031 = vmatprep.subr.mxu0 0.0
      %1032 = vmatpush2.msra.mxu0 0.0
      %1033 = vmatprep.subr.mxu0 0.0
      %1034 = vmatpush2.msra.mxu0 0.0
      %1035 = vmatprep.subr.mxu0 0.0
      %1036 = vmatpush2.msra.mxu0 0.0
      %1037 = vmatprep.subr.mxu0 0.0
      %1038 = vmatpush2.msra.mxu0 0.0
      %1039 = vmatprep.subr.mxu0 0.0
      %1040 = vmatpush2.msra.mxu0 0.0
      %1041 = vmatprep.mubr.f32.mxu0 0.0
      %1042 = vmatmul.mubr.f32.gmra.mxu0 %v975
      %v1043 = vpop.f32.mrf.mxu0
      %v1044 = vadd.f32 %v100, %v1043
      %v1045 = vpop.f32.mrf.mxu0
      %1046 = vdwg.mxu0
      %v1048 = vsel %vm101, %v1044, 0
      %1050 = vmatprep.subr.mxu0 0.0
      %1051 = vmatpush1.msra.mxu0 0.0
      %1052 = vmatprep.subr.mxu0 0.0
      %1053 = vmatpush1.msra.mxu0 0.0
      %1054 = vmatprep.subr.mxu0 0.0
      %1055 = vmatpush1.msra.mxu0 0.0
      %1056 = vmatprep.subr.mxu0 0.0
      %1057 = vmatpush1.msra.mxu0 0.0
      %1058 = vmatprep.subr.mxu0 0.0
      %1059 = vmatpush1.msra.mxu0 0.0
      %1060 = vmatprep.subr.mxu0 0.0
      %1061 = vmatpush1.msra.mxu0 0.0
      %1062 = vmatprep.subr.mxu0 0.0
      %1063 = vmatpush1.msra.mxu0 0.0
      %1064 = vmatprep.subr.mxu0 0.0
      %1065 = vmatpush1.msra.mxu0 0.0
      %1066 = vmatprep.subr.mxu0 0.0
      %1067 = vmatpush1.msra.mxu0 0.0
      %1068 = vmatprep.subr.mxu0 0.0
      %1069 = vmatpush1.msra.mxu0 0.0
      %1070 = vmatprep.subr.mxu0 0.0
      %1071 = vmatpush1.msra.mxu0 0.0
      %1072 = vmatprep.subr.mxu0 0.0
      %1073 = vmatpush1.msra.mxu0 0.0
      %1074 = vmatprep.subr.mxu0 0.0
      %1075 = vmatpush1.msra.mxu0 0.0
      %1076 = vmatprep.subr.mxu0 0.0
      %1077 = vmatpush1.msra.mxu0 0.0
      %1078 = vmatprep.subr.mxu0 0.0
      %1079 = vmatpush1.msra.mxu0 0.0
      %1080 = vmatprep.subr.mxu0 0.0
      %1081 = vmatpush1.msra.mxu0 %v899
      %1082 = vmatprep.subr.mxu0 0.0
      %1083 = vmatpush2.msra.mxu0 0.0
      %1084 = vmatprep.subr.mxu0 0.0
      %1085 = vmatpush2.msra.mxu0 0.0
      %1086 = vmatprep.subr.mxu0 0.0
      %1087 = vmatpush2.msra.mxu0 0.0
      %1088 = vmatprep.subr.mxu0 0.0
      %1089 = vmatpush2.msra.mxu0 0.0
      %1090 = vmatprep.subr.mxu0 0.0
      %1091 = vmatpush2.msra.mxu0 0.0
      %1092 = vmatprep.subr.mxu0 0.0
      %1093 = vmatpush2.msra.mxu0 0.0
      %1094 = vmatprep.subr.mxu0 0.0
      %1095 = vmatpush2.msra.mxu0 0.0
      %1096 = vmatprep.subr.mxu0 0.0
      %1097 = vmatpush2.msra.mxu0 0.0
      %1098 = vmatprep.subr.mxu0 0.0
      %1099 = vmatpush2.msra.mxu0 0.0
      %1100 = vmatprep.subr.mxu0 0.0
      %1101 = vmatpush2.msra.mxu0 0.0
      %1102 = vmatprep.subr.mxu0 0.0
      %1103 = vmatpush2.msra.mxu0 0.0
      %1104 = vmatprep.subr.mxu0 0.0
      %1105 = vmatpush2.msra.mxu0 0.0
      %1106 = vmatprep.subr.mxu0 0.0
      %1107 = vmatpush2.msra.mxu0 0.0
      %1108 = vmatprep.subr.mxu0 0.0
      %1109 = vmatpush2.msra.mxu0 0.0
      %1110 = vmatprep.subr.mxu0 0.0
      %1111 = vmatpush2.msra.mxu0 0.0
      %1112 = vmatprep.subr.mxu0 0.0
      %1113 = vmatpush2.msra.mxu0 0.0
      %1114 = vmatprep.mubr.f32.mxu0 0.0
      %1115 = vmatmul.mubr.f32.gmra.mxu0 %v1048
      %v1116 = vpop.f32.mrf.mxu0
      %v1117 = vadd.f32 0.0, %v1116
      %v1118 = vpop.f32.mrf.mxu0
      %1119 = vdwg.mxu0
      %1120 = vmatprep.subr.mxu0 0.0
      %1121 = vmatpush1.xpose.msra.mxu0 0.0
      %1122 = vmatprep.subr.mxu0 0.0
      %1123 = vmatpush1.xpose.msra.mxu0 0.0
      %1124 = vmatprep.subr.mxu0 0.0
      %1125 = vmatpush1.xpose.msra.mxu0 0.0
      %1126 = vmatprep.subr.mxu0 0.0
      %1127 = vmatpush1.xpose.msra.mxu0 0.0
      %1128 = vmatprep.subr.mxu0 0.0
      %1129 = vmatpush1.xpose.msra.mxu0 0.0
      %1130 = vmatprep.subr.mxu0 0.0
      %1131 = vmatpush1.xpose.msra.mxu0 0.0
      %1132 = vmatprep.subr.mxu0 0.0
      %1133 = vmatpush1.xpose.msra.mxu0 0.0
      %1134 = vmatprep.subr.mxu0 0.0
      %1135 = vmatpush1.xpose.msra.mxu0 0.0
      %1136 = vmatprep.subr.mxu0 0.0
      %1137 = vmatpush1.xpose.msra.mxu0 0.0
      %1138 = vmatprep.subr.mxu0 0.0
      %1139 = vmatpush1.xpose.msra.mxu0 0.0
      %1140 = vmatprep.subr.mxu0 0.0
      %1141 = vmatpush1.xpose.msra.mxu0 0.0
      %1142 = vmatprep.subr.mxu0 0.0
      %1143 = vmatpush1.xpose.msra.mxu0 0.0
      %1144 = vmatprep.subr.mxu0 0.0
      %1145 = vmatpush1.xpose.msra.mxu0 0.0
      %1146 = vmatprep.subr.mxu0 0.0
      %1147 = vmatpush1.xpose.msra.mxu0 0.0
      %1148 = vmatprep.subr.mxu0 0.0
      %1149 = vmatpush1.xpose.msra.mxu0 0.0
      %1150 = vmatprep.subr.mxu0 0.0
      %1151 = vmatpush1.xpose.msra.mxu0 %v1117
      %1152 = vmatprep.subr.mxu0 0.0
      %1153 = vmatpush2.xpose.msra.mxu0 0.0
      %1154 = vmatprep.subr.mxu0 0.0
      %1155 = vmatpush2.xpose.msra.mxu0 0.0
      %1156 = vmatprep.subr.mxu0 0.0
      %1157 = vmatpush2.xpose.msra.mxu0 0.0
      %1158 = vmatprep.subr.mxu0 0.0
      %1159 = vmatpush2.xpose.msra.mxu0 0.0
      %1160 = vmatprep.subr.mxu0 0.0
      %1161 = vmatpush2.xpose.msra.mxu0 0.0
      %1162 = vmatprep.subr.mxu0 0.0
      %1163 = vmatpush2.xpose.msra.mxu0 0.0
      %1164 = vmatprep.subr.mxu0 0.0
      %1165 = vmatpush2.xpose.msra.mxu0 0.0
      %1166 = vmatprep.subr.mxu0 0.0
      %1167 = vmatpush2.xpose.msra.mxu0 0.0
      %1168 = vmatprep.subr.mxu0 0.0
      %1169 = vmatpush2.xpose.msra.mxu0 0.0
      %1170 = vmatprep.subr.mxu0 0.0
      %1171 = vmatpush2.xpose.msra.mxu0 0.0
      %1172 = vmatprep.subr.mxu0 0.0
      %1173 = vmatpush2.xpose.msra.mxu0 0.0
      %1174 = vmatprep.subr.mxu0 0.0
      %1175 = vmatpush2.xpose.msra.mxu0 0.0
      %1176 = vmatprep.subr.mxu0 0.0
      %1177 = vmatpush2.xpose.msra.mxu0 0.0
      %1178 = vmatprep.subr.mxu0 0.0
      %1179 = vmatpush2.xpose.msra.mxu0 0.0
      %1180 = vmatprep.subr.mxu0 0.0
      %1181 = vmatpush2.xpose.msra.mxu0 0.0
      %1182 = vmatprep.subr.mxu0 0.0
      %1183 = vmatpush2.xpose.msra.mxu0 0.0
      %1184 = vmatprep.mubr.f32.mxu0 0.0
      %1185 = vmatmul.mubr.f32.gmra.mxu0 %v1117
      %v1186 = vpop.f32.mrf.mxu0
      %v1187 = vadd.f32 0.0, %v1186
      %v1188 = vpop.f32.mrf.mxu0
      %1189 = vdwg.mxu0
      %v1190 = vmul.f32 %v1187, 0.375
      %v1191 = vsub.f32 %v1190, %v98
      %v1193 = vsel %vm101, %v1187, 0
      %1195 = vmatprep.subr.mxu0 0.0
      %1196 = vmatpush1.msra.mxu0 0.0
      %1197 = vmatprep.subr.mxu0 0.0
      %1198 = vmatpush1.msra.mxu0 0.0
      %1199 = vmatprep.subr.mxu0 0.0
      %1200 = vmatpush1.msra.mxu0 0.0
      %1201 = vmatprep.subr.mxu0 0.0
      %1202 = vmatpush1.msra.mxu0 0.0
      %1203 = vmatprep.subr.mxu0 0.0
      %1204 = vmatpush1.msra.mxu0 0.0
      %1205 = vmatprep.subr.mxu0 0.0
      %1206 = vmatpush1.msra.mxu0 0.0
      %1207 = vmatprep.subr.mxu0 0.0
      %1208 = vmatpush1.msra.mxu0 0.0
      %1209 = vmatprep.subr.mxu0 0.0
      %1210 = vmatpush1.msra.mxu0 0.0
      %1211 = vmatprep.subr.mxu0 0.0
      %1212 = vmatpush1.msra.mxu0 0.0
      %1213 = vmatprep.subr.mxu0 0.0
      %1214 = vmatpush1.msra.mxu0 0.0
      %1215 = vmatprep.subr.mxu0 0.0
      %1216 = vmatpush1.msra.mxu0 0.0
      %1217 = vmatprep.subr.mxu0 0.0
      %1218 = vmatpush1.msra.mxu0 0.0
      %1219 = vmatprep.subr.mxu0 0.0
      %1220 = vmatpush1.msra.mxu0 0.0
      %1221 = vmatprep.subr.mxu0 0.0
      %1222 = vmatpush1.msra.mxu0 0.0
      %1223 = vmatprep.subr.mxu0 0.0
      %1224 = vmatpush1.msra.mxu0 0.0
      %1225 = vmatprep.subr.mxu0 0.0
      %1226 = vmatpush1.msra.mxu0 %v1191
      %1227 = vmatprep.subr.mxu0 0.0
      %1228 = vmatpush2.msra.mxu0 0.0
      %1229 = vmatprep.subr.mxu0 0.0
      %1230 = vmatpush2.msra.mxu0 0.0
      %1231 = vmatprep.subr.mxu0 0.0
      %1232 = vmatpush2.msra.mxu0 0.0
      %1233 = vmatprep.subr.mxu0 0.0
      %1234 = vmatpush2.msra.mxu0 0.0
      %1235 = vmatprep.subr.mxu0 0.0
      %1236 = vmatpush2.msra.mxu0 0.0
      %1237 = vmatprep.subr.mxu0 0.0
      %1238 = vmatpush2.msra.mxu0 0.0
      %1239 = vmatprep.subr.mxu0 0.0
      %1240 = vmatpush2.msra.mxu0 0.0
      %1241 = vmatprep.subr.mxu0 0.0
      %1242 = vmatpush2.msra.mxu0 0.0
      %1243 = vmatprep.subr.mxu0 0.0
      %1244 = vmatpush2.msra.mxu0 0.0
      %1245 = vmatprep.subr.mxu0 0.0
      %1246 = vmatpush2.msra.mxu0 0.0
      %1247 = vmatprep.subr.mxu0 0.0
      %1248 = vmatpush2.msra.mxu0 0.0
      %1249 = vmatprep.subr.mxu0 0.0
      %1250 = vmatpush2.msra.mxu0 0.0
      %1251 = vmatprep.subr.mxu0 0.0
      %1252 = vmatpush2.msra.mxu0 0.0
      %1253 = vmatprep.subr.mxu0 0.0
      %1254 = vmatpush2.msra.mxu0 0.0
      %1255 = vmatprep.subr.mxu0 0.0
      %1256 = vmatpush2.msra.mxu0 0.0
      %1257 = vmatprep.subr.mxu0 0.0
      %1258 = vmatpush2.msra.mxu0 0.0
      %1259 = vmatprep.mubr.f32.mxu0 0.0
      %1260 = vmatmul.mubr.f32.gmra.mxu0 %v1193
      %v1261 = vpop.f32.mrf.mxu0
      %v1262 = vadd.f32 %v100, %v1261
      %v1263 = vpop.f32.mrf.mxu0
      %1264 = vdwg.mxu0
      %v1266 = vsel %vm101, %v1262, 0
      %1268 = vmatprep.subr.mxu0 0.0
      %1269 = vmatpush1.msra.mxu0 0.0
      %1270 = vmatprep.subr.mxu0 0.0
      %1271 = vmatpush1.msra.mxu0 0.0
      %1272 = vmatprep.subr.mxu0 0.0
      %1273 = vmatpush1.msra.mxu0 0.0
      %1274 = vmatprep.subr.mxu0 0.0
      %1275 = vmatpush1.msra.mxu0 0.0
      %1276 = vmatprep.subr.mxu0 0.0
      %1277 = vmatpush1.msra.mxu0 0.0
      %1278 = vmatprep.subr.mxu0 0.0
      %1279 = vmatpush1.msra.mxu0 0.0
      %1280 = vmatprep.subr.mxu0 0.0
      %1281 = vmatpush1.msra.mxu0 0.0
      %1282 = vmatprep.subr.mxu0 0.0
      %1283 = vmatpush1.msra.mxu0 0.0
      %1284 = vmatprep.subr.mxu0 0.0
      %1285 = vmatpush1.msra.mxu0 0.0
      %1286 = vmatprep.subr.mxu0 0.0
      %1287 = vmatpush1.msra.mxu0 0.0
      %1288 = vmatprep.subr.mxu0 0.0
      %1289 = vmatpush1.msra.mxu0 0.0
      %1290 = vmatprep.subr.mxu0 0.0
      %1291 = vmatpush1.msra.mxu0 0.0
      %1292 = vmatprep.subr.mxu0 0.0
      %1293 = vmatpush1.msra.mxu0 0.0
      %1294 = vmatprep.subr.mxu0 0.0
      %1295 = vmatpush1.msra.mxu0 0.0
      %1296 = vmatprep.subr.mxu0 0.0
      %1297 = vmatpush1.msra.mxu0 0.0
      %1298 = vmatprep.subr.mxu0 0.0
      %1299 = vmatpush1.msra.mxu0 %v1117
      %1300 = vmatprep.subr.mxu0 0.0
      %1301 = vmatpush2.msra.mxu0 0.0
      %1302 = vmatprep.subr.mxu0 0.0
      %1303 = vmatpush2.msra.mxu0 0.0
      %1304 = vmatprep.subr.mxu0 0.0
      %1305 = vmatpush2.msra.mxu0 0.0
      %1306 = vmatprep.subr.mxu0 0.0
      %1307 = vmatpush2.msra.mxu0 0.0
      %1308 = vmatprep.subr.mxu0 0.0
      %1309 = vmatpush2.msra.mxu0 0.0
      %1310 = vmatprep.subr.mxu0 0.0
      %1311 = vmatpush2.msra.mxu0 0.0
      %1312 = vmatprep.subr.mxu0 0.0
      %1313 = vmatpush2.msra.mxu0 0.0
      %1314 = vmatprep.subr.mxu0 0.0
      %1315 = vmatpush2.msra.mxu0 0.0
      %1316 = vmatprep.subr.mxu0 0.0
      %1317 = vmatpush2.msra.mxu0 0.0
      %1318 = vmatprep.subr.mxu0 0.0
      %1319 = vmatpush2.msra.mxu0 0.0
      %1320 = vmatprep.subr.mxu0 0.0
      %1321 = vmatpush2.msra.mxu0 0.0
      %1322 = vmatprep.subr.mxu0 0.0
      %1323 = vmatpush2.msra.mxu0 0.0
      %1324 = vmatprep.subr.mxu0 0.0
      %1325 = vmatpush2.msra.mxu0 0.0
      %1326 = vmatprep.subr.mxu0 0.0
      %1327 = vmatpush2.msra.mxu0 0.0
      %1328 = vmatprep.subr.mxu0 0.0
      %1329 = vmatpush2.msra.mxu0 0.0
      %1330 = vmatprep.subr.mxu0 0.0
      %1331 = vmatpush2.msra.mxu0 0.0
      %1332 = vmatprep.mubr.f32.mxu0 0.0
      %1333 = vmatmul.mubr.f32.gmra.mxu0 %v1266
      %v1334 = vpop.f32.mrf.mxu0
      %v1335 = vadd.f32 0.0, %v1334
      %v1336 = vpop.f32.mrf.mxu0
      %1337 = vdwg.mxu0
      %1338 = vmatprep.subr.mxu0 0.0
      %1339 = vmatpush1.xpose.msra.mxu0 0.0
      %1340 = vmatprep.subr.mxu0 0.0
      %1341 = vmatpush1.xpose.msra.mxu0 0.0
      %1342 = vmatprep.subr.mxu0 0.0
      %1343 = vmatpush1.xpose.msra.mxu0 0.0
      %1344 = vmatprep.subr.mxu0 0.0
      %1345 = vmatpush1.xpose.msra.mxu0 0.0
      %1346 = vmatprep.subr.mxu0 0.0
      %1347 = vmatpush1.xpose.msra.mxu0 0.0
      %1348 = vmatprep.subr.mxu0 0.0
      %1349 = vmatpush1.xpose.msra.mxu0 0.0
      %1350 = vmatprep.subr.mxu0 0.0
      %1351 = vmatpush1.xpose.msra.mxu0 0.0
      %1352 = vmatprep.subr.mxu0 0.0
      %1353 = vmatpush1.xpose.msra.mxu0 0.0
      %1354 = vmatprep.subr.mxu0 0.0
      %1355 = vmatpush1.xpose.msra.mxu0 0.0
      %1356 = vmatprep.subr.mxu0 0.0
      %1357 = vmatpush1.xpose.msra.mxu0 0.0
      %1358 = vmatprep.subr.mxu0 0.0
      %1359 = vmatpush1.xpose.msra.mxu0 0.0
      %1360 = vmatprep.subr.mxu0 0.0
      %1361 = vmatpush1.xpose.msra.mxu0 0.0
      %1362 = vmatprep.subr.mxu0 0.0
      %1363 = vmatpush1.xpose.msra.mxu0 0.0
      %1364 = vmatprep.subr.mxu0 0.0
      %1365 = vmatpush1.xpose.msra.mxu0 0.0
      %1366 = vmatprep.subr.mxu0 0.0
      %1367 = vmatpush1.xpose.msra.mxu0 0.0
      %1368 = vmatprep.subr.mxu0 0.0
      %1369 = vmatpush1.xpose.msra.mxu0 %v1335
      %1370 = vmatprep.subr.mxu0 0.0
      %1371 = vmatpush2.xpose.msra.mxu0 0.0
      %1372 = vmatprep.subr.mxu0 0.0
      %1373 = vmatpush2.xpose.msra.mxu0 0.0
      %1374 = vmatprep.subr.mxu0 0.0
      %1375 = vmatpush2.xpose.msra.mxu0 0.0
      %1376 = vmatprep.subr.mxu0 0.0
      %1377 = vmatpush2.xpose.msra.mxu0 0.0
      %1378 = vmatprep.subr.mxu0 0.0
      %1379 = vmatpush2.xpose.msra.mxu0 0.0
      %1380 = vmatprep.subr.mxu0 0.0
      %1381 = vmatpush2.xpose.msra.mxu0 0.0
      %1382 = vmatprep.subr.mxu0 0.0
      %1383 = vmatpush2.xpose.msra.mxu0 0.0
      %1384 = vmatprep.subr.mxu0 0.0
      %1385 = vmatpush2.xpose.msra.mxu0 0.0
      %1386 = vmatprep.subr.mxu0 0.0
      %1387 = vmatpush2.xpose.msra.mxu0 0.0
      %1388 = vmatprep.subr.mxu0 0.0
      %1389 = vmatpush2.xpose.msra.mxu0 0.0
      %1390 = vmatprep.subr.mxu0 0.0
      %1391 = vmatpush2.xpose.msra.mxu0 0.0
      %1392 = vmatprep.subr.mxu0 0.0
      %1393 = vmatpush2.xpose.msra.mxu0 0.0
      %1394 = vmatprep.subr.mxu0 0.0
      %1395 = vmatpush2.xpose.msra.mxu0 0.0
      %1396 = vmatprep.subr.mxu0 0.0
      %1397 = vmatpush2.xpose.msra.mxu0 0.0
      %1398 = vmatprep.subr.mxu0 0.0
      %1399 = vmatpush2.xpose.msra.mxu0 0.0
      %1400 = vmatprep.subr.mxu0 0.0
      %1401 = vmatpush2.xpose.msra.mxu0 0.0
      %1402 = vmatprep.mubr.f32.mxu0 0.0
      %1403 = vmatmul.mubr.f32.gmra.mxu0 %v1335
      %v1404 = vpop.f32.mrf.mxu0
      %v1405 = vadd.f32 0.0, %v1404
      %v1406 = vpop.f32.mrf.mxu0
      %1407 = vdwg.mxu0
      %v1408 = vmul.f32 %v1405, 0.375
      %v1409 = vsub.f32 %v1408, %v98
      %v1411 = vsel %vm101, %v1405, 0
      %1413 = vmatprep.subr.mxu0 0.0
      %1414 = vmatpush1.msra.mxu0 0.0
      %1415 = vmatprep.subr.mxu0 0.0
      %1416 = vmatpush1.msra.mxu0 0.0
      %1417 = vmatprep.subr.mxu0 0.0
      %1418 = vmatpush1.msra.mxu0 0.0
      %1419 = vmatprep.subr.mxu0 0.0
      %1420 = vmatpush1.msra.mxu0 0.0
      %1421 = vmatprep.subr.mxu0 0.0
      %1422 = vmatpush1.msra.mxu0 0.0
      %1423 = vmatprep.subr.mxu0 0.0
      %1424 = vmatpush1.msra.mxu0 0.0
      %1425 = vmatprep.subr.mxu0 0.0
      %1426 = vmatpush1.msra.mxu0 0.0
      %1427 = vmatprep.subr.mxu0 0.0
      %1428 = vmatpush1.msra.mxu0 0.0
      %1429 = vmatprep.subr.mxu0 0.0
      %1430 = vmatpush1.msra.mxu0 0.0
      %1431 = vmatprep.subr.mxu0 0.0
      %1432 = vmatpush1.msra.mxu0 0.0
      %1433 = vmatprep.subr.mxu0 0.0
      %1434 = vmatpush1.msra.mxu0 0.0
      %1435 = vmatprep.subr.mxu0 0.0
      %1436 = vmatpush1.msra.mxu0 0.0
      %1437 = vmatprep.subr.mxu0 0.0
      %1438 = vmatpush1.msra.mxu0 0.0
      %1439 = vmatprep.subr.mxu0 0.0
      %1440 = vmatpush1.msra.mxu0 0.0
      %1441 = vmatprep.subr.mxu0 0.0
      %1442 = vmatpush1.msra.mxu0 0.0
      %1443 = vmatprep.subr.mxu0 0.0
      %1444 = vmatpush1.msra.mxu0 %v1409
      %1445 = vmatprep.subr.mxu0 0.0
      %1446 = vmatpush2.msra.mxu0 0.0
      %1447 = vmatprep.subr.mxu0 0.0
      %1448 = vmatpush2.msra.mxu0 0.0
      %1449 = vmatprep.subr.mxu0 0.0
      %1450 = vmatpush2.msra.mxu0 0.0
      %1451 = vmatprep.subr.mxu0 0.0
      %1452 = vmatpush2.msra.mxu0 0.0
      %1453 = vmatprep.subr.mxu0 0.0
      %1454 = vmatpush2.msra.mxu0 0.0
      %1455 = vmatprep.subr.mxu0 0.0
      %1456 = vmatpush2.msra.mxu0 0.0
      %1457 = vmatprep.subr.mxu0 0.0
      %1458 = vmatpush2.msra.mxu0 0.0
      %1459 = vmatprep.subr.mxu0 0.0
      %1460 = vmatpush2.msra.mxu0 0.0
      %1461 = vmatprep.subr.mxu0 0.0
      %1462 = vmatpush2.msra.mxu0 0.0
      %1463 = vmatprep.subr.mxu0 0.0
      %1464 = vmatpush2.msra.mxu0 0.0
      %1465 = vmatprep.subr.mxu0 0.0
      %1466 = vmatpush2.msra.mxu0 0.0
      %1467 = vmatprep.subr.mxu0 0.0
      %1468 = vmatpush2.msra.mxu0 0.0
      %1469 = vmatprep.subr.mxu0 0.0
      %1470 = vmatpush2.msra.mxu0 0.0
      %1471 = vmatprep.subr.mxu0 0.0
      %1472 = vmatpush2.msra.mxu0 0.0
      %1473 = vmatprep.subr.mxu0 0.0
      %1474 = vmatpush2.msra.mxu0 0.0
      %1475 = vmatprep.subr.mxu0 0.0
      %1476 = vmatpush2.msra.mxu0 0.0
      %1477 = vmatprep.mubr.f32.mxu0 0.0
      %1478 = vmatmul.mubr.f32.gmra.mxu0 %v1411
      %v1479 = vpop.f32.mrf.mxu0
      %v1480 = vadd.f32 %v100, %v1479
      %v1481 = vpop.f32.mrf.mxu0
      %1482 = vdwg.mxu0
      %v1484 = vsel %vm101, %v1480, 0
      %1486 = vmatprep.subr.mxu0 0.0
      %1487 = vmatpush1.msra.mxu0 0.0
      %1488 = vmatprep.subr.mxu0 0.0
      %1489 = vmatpush1.msra.mxu0 0.0
      %1490 = vmatprep.subr.mxu0 0.0
      %1491 = vmatpush1.msra.mxu0 0.0
      %1492 = vmatprep.subr.mxu0 0.0
      %1493 = vmatpush1.msra.mxu0 0.0
      %1494 = vmatprep.subr.mxu0 0.0
      %1495 = vmatpush1.msra.mxu0 0.0
      %1496 = vmatprep.subr.mxu0 0.0
      %1497 = vmatpush1.msra.mxu0 0.0
      %1498 = vmatprep.subr.mxu0 0.0
      %1499 = vmatpush1.msra.mxu0 0.0
      %1500 = vmatprep.subr.mxu0 0.0
      %1501 = vmatpush1.msra.mxu0 0.0
      %1502 = vmatprep.subr.mxu0 0.0
      %1503 = vmatpush1.msra.mxu0 0.0
      %1504 = vmatprep.subr.mxu0 0.0
      %1505 = vmatpush1.msra.mxu0 0.0
      %1506 = vmatprep.subr.mxu0 0.0
      %1507 = vmatpush1.msra.mxu0 0.0
      %1508 = vmatprep.subr.mxu0 0.0
      %1509 = vmatpush1.msra.mxu0 0.0
      %1510 = vmatprep.subr.mxu0 0.0
      %1511 = vmatpush1.msra.mxu0 0.0
      %1512 = vmatprep.subr.mxu0 0.0
      %1513 = vmatpush1.msra.mxu0 0.0
      %1514 = vmatprep.subr.mxu0 0.0
      %1515 = vmatpush1.msra.mxu0 0.0
      %1516 = vmatprep.subr.mxu0 0.0
      %1517 = vmatpush1.msra.mxu0 %v1335
      %1518 = vmatprep.subr.mxu0 0.0
      %1519 = vmatpush2.msra.mxu0 0.0
      %1520 = vmatprep.subr.mxu0 0.0
      %1521 = vmatpush2.msra.mxu0 0.0
      %1522 = vmatprep.subr.mxu0 0.0
      %1523 = vmatpush2.msra.mxu0 0.0
      %1524 = vmatprep.subr.mxu0 0.0
      %1525 = vmatpush2.msra.mxu0 0.0
      %1526 = vmatprep.subr.mxu0 0.0
      %1527 = vmatpush2.msra.mxu0 0.0
      %1528 = vmatprep.subr.mxu0 0.0
      %1529 = vmatpush2.msra.mxu0 0.0
      %1530 = vmatprep.subr.mxu0 0.0
      %1531 = vmatpush2.msra.mxu0 0.0
      %1532 = vmatprep.subr.mxu0 0.0
      %1533 = vmatpush2.msra.mxu0 0.0
      %1534 = vmatprep.subr.mxu0 0.0
      %1535 = vmatpush2.msra.mxu0 0.0
      %1536 = vmatprep.subr.mxu0 0.0
      %1537 = vmatpush2.msra.mxu0 0.0
      %1538 = vmatprep.subr.mxu0 0.0
      %1539 = vmatpush2.msra.mxu0 0.0
      %1540 = vmatprep.subr.mxu0 0.0
      %1541 = vmatpush2.msra.mxu0 0.0
      %1542 = vmatprep.subr.mxu0 0.0
      %1543 = vmatpush2.msra.mxu0 0.0
      %1544 = vmatprep.subr.mxu0 0.0
      %1545 = vmatpush2.msra.mxu0 0.0
      %1546 = vmatprep.subr.mxu0 0.0
      %1547 = vmatpush2.msra.mxu0 0.0
      %1548 = vmatprep.subr.mxu0 0.0
      %1549 = vmatpush2.msra.mxu0 0.0
      %1550 = vmatprep.mubr.f32.mxu0 0.0
      %1551 = vmatmul.mubr.f32.gmra.mxu0 %v1484
      %v1552 = vpop.f32.mrf.mxu0
      %v1553 = vadd.f32 0.0, %v1552
      %v1554 = vpop.f32.mrf.mxu0
      %1555 = vdwg.mxu0
      %1556 = vmatprep.subr.mxu0 0.0
      %1557 = vmatpush1.xpose.msra.mxu0 0.0
      %1558 = vmatprep.subr.mxu0 0.0
      %1559 = vmatpush1.xpose.msra.mxu0 0.0
      %1560 = vmatprep.subr.mxu0 0.0
      %1561 = vmatpush1.xpose.msra.mxu0 0.0
      %1562 = vmatprep.subr.mxu0 0.0
      %1563 = vmatpush1.xpose.msra.mxu0 0.0
      %1564 = vmatprep.subr.mxu0 0.0
      %1565 = vmatpush1.xpose.msra.mxu0 0.0
      %1566 = vmatprep.subr.mxu0 0.0
      %1567 = vmatpush1.xpose.msra.mxu0 0.0
      %1568 = vmatprep.subr.mxu0 0.0
      %1569 = vmatpush1.xpose.msra.mxu0 0.0
      %1570 = vmatprep.subr.mxu0 0.0
      %1571 = vmatpush1.xpose.msra.mxu0 0.0
      %1572 = vmatprep.subr.mxu0 0.0
      %1573 = vmatpush1.xpose.msra.mxu0 0.0
      %1574 = vmatprep.subr.mxu0 0.0
      %1575 = vmatpush1.xpose.msra.mxu0 0.0
      %1576 = vmatprep.subr.mxu0 0.0
      %1577 = vmatpush1.xpose.msra.mxu0 0.0
      %1578 = vmatprep.subr.mxu0 0.0
      %1579 = vmatpush1.xpose.msra.mxu0 0.0
      %1580 = vmatprep.subr.mxu0 0.0
      %1581 = vmatpush1.xpose.msra.mxu0 0.0
      %1582 = vmatprep.subr.mxu0 0.0
      %1583 = vmatpush1.xpose.msra.mxu0 0.0
      %1584 = vmatprep.subr.mxu0 0.0
      %1585 = vmatpush1.xpose.msra.mxu0 0.0
      %1586 = vmatprep.subr.mxu0 0.0
      %1587 = vmatpush1.xpose.msra.mxu0 %v1553
      %1588 = vmatprep.subr.mxu0 0.0
      %1589 = vmatpush2.xpose.msra.mxu0 0.0
      %1590 = vmatprep.subr.mxu0 0.0
      %1591 = vmatpush2.xpose.msra.mxu0 0.0
      %1592 = vmatprep.subr.mxu0 0.0
      %1593 = vmatpush2.xpose.msra.mxu0 0.0
      %1594 = vmatprep.subr.mxu0 0.0
      %1595 = vmatpush2.xpose.msra.mxu0 0.0
      %1596 = vmatprep.subr.mxu0 0.0
      %1597 = vmatpush2.xpose.msra.mxu0 0.0
      %1598 = vmatprep.subr.mxu0 0.0
      %1599 = vmatpush2.xpose.msra.mxu0 0.0
      %1600 = vmatprep.subr.mxu0 0.0
      %1601 = vmatpush2.xpose.msra.mxu0 0.0
      %1602 = vmatprep.subr.mxu0 0.0
      %1603 = vmatpush2.xpose.msra.mxu0 0.0
      %1604 = vmatprep.subr.mxu0 0.0
      %1605 = vmatpush2.xpose.msra.mxu0 0.0
      %1606 = vmatprep.subr.mxu0 0.0
      %1607 = vmatpush2.xpose.msra.mxu0 0.0
      %1608 = vmatprep.subr.mxu0 0.0
      %1609 = vmatpush2.xpose.msra.mxu0 0.0
      %1610 = vmatprep.subr.mxu0 0.0
      %1611 = vmatpush2.xpose.msra.mxu0 0.0
      %1612 = vmatprep.subr.mxu0 0.0
      %1613 = vmatpush2.xpose.msra.mxu0 0.0
      %1614 = vmatprep.subr.mxu0 0.0
      %1615 = vmatpush2.xpose.msra.mxu0 0.0
      %1616 = vmatprep.subr.mxu0 0.0
      %1617 = vmatpush2.xpose.msra.mxu0 0.0
      %1618 = vmatprep.subr.mxu0 0.0
      %1619 = vmatpush2.xpose.msra.mxu0 0.0
      %1620 = vmatprep.mubr.f32.mxu0 0.0
      %1621 = vmatmul.mubr.f32.gmra.mxu0 %v1553
      %v1622 = vpop.f32.mrf.mxu0
      %v1623 = vadd.f32 0.0, %v1622
      %v1624 = vpop.f32.mrf.mxu0
      %1625 = vdwg.mxu0
      %v1626 = vmul.f32 %v1623, 0.375
      %v1627 = vsub.f32 %v1626, %v98
      %v1629 = vsel %vm101, %v1623, 0
      %1631 = vmatprep.subr.mxu0 0.0
      %1632 = vmatpush1.msra.mxu0 0.0
      %1633 = vmatprep.subr.mxu0 0.0
      %1634 = vmatpush1.msra.mxu0 0.0
      %1635 = vmatprep.subr.mxu0 0.0
      %1636 = vmatpush1.msra.mxu0 0.0
      %1637 = vmatprep.subr.mxu0 0.0
      %1638 = vmatpush1.msra.mxu0 0.0
      %1639 = vmatprep.subr.mxu0 0.0
      %1640 = vmatpush1.msra.mxu0 0.0
      %1641 = vmatprep.subr.mxu0 0.0
      %1642 = vmatpush1.msra.mxu0 0.0
      %1643 = vmatprep.subr.mxu0 0.0
      %1644 = vmatpush1.msra.mxu0 0.0
      %1645 = vmatprep.subr.mxu0 0.0
      %1646 = vmatpush1.msra.mxu0 0.0
      %1647 = vmatprep.subr.mxu0 0.0
      %1648 = vmatpush1.msra.mxu0 0.0
      %1649 = vmatprep.subr.mxu0 0.0
      %1650 = vmatpush1.msra.mxu0 0.0
      %1651 = vmatprep.subr.mxu0 0.0
      %1652 = vmatpush1.msra.mxu0 0.0
      %1653 = vmatprep.subr.mxu0 0.0
      %1654 = vmatpush1.msra.mxu0 0.0
      %1655 = vmatprep.subr.mxu0 0.0
      %1656 = vmatpush1.msra.mxu0 0.0
      %1657 = vmatprep.subr.mxu0 0.0
      %1658 = vmatpush1.msra.mxu0 0.0
      %1659 = vmatprep.subr.mxu0 0.0
      %1660 = vmatpush1.msra.mxu0 0.0
      %1661 = vmatprep.subr.mxu0 0.0
      %1662 = vmatpush1.msra.mxu0 %v1627
      %1663 = vmatprep.subr.mxu0 0.0
      %1664 = vmatpush2.msra.mxu0 0.0
      %1665 = vmatprep.subr.mxu0 0.0
      %1666 = vmatpush2.msra.mxu0 0.0
      %1667 = vmatprep.subr.mxu0 0.0
      %1668 = vmatpush2.msra.mxu0 0.0
      %1669 = vmatprep.subr.mxu0 0.0
      %1670 = vmatpush2.msra.mxu0 0.0
      %1671 = vmatprep.subr.mxu0 0.0
      %1672 = vmatpush2.msra.mxu0 0.0
      %1673 = vmatprep.subr.mxu0 0.0
      %1674 = vmatpush2.msra.mxu0 0.0
      %1675 = vmatprep.subr.mxu0 0.0
      %1676 = vmatpush2.msra.mxu0 0.0
      %1677 = vmatprep.subr.mxu0 0.0
      %1678 = vmatpush2.msra.mxu0 0.0
      %1679 = vmatprep.subr.mxu0 0.0
      %1680 = vmatpush2.msra.mxu0 0.0
      %1681 = vmatprep.subr.mxu0 0.0
      %1682 = vmatpush2.msra.mxu0 0.0
      %1683 = vmatprep.subr.mxu0 0.0
      %1684 = vmatpush2.msra.mxu0 0.0
      %1685 = vmatprep.subr.mxu0 0.0
      %1686 = vmatpush2.msra.mxu0 0.0
      %1687 = vmatprep.subr.mxu0 0.0
      %1688 = vmatpush2.msra.mxu0 0.0
      %1689 = vmatprep.subr.mxu0 0.0
      %1690 = vmatpush2.msra.mxu0 0.0
      %1691 = vmatprep.subr.mxu0 0.0
      %1692 = vmatpush2.msra.mxu0 0.0
      %1693 = vmatprep.subr.mxu0 0.0
      %1694 = vmatpush2.msra.mxu0 0.0
      %1695 = vmatprep.mubr.f32.mxu0 0.0
      %1696 = vmatmul.mubr.f32.gmra.mxu0 %v1629
      %v1697 = vpop.f32.mrf.mxu0
      %v1698 = vadd.f32 %v100, %v1697
      %v1699 = vpop.f32.mrf.mxu0
      %1700 = vdwg.mxu0
      %v1702 = vsel %vm101, %v1698, 0
      %1704 = vmatprep.subr.mxu0 0.0
      %1705 = vmatpush1.msra.mxu0 0.0
      %1706 = vmatprep.subr.mxu0 0.0
      %1707 = vmatpush1.msra.mxu0 0.0
      %1708 = vmatprep.subr.mxu0 0.0
      %1709 = vmatpush1.msra.mxu0 0.0
      %1710 = vmatprep.subr.mxu0 0.0
      %1711 = vmatpush1.msra.mxu0 0.0
      %1712 = vmatprep.subr.mxu0 0.0
      %1713 = vmatpush1.msra.mxu0 0.0
      %1714 = vmatprep.subr.mxu0 0.0
      %1715 = vmatpush1.msra.mxu0 0.0
      %1716 = vmatprep.subr.mxu0 0.0
      %1717 = vmatpush1.msra.mxu0 0.0
      %1718 = vmatprep.subr.mxu0 0.0
      %1719 = vmatpush1.msra.mxu0 0.0
      %1720 = vmatprep.subr.mxu0 0.0
      %1721 = vmatpush1.msra.mxu0 0.0
      %1722 = vmatprep.subr.mxu0 0.0
      %1723 = vmatpush1.msra.mxu0 0.0
      %1724 = vmatprep.subr.mxu0 0.0
      %1725 = vmatpush1.msra.mxu0 0.0
      %1726 = vmatprep.subr.mxu0 0.0
      %1727 = vmatpush1.msra.mxu0 0.0
      %1728 = vmatprep.subr.mxu0 0.0
      %1729 = vmatpush1.msra.mxu0 0.0
      %1730 = vmatprep.subr.mxu0 0.0
      %1731 = vmatpush1.msra.mxu0 0.0
      %1732 = vmatprep.subr.mxu0 0.0
      %1733 = vmatpush1.msra.mxu0 0.0
      %1734 = vmatprep.subr.mxu0 0.0
      %1735 = vmatpush1.msra.mxu0 %v1553
      %1736 = vmatprep.subr.mxu0 0.0
      %1737 = vmatpush2.msra.mxu0 0.0
      %1738 = vmatprep.subr.mxu0 0.0
      %1739 = vmatpush2.msra.mxu0 0.0
      %1740 = vmatprep.subr.mxu0 0.0
      %1741 = vmatpush2.msra.mxu0 0.0
      %1742 = vmatprep.subr.mxu0 0.0
      %1743 = vmatpush2.msra.mxu0 0.0
      %1744 = vmatprep.subr.mxu0 0.0
      %1745 = vmatpush2.msra.mxu0 0.0
      %1746 = vmatprep.subr.mxu0 0.0
      %1747 = vmatpush2.msra.mxu0 0.0
      %1748 = vmatprep.subr.mxu0 0.0
      %1749 = vmatpush2.msra.mxu0 0.0
      %1750 = vmatprep.subr.mxu0 0.0
      %1751 = vmatpush2.msra.mxu0 0.0
      %1752 = vmatprep.subr.mxu0 0.0
      %1753 = vmatpush2.msra.mxu0 0.0
      %1754 = vmatprep.subr.mxu0 0.0
      %1755 = vmatpush2.msra.mxu0 0.0
      %1756 = vmatprep.subr.mxu0 0.0
      %1757 = vmatpush2.msra.mxu0 0.0
      %1758 = vmatprep.subr.mxu0 0.0
      %1759 = vmatpush2.msra.mxu0 0.0
      %1760 = vmatprep.subr.mxu0 0.0
      %1761 = vmatpush2.msra.mxu0 0.0
      %1762 = vmatprep.subr.mxu0 0.0
      %1763 = vmatpush2.msra.mxu0 0.0
      %1764 = vmatprep.subr.mxu0 0.0
      %1765 = vmatpush2.msra.mxu0 0.0
      %1766 = vmatprep.subr.mxu0 0.0
      %1767 = vmatpush2.msra.mxu0 0.0
      %1768 = vmatprep.mubr.f32.mxu0 0.0
      %1769 = vmatmul.mubr.f32.gmra.mxu0 %v1702
      %v1770 = vpop.f32.mrf.mxu0
      %v1771 = vadd.f32 0.0, %v1770
      %v1772 = vpop.f32.mrf.mxu0
      %1773 = vdwg.mxu0
      %1774 = vmatprep.subr.mxu0 0.0
      %1775 = vmatpush1.xpose.msra.mxu0 0.0
      %1776 = vmatprep.subr.mxu0 0.0
      %1777 = vmatpush1.xpose.msra.mxu0 0.0
      %1778 = vmatprep.subr.mxu0 0.0
      %1779 = vmatpush1.xpose.msra.mxu0 0.0
      %1780 = vmatprep.subr.mxu0 0.0
      %1781 = vmatpush1.xpose.msra.mxu0 0.0
      %1782 = vmatprep.subr.mxu0 0.0
      %1783 = vmatpush1.xpose.msra.mxu0 0.0
      %1784 = vmatprep.subr.mxu0 0.0
      %1785 = vmatpush1.xpose.msra.mxu0 0.0
      %1786 = vmatprep.subr.mxu0 0.0
      %1787 = vmatpush1.xpose.msra.mxu0 0.0
      %1788 = vmatprep.subr.mxu0 0.0
      %1789 = vmatpush1.xpose.msra.mxu0 0.0
      %1790 = vmatprep.subr.mxu0 0.0
      %1791 = vmatpush1.xpose.msra.mxu0 0.0
      %1792 = vmatprep.subr.mxu0 0.0
      %1793 = vmatpush1.xpose.msra.mxu0 0.0
      %1794 = vmatprep.subr.mxu0 0.0
      %1795 = vmatpush1.xpose.msra.mxu0 0.0
      %1796 = vmatprep.subr.mxu0 0.0
      %1797 = vmatpush1.xpose.msra.mxu0 0.0
      %1798 = vmatprep.subr.mxu0 0.0
      %1799 = vmatpush1.xpose.msra.mxu0 0.0
      %1800 = vmatprep.subr.mxu0 0.0
      %1801 = vmatpush1.xpose.msra.mxu0 0.0
      %1802 = vmatprep.subr.mxu0 0.0
      %1803 = vmatpush1.xpose.msra.mxu0 0.0
      %1804 = vmatprep.subr.mxu0 0.0
      %1805 = vmatpush1.xpose.msra.mxu0 %v1771
      %1806 = vmatprep.subr.mxu0 0.0
      %1807 = vmatpush2.xpose.msra.mxu0 0.0
      %1808 = vmatprep.subr.mxu0 0.0
      %1809 = vmatpush2.xpose.msra.mxu0 0.0
      %1810 = vmatprep.subr.mxu0 0.0
      %1811 = vmatpush2.xpose.msra.mxu0 0.0
      %1812 = vmatprep.subr.mxu0 0.0
      %1813 = vmatpush2.xpose.msra.mxu0 0.0
      %1814 = vmatprep.subr.mxu0 0.0
      %1815 = vmatpush2.xpose.msra.mxu0 0.0
      %1816 = vmatprep.subr.mxu0 0.0
      %1817 = vmatpush2.xpose.msra.mxu0 0.0
      %1818 = vmatprep.subr.mxu0 0.0
      %1819 = vmatpush2.xpose.msra.mxu0 0.0
      %1820 = vmatprep.subr.mxu0 0.0
      %1821 = vmatpush2.xpose.msra.mxu0 0.0
      %1822 = vmatprep.subr.mxu0 0.0
      %1823 = vmatpush2.xpose.msra.mxu0 0.0
      %1824 = vmatprep.subr.mxu0 0.0
      %1825 = vmatpush2.xpose.msra.mxu0 0.0
      %1826 = vmatprep.subr.mxu0 0.0
      %1827 = vmatpush2.xpose.msra.mxu0 0.0
      %1828 = vmatprep.subr.mxu0 0.0
      %1829 = vmatpush2.xpose.msra.mxu0 0.0
      %1830 = vmatprep.subr.mxu0 0.0
      %1831 = vmatpush2.xpose.msra.mxu0 0.0
      %1832 = vmatprep.subr.mxu0 0.0
      %1833 = vmatpush2.xpose.msra.mxu0 0.0
      %1834 = vmatprep.subr.mxu0 0.0
      %1835 = vmatpush2.xpose.msra.mxu0 0.0
      %1836 = vmatprep.subr.mxu0 0.0
      %1837 = vmatpush2.xpose.msra.mxu0 0.0
      %1838 = vmatprep.mubr.f32.mxu0 0.0
      %1839 = vmatmul.mubr.f32.gmra.mxu0 %v1771
      %v1840 = vpop.f32.mrf.mxu0
      %v1841 = vadd.f32 0.0, %v1840
      %v1842 = vpop.f32.mrf.mxu0
      %1843 = vdwg.mxu0
      %v1844 = vmul.f32 %v1841, 0.375
      %v1845 = vsub.f32 %v1844, %v98
      %v1847 = vsel %vm101, %v1841, 0
      %1849 = vmatprep.subr.mxu0 0.0
      %1850 = vmatpush1.msra.mxu0 0.0
      %1851 = vmatprep.subr.mxu0 0.0
      %1852 = vmatpush1.msra.mxu0 0.0
      %1853 = vmatprep.subr.mxu0 0.0
      %1854 = vmatpush1.msra.mxu0 0.0
      %1855 = vmatprep.subr.mxu0 0.0
      %1856 = vmatpush1.msra.mxu0 0.0
      %1857 = vmatprep.subr.mxu0 0.0
      %1858 = vmatpush1.msra.mxu0 0.0
      %1859 = vmatprep.subr.mxu0 0.0
      %1860 = vmatpush1.msra.mxu0 0.0
      %1861 = vmatprep.subr.mxu0 0.0
      %1862 = vmatpush1.msra.mxu0 0.0
      %1863 = vmatprep.subr.mxu0 0.0
      %1864 = vmatpush1.msra.mxu0 0.0
      %1865 = vmatprep.subr.mxu0 0.0
      %1866 = vmatpush1.msra.mxu0 0.0
      %1867 = vmatprep.subr.mxu0 0.0
      %1868 = vmatpush1.msra.mxu0 0.0
      %1869 = vmatprep.subr.mxu0 0.0
      %1870 = vmatpush1.msra.mxu0 0.0
      %1871 = vmatprep.subr.mxu0 0.0
      %1872 = vmatpush1.msra.mxu0 0.0
      %1873 = vmatprep.subr.mxu0 0.0
      %1874 = vmatpush1.msra.mxu0 0.0
      %1875 = vmatprep.subr.mxu0 0.0
      %1876 = vmatpush1.msra.mxu0 0.0
      %1877 = vmatprep.subr.mxu0 0.0
      %1878 = vmatpush1.msra.mxu0 0.0
      %1879 = vmatprep.subr.mxu0 0.0
      %1880 = vmatpush1.msra.mxu0 %v1845
      %1881 = vmatprep.subr.mxu0 0.0
      %1882 = vmatpush2.msra.mxu0 0.0
      %1883 = vmatprep.subr.mxu0 0.0
      %1884 = vmatpush2.msra.mxu0 0.0
      %1885 = vmatprep.subr.mxu0 0.0
      %1886 = vmatpush2.msra.mxu0 0.0
      %1887 = vmatprep.subr.mxu0 0.0
      %1888 = vmatpush2.msra.mxu0 0.0
      %1889 = vmatprep.subr.mxu0 0.0
      %1890 = vmatpush2.msra.mxu0 0.0
      %1891 = vmatprep.subr.mxu0 0.0
      %1892 = vmatpush2.msra.mxu0 0.0
      %1893 = vmatprep.subr.mxu0 0.0
      %1894 = vmatpush2.msra.mxu0 0.0
      %1895 = vmatprep.subr.mxu0 0.0
      %1896 = vmatpush2.msra.mxu0 0.0
      %1897 = vmatprep.subr.mxu0 0.0
      %1898 = vmatpush2.msra.mxu0 0.0
      %1899 = vmatprep.subr.mxu0 0.0
      %1900 = vmatpush2.msra.mxu0 0.0
      %1901 = vmatprep.subr.mxu0 0.0
      %1902 = vmatpush2.msra.mxu0 0.0
      %1903 = vmatprep.subr.mxu0 0.0
      %1904 = vmatpush2.msra.mxu0 0.0
      %1905 = vmatprep.subr.mxu0 0.0
      %1906 = vmatpush2.msra.mxu0 0.0
      %1907 = vmatprep.subr.mxu0 0.0
      %1908 = vmatpush2.msra.mxu0 0.0
      %1909 = vmatprep.subr.mxu0 0.0
      %1910 = vmatpush2.msra.mxu0 0.0
      %1911 = vmatprep.subr.mxu0 0.0
      %1912 = vmatpush2.msra.mxu0 0.0
      %1913 = vmatprep.mubr.f32.mxu0 0.0
      %1914 = vmatmul.mubr.f32.gmra.mxu0 %v1847
      %v1915 = vpop.f32.mrf.mxu0
      %v1916 = vadd.f32 %v100, %v1915
      %v1917 = vpop.f32.mrf.mxu0
      %1918 = vdwg.mxu0
      %v1920 = vsel %vm101, %v1916, 0
      %1922 = vmatprep.subr.mxu0 0.0
      %1923 = vmatpush1.msra.mxu0 0.0
      %1924 = vmatprep.subr.mxu0 0.0
      %1925 = vmatpush1.msra.mxu0 0.0
      %1926 = vmatprep.subr.mxu0 0.0
      %1927 = vmatpush1.msra.mxu0 0.0
      %1928 = vmatprep.subr.mxu0 0.0
      %1929 = vmatpush1.msra.mxu0 0.0
      %1930 = vmatprep.subr.mxu0 0.0
      %1931 = vmatpush1.msra.mxu0 0.0
      %1932 = vmatprep.subr.mxu0 0.0
      %1933 = vmatpush1.msra.mxu0 0.0
      %1934 = vmatprep.subr.mxu0 0.0
      %1935 = vmatpush1.msra.mxu0 0.0
      %1936 = vmatprep.subr.mxu0 0.0
      %1937 = vmatpush1.msra.mxu0 0.0
      %1938 = vmatprep.subr.mxu0 0.0
      %1939 = vmatpush1.msra.mxu0 0.0
      %1940 = vmatprep.subr.mxu0 0.0
      %1941 = vmatpush1.msra.mxu0 0.0
      %1942 = vmatprep.subr.mxu0 0.0
      %1943 = vmatpush1.msra.mxu0 0.0
      %1944 = vmatprep.subr.mxu0 0.0
      %1945 = vmatpush1.msra.mxu0 0.0
      %1946 = vmatprep.subr.mxu0 0.0
      %1947 = vmatpush1.msra.mxu0 0.0
      %1948 = vmatprep.subr.mxu0 0.0
      %1949 = vmatpush1.msra.mxu0 0.0
      %1950 = vmatprep.subr.mxu0 0.0
      %1951 = vmatpush1.msra.mxu0 0.0
      %1952 = vmatprep.subr.mxu0 0.0
      %1953 = vmatpush1.msra.mxu0 %v1771
      %1954 = vmatprep.subr.mxu0 0.0
      %1955 = vmatpush2.msra.mxu0 0.0
      %1956 = vmatprep.subr.mxu0 0.0
      %1957 = vmatpush2.msra.mxu0 0.0
      %1958 = vmatprep.subr.mxu0 0.0
      %1959 = vmatpush2.msra.mxu0 0.0
      %1960 = vmatprep.subr.mxu0 0.0
      %1961 = vmatpush2.msra.mxu0 0.0
      %1962 = vmatprep.subr.mxu0 0.0
      %1963 = vmatpush2.msra.mxu0 0.0
      %1964 = vmatprep.subr.mxu0 0.0
      %1965 = vmatpush2.msra.mxu0 0.0
      %1966 = vmatprep.subr.mxu0 0.0
      %1967 = vmatpush2.msra.mxu0 0.0
      %1968 = vmatprep.subr.mxu0 0.0
      %1969 = vmatpush2.msra.mxu0 0.0
      %1970 = vmatprep.subr.mxu0 0.0
      %1971 = vmatpush2.msra.mxu0 0.0
      %1972 = vmatprep.subr.mxu0 0.0
      %1973 = vmatpush2.msra.mxu0 0.0
      %1974 = vmatprep.subr.mxu0 0.0
      %1975 = vmatpush2.msra.mxu0 0.0
      %1976 = vmatprep.subr.mxu0 0.0
      %1977 = vmatpush2.msra.mxu0 0.0
      %1978 = vmatprep.subr.mxu0 0.0
      %1979 = vmatpush2.msra.mxu0 0.0
      %1980 = vmatprep.subr.mxu0 0.0
      %1981 = vmatpush2.msra.mxu0 0.0
      %1982 = vmatprep.subr.mxu0 0.0
      %1983 = vmatpush2.msra.mxu0 0.0
      %1984 = vmatprep.subr.mxu0 0.0
      %1985 = vmatpush2.msra.mxu0 0.0
      %1986 = vmatprep.mubr.f32.mxu0 0.0
      %1987 = vmatmul.mubr.f32.gmra.mxu0 %v1920
      %v1988 = vpop.f32.mrf.mxu0
      %v1989 = vadd.f32 0.0, %v1988
      %v1990 = vpop.f32.mrf.mxu0
      %1991 = vdwg.mxu0
      %1992 = vmatprep.subr.mxu0 0.0
      %1993 = vmatpush1.xpose.msra.mxu0 0.0
      %1994 = vmatprep.subr.mxu0 0.0
      %1995 = vmatpush1.xpose.msra.mxu0 0.0
      %1996 = vmatprep.subr.mxu0 0.0
      %1997 = vmatpush1.xpose.msra.mxu0 0.0
      %1998 = vmatprep.subr.mxu0 0.0
      %1999 = vmatpush1.xpose.msra.mxu0 0.0
      %2000 = vmatprep.subr.mxu0 0.0
      %2001 = vmatpush1.xpose.msra.mxu0 0.0
      %2002 = vmatprep.subr.mxu0 0.0
      %2003 = vmatpush1.xpose.msra.mxu0 0.0
      %2004 = vmatprep.subr.mxu0 0.0
      %2005 = vmatpush1.xpose.msra.mxu0 0.0
      %2006 = vmatprep.subr.mxu0 0.0
      %2007 = vmatpush1.xpose.msra.mxu0 0.0
      %2008 = vmatprep.subr.mxu0 0.0
      %2009 = vmatpush1.xpose.msra.mxu0 0.0
      %2010 = vmatprep.subr.mxu0 0.0
      %2011 = vmatpush1.xpose.msra.mxu0 0.0
      %2012 = vmatprep.subr.mxu0 0.0
      %2013 = vmatpush1.xpose.msra.mxu0 0.0
      %2014 = vmatprep.subr.mxu0 0.0
      %2015 = vmatpush1.xpose.msra.mxu0 0.0
      %2016 = vmatprep.subr.mxu0 0.0
      %2017 = vmatpush1.xpose.msra.mxu0 0.0
      %2018 = vmatprep.subr.mxu0 0.0
      %2019 = vmatpush1.xpose.msra.mxu0 0.0
      %2020 = vmatprep.subr.mxu0 0.0
      %2021 = vmatpush1.xpose.msra.mxu0 0.0
      %2022 = vmatprep.subr.mxu0 0.0
      %2023 = vmatpush1.xpose.msra.mxu0 %v1989
      %2024 = vmatprep.subr.mxu0 0.0
      %2025 = vmatpush2.xpose.msra.mxu0 0.0
      %2026 = vmatprep.subr.mxu0 0.0
      %2027 = vmatpush2.xpose.msra.mxu0 0.0
      %2028 = vmatprep.subr.mxu0 0.0
      %2029 = vmatpush2.xpose.msra.mxu0 0.0
      %2030 = vmatprep.subr.mxu0 0.0
      %2031 = vmatpush2.xpose.msra.mxu0 0.0
      %2032 = vmatprep.subr.mxu0 0.0
      %2033 = vmatpush2.xpose.msra.mxu0 0.0
      %2034 = vmatprep.subr.mxu0 0.0
      %2035 = vmatpush2.xpose.msra.mxu0 0.0
      %2036 = vmatprep.subr.mxu0 0.0
      %2037 = vmatpush2.xpose.msra.mxu0 0.0
      %2038 = vmatprep.subr.mxu0 0.0
      %2039 = vmatpush2.xpose.msra.mxu0 0.0
      %2040 = vmatprep.subr.mxu0 0.0
      %2041 = vmatpush2.xpose.msra.mxu0 0.0
      %2042 = vmatprep.subr.mxu0 0.0
      %2043 = vmatpush2.xpose.msra.mxu0 0.0
      %2044 = vmatprep.subr.mxu0 0.0
      %2045 = vmatpush2.xpose.msra.mxu0 0.0
      %2046 = vmatprep.subr.mxu0 0.0
      %2047 = vmatpush2.xpose.msra.mxu0 0.0
      %2048 = vmatprep.subr.mxu0 0.0
      %2049 = vmatpush2.xpose.msra.mxu0 0.0
      %2050 = vmatprep.subr.mxu0 0.0
      %2051 = vmatpush2.xpose.msra.mxu0 0.0
      %2052 = vmatprep.subr.mxu0 0.0
      %2053 = vmatpush2.xpose.msra.mxu0 0.0
      %2054 = vmatprep.subr.mxu0 0.0
      %2055 = vmatpush2.xpose.msra.mxu0 0.0
      %2056 = vmatprep.mubr.f32.mxu0 0.0
      %2057 = vmatmul.mubr.f32.gmra.mxu0 %v1989
      %v2058 = vpop.f32.mrf.mxu0
      %v2059 = vadd.f32 0.0, %v2058
      %v2060 = vpop.f32.mrf.mxu0
      %2061 = vdwg.mxu0
      %v2062 = vmul.f32 %v2059, 0.375
      %v2063 = vsub.f32 %v2062, %v98
      %v2065 = vsel %vm101, %v2059, 0
      %2067 = vmatprep.subr.mxu0 0.0
      %2068 = vmatpush1.msra.mxu0 0.0
      %2069 = vmatprep.subr.mxu0 0.0
      %2070 = vmatpush1.msra.mxu0 0.0
      %2071 = vmatprep.subr.mxu0 0.0
      %2072 = vmatpush1.msra.mxu0 0.0
      %2073 = vmatprep.subr.mxu0 0.0
      %2074 = vmatpush1.msra.mxu0 0.0
      %2075 = vmatprep.subr.mxu0 0.0
      %2076 = vmatpush1.msra.mxu0 0.0
      %2077 = vmatprep.subr.mxu0 0.0
      %2078 = vmatpush1.msra.mxu0 0.0
      %2079 = vmatprep.subr.mxu0 0.0
      %2080 = vmatpush1.msra.mxu0 0.0
      %2081 = vmatprep.subr.mxu0 0.0
      %2082 = vmatpush1.msra.mxu0 0.0
      %2083 = vmatprep.subr.mxu0 0.0
      %2084 = vmatpush1.msra.mxu0 0.0
      %2085 = vmatprep.subr.mxu0 0.0
      %2086 = vmatpush1.msra.mxu0 0.0
      %2087 = vmatprep.subr.mxu0 0.0
      %2088 = vmatpush1.msra.mxu0 0.0
      %2089 = vmatprep.subr.mxu0 0.0
      %2090 = vmatpush1.msra.mxu0 0.0
      %2091 = vmatprep.subr.mxu0 0.0
      %2092 = vmatpush1.msra.mxu0 0.0
      %2093 = vmatprep.subr.mxu0 0.0
      %2094 = vmatpush1.msra.mxu0 0.0
      %2095 = vmatprep.subr.mxu0 0.0
      %2096 = vmatpush1.msra.mxu0 0.0
      %2097 = vmatprep.subr.mxu0 0.0
      %2098 = vmatpush1.msra.mxu0 %v2063
      %2099 = vmatprep.subr.mxu0 0.0
      %2100 = vmatpush2.msra.mxu0 0.0
      %2101 = vmatprep.subr.mxu0 0.0
      %2102 = vmatpush2.msra.mxu0 0.0
      %2103 = vmatprep.subr.mxu0 0.0
      %2104 = vmatpush2.msra.mxu0 0.0
      %2105 = vmatprep.subr.mxu0 0.0
      %2106 = vmatpush2.msra.mxu0 0.0
      %2107 = vmatprep.subr.mxu0 0.0
      %2108 = vmatpush2.msra.mxu0 0.0
      %2109 = vmatprep.subr.mxu0 0.0
      %2110 = vmatpush2.msra.mxu0 0.0
      %2111 = vmatprep.subr.mxu0 0.0
      %2112 = vmatpush2.msra.mxu0 0.0
      %2113 = vmatprep.subr.mxu0 0.0
      %2114 = vmatpush2.msra.mxu0 0.0
      %2115 = vmatprep.subr.mxu0 0.0
      %2116 = vmatpush2.msra.mxu0 0.0
      %2117 = vmatprep.subr.mxu0 0.0
      %2118 = vmatpush2.msra.mxu0 0.0
      %2119 = vmatprep.subr.mxu0 0.0
      %2120 = vmatpush2.msra.mxu0 0.0
      %2121 = vmatprep.subr.mxu0 0.0
      %2122 = vmatpush2.msra.mxu0 0.0
      %2123 = vmatprep.subr.mxu0 0.0
      %2124 = vmatpush2.msra.mxu0 0.0
      %2125 = vmatprep.subr.mxu0 0.0
      %2126 = vmatpush2.msra.mxu0 0.0
      %2127 = vmatprep.subr.mxu0 0.0
      %2128 = vmatpush2.msra.mxu0 0.0
      %2129 = vmatprep.subr.mxu0 0.0
      %2130 = vmatpush2.msra.mxu0 0.0
      %2131 = vmatprep.mubr.f32.mxu0 0.0
      %2132 = vmatmul.mubr.f32.gmra.mxu0 %v2065
      %v2133 = vpop.f32.mrf.mxu0
      %v2134 = vadd.f32 %v100, %v2133
      %v2135 = vpop.f32.mrf.mxu0
      %2136 = vdwg.mxu0
      %v2138 = vsel %vm101, %v2134, 0
      %2140 = vmatprep.subr.mxu0 0.0
      %2141 = vmatpush1.msra.mxu0 0.0
      %2142 = vmatprep.subr.mxu0 0.0
      %2143 = vmatpush1.msra.mxu0 0.0
      %2144 = vmatprep.subr.mxu0 0.0
      %2145 = vmatpush1.msra.mxu0 0.0
      %2146 = vmatprep.subr.mxu0 0.0
      %2147 = vmatpush1.msra.mxu0 0.0
      %2148 = vmatprep.subr.mxu0 0.0
      %2149 = vmatpush1.msra.mxu0 0.0
      %2150 = vmatprep.subr.mxu0 0.0
      %2151 = vmatpush1.msra.mxu0 0.0
      %2152 = vmatprep.subr.mxu0 0.0
      %2153 = vmatpush1.msra.mxu0 0.0
      %2154 = vmatprep.subr.mxu0 0.0
      %2155 = vmatpush1.msra.mxu0 0.0
      %2156 = vmatprep.subr.mxu0 0.0
      %2157 = vmatpush1.msra.mxu0 0.0
      %2158 = vmatprep.subr.mxu0 0.0
      %2159 = vmatpush1.msra.mxu0 0.0
      %2160 = vmatprep.subr.mxu0 0.0
      %2161 = vmatpush1.msra.mxu0 0.0
      %2162 = vmatprep.subr.mxu0 0.0
      %2163 = vmatpush1.msra.mxu0 0.0
      %2164 = vmatprep.subr.mxu0 0.0
      %2165 = vmatpush1.msra.mxu0 0.0
      %2166 = vmatprep.subr.mxu0 0.0
      %2167 = vmatpush1.msra.mxu0 0.0
      %2168 = vmatprep.subr.mxu0 0.0
      %2169 = vmatpush1.msra.mxu0 0.0
      %2170 = vmatprep.subr.mxu0 0.0
      %2171 = vmatpush1.msra.mxu0 %v1989
      %2172 = vmatprep.subr.mxu0 0.0
      %2173 = vmatpush2.msra.mxu0 0.0
      %2174 = vmatprep.subr.mxu0 0.0
      %2175 = vmatpush2.msra.mxu0 0.0
      %2176 = vmatprep.subr.mxu0 0.0
      %2177 = vmatpush2.msra.mxu0 0.0
      %2178 = vmatprep.subr.mxu0 0.0
      %2179 = vmatpush2.msra.mxu0 0.0
      %2180 = vmatprep.subr.mxu0 0.0
      %2181 = vmatpush2.msra.mxu0 0.0
      %2182 = vmatprep.subr.mxu0 0.0
      %2183 = vmatpush2.msra.mxu0 0.0
      %2184 = vmatprep.subr.mxu0 0.0
      %2185 = vmatpush2.msra.mxu0 0.0
      %2186 = vmatprep.subr.mxu0 0.0
      %2187 = vmatpush2.msra.mxu0 0.0
      %2188 = vmatprep.subr.mxu0 0.0
      %2189 = vmatpush2.msra.mxu0 0.0
      %2190 = vmatprep.subr.mxu0 0.0
      %2191 = vmatpush2.msra.mxu0 0.0
      %2192 = vmatprep.subr.mxu0 0.0
      %2193 = vmatpush2.msra.mxu0 0.0
      %2194 = vmatprep.subr.mxu0 0.0
      %2195 = vmatpush2.msra.mxu0 0.0
      %2196 = vmatprep.subr.mxu0 0.0
      %2197 = vmatpush2.msra.mxu0 0.0
      %2198 = vmatprep.subr.mxu0 0.0
      %2199 = vmatpush2.msra.mxu0 0.0
      %2200 = vmatprep.subr.mxu0 0.0
      %2201 = vmatpush2.msra.mxu0 0.0
      %2202 = vmatprep.subr.mxu0 0.0
      %2203 = vmatpush2.msra.mxu0 0.0
      %2204 = vmatprep.mubr.f32.mxu0 0.0
      %2205 = vmatmul.mubr.f32.gmra.mxu0 %v2138
      %v2206 = vpop.f32.mrf.mxu0
      %v2207 = vadd.f32 0.0, %v2206
      %v2208 = vpop.f32.mrf.mxu0
      %2209 = vdwg.mxu0
      %2210 = vmatprep.subr.mxu0 0.0
      %2211 = vmatpush1.xpose.msra.mxu0 0.0
      %2212 = vmatprep.subr.mxu0 0.0
      %2213 = vmatpush1.xpose.msra.mxu0 0.0
      %2214 = vmatprep.subr.mxu0 0.0
      %2215 = vmatpush1.xpose.msra.mxu0 0.0
      %2216 = vmatprep.subr.mxu0 0.0
      %2217 = vmatpush1.xpose.msra.mxu0 0.0
      %2218 = vmatprep.subr.mxu0 0.0
      %2219 = vmatpush1.xpose.msra.mxu0 0.0
      %2220 = vmatprep.subr.mxu0 0.0
      %2221 = vmatpush1.xpose.msra.mxu0 0.0
      %2222 = vmatprep.subr.mxu0 0.0
      %2223 = vmatpush1.xpose.msra.mxu0 0.0
      %2224 = vmatprep.subr.mxu0 0.0
      %2225 = vmatpush1.xpose.msra.mxu0 0.0
      %2226 = vmatprep.subr.mxu0 0.0
      %2227 = vmatpush1.xpose.msra.mxu0 0.0
      %2228 = vmatprep.subr.mxu0 0.0
      %2229 = vmatpush1.xpose.msra.mxu0 0.0
      %2230 = vmatprep.subr.mxu0 0.0
      %2231 = vmatpush1.xpose.msra.mxu0 0.0
      %2232 = vmatprep.subr.mxu0 0.0
      %2233 = vmatpush1.xpose.msra.mxu0 0.0
      %2234 = vmatprep.subr.mxu0 0.0
      %2235 = vmatpush1.xpose.msra.mxu0 0.0
      %2236 = vmatprep.subr.mxu0 0.0
      %2237 = vmatpush1.xpose.msra.mxu0 0.0
      %2238 = vmatprep.subr.mxu0 0.0
      %2239 = vmatpush1.xpose.msra.mxu0 0.0
      %2240 = vmatprep.subr.mxu0 0.0
      %2241 = vmatpush1.xpose.msra.mxu0 %v2207
      %2242 = vmatprep.subr.mxu0 0.0
      %2243 = vmatpush2.xpose.msra.mxu0 0.0
      %2244 = vmatprep.subr.mxu0 0.0
      %2245 = vmatpush2.xpose.msra.mxu0 0.0
      %2246 = vmatprep.subr.mxu0 0.0
      %2247 = vmatpush2.xpose.msra.mxu0 0.0
      %2248 = vmatprep.subr.mxu0 0.0
      %2249 = vmatpush2.xpose.msra.mxu0 0.0
      %2250 = vmatprep.subr.mxu0 0.0
      %2251 = vmatpush2.xpose.msra.mxu0 0.0
      %2252 = vmatprep.subr.mxu0 0.0
      %2253 = vmatpush2.xpose.msra.mxu0 0.0
      %2254 = vmatprep.subr.mxu0 0.0
      %2255 = vmatpush2.xpose.msra.mxu0 0.0
      %2256 = vmatprep.subr.mxu0 0.0
      %2257 = vmatpush2.xpose.msra.mxu0 0.0
      %2258 = vmatprep.subr.mxu0 0.0
      %2259 = vmatpush2.xpose.msra.mxu0 0.0
      %2260 = vmatprep.subr.mxu0 0.0
      %2261 = vmatpush2.xpose.msra.mxu0 0.0
      %2262 = vmatprep.subr.mxu0 0.0
      %2263 = vmatpush2.xpose.msra.mxu0 0.0
      %2264 = vmatprep.subr.mxu0 0.0
      %2265 = vmatpush2.xpose.msra.mxu0 0.0
      %2266 = vmatprep.subr.mxu0 0.0
      %2267 = vmatpush2.xpose.msra.mxu0 0.0
      %2268 = vmatprep.subr.mxu0 0.0
      %2269 = vmatpush2.xpose.msra.mxu0 0.0
      %2270 = vmatprep.subr.mxu0 0.0
      %2271 = vmatpush2.xpose.msra.mxu0 0.0
      %2272 = vmatprep.subr.mxu0 0.0
      %2273 = vmatpush2.xpose.msra.mxu0 0.0
      %2274 = vmatprep.mubr.f32.mxu0 0.0
      %2275 = vmatmul.mubr.f32.gmra.mxu0 %v2207
      %v2276 = vpop.f32.mrf.mxu0
      %v2277 = vadd.f32 0.0, %v2276
      %v2278 = vpop.f32.mrf.mxu0
      %2279 = vdwg.mxu0
      %v2280 = vmul.f32 %v2277, 0.375
      %v2281 = vsub.f32 %v2280, %v98
      %v2283 = vsel %vm101, %v2277, 0
      %2285 = vmatprep.subr.mxu0 0.0
      %2286 = vmatpush1.msra.mxu0 0.0
      %2287 = vmatprep.subr.mxu0 0.0
      %2288 = vmatpush1.msra.mxu0 0.0
      %2289 = vmatprep.subr.mxu0 0.0
      %2290 = vmatpush1.msra.mxu0 0.0
      %2291 = vmatprep.subr.mxu0 0.0
      %2292 = vmatpush1.msra.mxu0 0.0
      %2293 = vmatprep.subr.mxu0 0.0
      %2294 = vmatpush1.msra.mxu0 0.0
      %2295 = vmatprep.subr.mxu0 0.0
      %2296 = vmatpush1.msra.mxu0 0.0
      %2297 = vmatprep.subr.mxu0 0.0
      %2298 = vmatpush1.msra.mxu0 0.0
      %2299 = vmatprep.subr.mxu0 0.0
      %2300 = vmatpush1.msra.mxu0 0.0
      %2301 = vmatprep.subr.mxu0 0.0
      %2302 = vmatpush1.msra.mxu0 0.0
      %2303 = vmatprep.subr.mxu0 0.0
      %2304 = vmatpush1.msra.mxu0 0.0
      %2305 = vmatprep.subr.mxu0 0.0
      %2306 = vmatpush1.msra.mxu0 0.0
      %2307 = vmatprep.subr.mxu0 0.0
      %2308 = vmatpush1.msra.mxu0 0.0
      %2309 = vmatprep.subr.mxu0 0.0
      %2310 = vmatpush1.msra.mxu0 0.0
      %2311 = vmatprep.subr.mxu0 0.0
      %2312 = vmatpush1.msra.mxu0 0.0
      %2313 = vmatprep.subr.mxu0 0.0
      %2314 = vmatpush1.msra.mxu0 0.0
      %2315 = vmatprep.subr.mxu0 0.0
      %2316 = vmatpush1.msra.mxu0 %v2281
      %2317 = vmatprep.subr.mxu0 0.0
      %2318 = vmatpush2.msra.mxu0 0.0
      %2319 = vmatprep.subr.mxu0 0.0
      %2320 = vmatpush2.msra.mxu0 0.0
      %2321 = vmatprep.subr.mxu0 0.0
      %2322 = vmatpush2.msra.mxu0 0.0
      %2323 = vmatprep.subr.mxu0 0.0
      %2324 = vmatpush2.msra.mxu0 0.0
      %2325 = vmatprep.subr.mxu0 0.0
      %2326 = vmatpush2.msra.mxu0 0.0
      %2327 = vmatprep.subr.mxu0 0.0
      %2328 = vmatpush2.msra.mxu0 0.0
      %2329 = vmatprep.subr.mxu0 0.0
      %2330 = vmatpush2.msra.mxu0 0.0
      %2331 = vmatprep.subr.mxu0 0.0
      %2332 = vmatpush2.msra.mxu0 0.0
      %2333 = vmatprep.subr.mxu0 0.0
      %2334 = vmatpush2.msra.mxu0 0.0
      %2335 = vmatprep.subr.mxu0 0.0
      %2336 = vmatpush2.msra.mxu0 0.0
      %2337 = vmatprep.subr.mxu0 0.0
      %2338 = vmatpush2.msra.mxu0 0.0
      %2339 = vmatprep.subr.mxu0 0.0
      %2340 = vmatpush2.msra.mxu0 0.0
      %2341 = vmatprep.subr.mxu0 0.0
      %2342 = vmatpush2.msra.mxu0 0.0
      %2343 = vmatprep.subr.mxu0 0.0
      %2344 = vmatpush2.msra.mxu0 0.0
      %2345 = vmatprep.subr.mxu0 0.0
      %2346 = vmatpush2.msra.mxu0 0.0
      %2347 = vmatprep.subr.mxu0 0.0
      %2348 = vmatpush2.msra.mxu0 0.0
      %2349 = vmatprep.mubr.f32.mxu0 0.0
      %2350 = vmatmul.mubr.f32.gmra.mxu0 %v2283
      %v2351 = vpop.f32.mrf.mxu0
      %v2352 = vadd.f32 %v100, %v2351
      %v2353 = vpop.f32.mrf.mxu0
      %2354 = vdwg.mxu0
      %v2356 = vsel %vm101, %v2352, 0
      %2358 = vmatprep.subr.mxu0 0.0
      %2359 = vmatpush1.msra.mxu0 0.0
      %2360 = vmatprep.subr.mxu0 0.0
      %2361 = vmatpush1.msra.mxu0 0.0
      %2362 = vmatprep.subr.mxu0 0.0
      %2363 = vmatpush1.msra.mxu0 0.0
      %2364 = vmatprep.subr.mxu0 0.0
      %2365 = vmatpush1.msra.mxu0 0.0
      %2366 = vmatprep.subr.mxu0 0.0
      %2367 = vmatpush1.msra.mxu0 0.0
      %2368 = vmatprep.subr.mxu0 0.0
      %2369 = vmatpush1.msra.mxu0 0.0
      %2370 = vmatprep.subr.mxu0 0.0
      %2371 = vmatpush1.msra.mxu0 0.0
      %2372 = vmatprep.subr.mxu0 0.0
      %2373 = vmatpush1.msra.mxu0 0.0
      %2374 = vmatprep.subr.mxu0 0.0
      %2375 = vmatpush1.msra.mxu0 0.0
      %2376 = vmatprep.subr.mxu0 0.0
      %2377 = vmatpush1.msra.mxu0 0.0
      %2378 = vmatprep.subr.mxu0 0.0
      %2379 = vmatpush1.msra.mxu0 0.0
      %2380 = vmatprep.subr.mxu0 0.0
      %2381 = vmatpush1.msra.mxu0 0.0
      %2382 = vmatprep.subr.mxu0 0.0
      %2383 = vmatpush1.msra.mxu0 0.0
      %2384 = vmatprep.subr.mxu0 0.0
      %2385 = vmatpush1.msra.mxu0 0.0
      %2386 = vmatprep.subr.mxu0 0.0
      %2387 = vmatpush1.msra.mxu0 0.0
      %2388 = vmatprep.subr.mxu0 0.0
      %2389 = vmatpush1.msra.mxu0 %v2207
      %2390 = vmatprep.subr.mxu0 0.0
      %2391 = vmatpush2.msra.mxu0 0.0
      %2392 = vmatprep.subr.mxu0 0.0
      %2393 = vmatpush2.msra.mxu0 0.0
      %2394 = vmatprep.subr.mxu0 0.0
      %2395 = vmatpush2.msra.mxu0 0.0
      %2396 = vmatprep.subr.mxu0 0.0
      %2397 = vmatpush2.msra.mxu0 0.0
      %2398 = vmatprep.subr.mxu0 0.0
      %2399 = vmatpush2.msra.mxu0 0.0
      %2400 = vmatprep.subr.mxu0 0.0
      %2401 = vmatpush2.msra.mxu0 0.0
      %2402 = vmatprep.subr.mxu0 0.0
      %2403 = vmatpush2.msra.mxu0 0.0
      %2404 = vmatprep.subr.mxu0 0.0
      %2405 = vmatpush2.msra.mxu0 0.0
      %2406 = vmatprep.subr.mxu0 0.0
      %2407 = vmatpush2.msra.mxu0 0.0
      %2408 = vmatprep.subr.mxu0 0.0
      %2409 = vmatpush2.msra.mxu0 0.0
      %2410 = vmatprep.subr.mxu0 0.0
      %2411 = vmatpush2.msra.mxu0 0.0
      %2412 = vmatprep.subr.mxu0 0.0
      %2413 = vmatpush2.msra.mxu0 0.0
      %2414 = vmatprep.subr.mxu0 0.0
      %2415 = vmatpush2.msra.mxu0 0.0
      %2416 = vmatprep.subr.mxu0 0.0
      %2417 = vmatpush2.msra.mxu0 0.0
      %2418 = vmatprep.subr.mxu0 0.0
      %2419 = vmatpush2.msra.mxu0 0.0
      %2420 = vmatprep.subr.mxu0 0.0
      %2421 = vmatpush2.msra.mxu0 0.0
      %2422 = vmatprep.mubr.f32.mxu0 0.0
      %2423 = vmatmul.mubr.f32.gmra.mxu0 %v2356
      %v2424 = vpop.f32.mrf.mxu0
      %v2425 = vadd.f32 0.0, %v2424
      %v2426 = vpop.f32.mrf.mxu0
      %2427 = vdwg.mxu0
      %2428 = vmatprep.subr.mxu0 0.0
      %2429 = vmatpush1.xpose.msra.mxu0 0.0
      %2430 = vmatprep.subr.mxu0 0.0
      %2431 = vmatpush1.xpose.msra.mxu0 0.0
      %2432 = vmatprep.subr.mxu0 0.0
      %2433 = vmatpush1.xpose.msra.mxu0 0.0
      %2434 = vmatprep.subr.mxu0 0.0
      %2435 = vmatpush1.xpose.msra.mxu0 0.0
      %2436 = vmatprep.subr.mxu0 0.0
      %2437 = vmatpush1.xpose.msra.mxu0 0.0
      %2438 = vmatprep.subr.mxu0 0.0
      %2439 = vmatpush1.xpose.msra.mxu0 0.0
      %2440 = vmatprep.subr.mxu0 0.0
      %2441 = vmatpush1.xpose.msra.mxu0 0.0
      %2442 = vmatprep.subr.mxu0 0.0
      %2443 = vmatpush1.xpose.msra.mxu0 0.0
      %2444 = vmatprep.subr.mxu0 0.0
      %2445 = vmatpush1.xpose.msra.mxu0 0.0
      %2446 = vmatprep.subr.mxu0 0.0
      %2447 = vmatpush1.xpose.msra.mxu0 0.0
      %2448 = vmatprep.subr.mxu0 0.0
      %2449 = vmatpush1.xpose.msra.mxu0 0.0
      %2450 = vmatprep.subr.mxu0 0.0
      %2451 = vmatpush1.xpose.msra.mxu0 0.0
      %2452 = vmatprep.subr.mxu0 0.0
      %2453 = vmatpush1.xpose.msra.mxu0 0.0
      %2454 = vmatprep.subr.mxu0 0.0
      %2455 = vmatpush1.xpose.msra.mxu0 0.0
      %2456 = vmatprep.subr.mxu0 0.0
      %2457 = vmatpush1.xpose.msra.mxu0 0.0
      %2458 = vmatprep.subr.mxu0 0.0
      %2459 = vmatpush1.xpose.msra.mxu0 %v2425
      %2460 = vmatprep.subr.mxu0 0.0
      %2461 = vmatpush2.xpose.msra.mxu0 0.0
      %2462 = vmatprep.subr.mxu0 0.0
      %2463 = vmatpush2.xpose.msra.mxu0 0.0
      %2464 = vmatprep.subr.mxu0 0.0
      %2465 = vmatpush2.xpose.msra.mxu0 0.0
      %2466 = vmatprep.subr.mxu0 0.0
      %2467 = vmatpush2.xpose.msra.mxu0 0.0
      %2468 = vmatprep.subr.mxu0 0.0
      %2469 = vmatpush2.xpose.msra.mxu0 0.0
      %2470 = vmatprep.subr.mxu0 0.0
      %2471 = vmatpush2.xpose.msra.mxu0 0.0
      %2472 = vmatprep.subr.mxu0 0.0
      %2473 = vmatpush2.xpose.msra.mxu0 0.0
      %2474 = vmatprep.subr.mxu0 0.0
      %2475 = vmatpush2.xpose.msra.mxu0 0.0
      %2476 = vmatprep.subr.mxu0 0.0
      %2477 = vmatpush2.xpose.msra.mxu0 0.0
      %2478 = vmatprep.subr.mxu0 0.0
      %2479 = vmatpush2.xpose.msra.mxu0 0.0
      %2480 = vmatprep.subr.mxu0 0.0
      %2481 = vmatpush2.xpose.msra.mxu0 0.0
      %2482 = vmatprep.subr.mxu0 0.0
      %2483 = vmatpush2.xpose.msra.mxu0 0.0
      %2484 = vmatprep.subr.mxu0 0.0
      %2485 = vmatpush2.xpose.msra.mxu0 0.0
      %2486 = vmatprep.subr.mxu0 0.0
      %2487 = vmatpush2.xpose.msra.mxu0 0.0
      %2488 = vmatprep.subr.mxu0 0.0
      %2489 = vmatpush2.xpose.msra.mxu0 0.0
      %2490 = vmatprep.subr.mxu0 0.0
      %2491 = vmatpush2.xpose.msra.mxu0 0.0
      %2492 = vmatprep.mubr.f32.mxu0 0.0
      %2493 = vmatmul.mubr.f32.gmra.mxu0 %v2425
      %v2494 = vpop.f32.mrf.mxu0
      %v2495 = vadd.f32 0.0, %v2494
      %v2496 = vpop.f32.mrf.mxu0
      %2497 = vdwg.mxu0
      %v2498 = vmul.f32 %v2495, 0.375
      %v2499 = vsub.f32 %v2498, %v98
      %v2501 = vsel %vm101, %v2495, 0
      %2503 = vmatprep.subr.mxu0 0.0
      %2504 = vmatpush1.msra.mxu0 0.0
      %2505 = vmatprep.subr.mxu0 0.0
      %2506 = vmatpush1.msra.mxu0 0.0
      %2507 = vmatprep.subr.mxu0 0.0
      %2508 = vmatpush1.msra.mxu0 0.0
      %2509 = vmatprep.subr.mxu0 0.0
      %2510 = vmatpush1.msra.mxu0 0.0
      %2511 = vmatprep.subr.mxu0 0.0
      %2512 = vmatpush1.msra.mxu0 0.0
      %2513 = vmatprep.subr.mxu0 0.0
      %2514 = vmatpush1.msra.mxu0 0.0
      %2515 = vmatprep.subr.mxu0 0.0
      %2516 = vmatpush1.msra.mxu0 0.0
      %2517 = vmatprep.subr.mxu0 0.0
      %2518 = vmatpush1.msra.mxu0 0.0
      %2519 = vmatprep.subr.mxu0 0.0
      %2520 = vmatpush1.msra.mxu0 0.0
      %2521 = vmatprep.subr.mxu0 0.0
      %2522 = vmatpush1.msra.mxu0 0.0
      %2523 = vmatprep.subr.mxu0 0.0
      %2524 = vmatpush1.msra.mxu0 0.0
      %2525 = vmatprep.subr.mxu0 0.0
      %2526 = vmatpush1.msra.mxu0 0.0
      %2527 = vmatprep.subr.mxu0 0.0
      %2528 = vmatpush1.msra.mxu0 0.0
      %2529 = vmatprep.subr.mxu0 0.0
      %2530 = vmatpush1.msra.mxu0 0.0
      %2531 = vmatprep.subr.mxu0 0.0
      %2532 = vmatpush1.msra.mxu0 0.0
      %2533 = vmatprep.subr.mxu0 0.0
      %2534 = vmatpush1.msra.mxu0 %v2499
      %2535 = vmatprep.subr.mxu0 0.0
      %2536 = vmatpush2.msra.mxu0 0.0
      %2537 = vmatprep.subr.mxu0 0.0
      %2538 = vmatpush2.msra.mxu0 0.0
      %2539 = vmatprep.subr.mxu0 0.0
      %2540 = vmatpush2.msra.mxu0 0.0
      %2541 = vmatprep.subr.mxu0 0.0
      %2542 = vmatpush2.msra.mxu0 0.0
      %2543 = vmatprep.subr.mxu0 0.0
      %2544 = vmatpush2.msra.mxu0 0.0
      %2545 = vmatprep.subr.mxu0 0.0
      %2546 = vmatpush2.msra.mxu0 0.0
      %2547 = vmatprep.subr.mxu0 0.0
      %2548 = vmatpush2.msra.mxu0 0.0
      %2549 = vmatprep.subr.mxu0 0.0
      %2550 = vmatpush2.msra.mxu0 0.0
      %2551 = vmatprep.subr.mxu0 0.0
      %2552 = vmatpush2.msra.mxu0 0.0
      %2553 = vmatprep.subr.mxu0 0.0
      %2554 = vmatpush2.msra.mxu0 0.0
      %2555 = vmatprep.subr.mxu0 0.0
      %2556 = vmatpush2.msra.mxu0 0.0
      %2557 = vmatprep.subr.mxu0 0.0
      %2558 = vmatpush2.msra.mxu0 0.0
      %2559 = vmatprep.subr.mxu0 0.0
      %2560 = vmatpush2.msra.mxu0 0.0
      %2561 = vmatprep.subr.mxu0 0.0
      %2562 = vmatpush2.msra.mxu0 0.0
      %2563 = vmatprep.subr.mxu0 0.0
      %2564 = vmatpush2.msra.mxu0 0.0
      %2565 = vmatprep.subr.mxu0 0.0
      %2566 = vmatpush2.msra.mxu0 0.0
      %2567 = vmatprep.mubr.f32.mxu0 0.0
      %2568 = vmatmul.mubr.f32.gmra.mxu0 %v2501
      %v2569 = vpop.f32.mrf.mxu0
      %v2570 = vadd.f32 %v100, %v2569
      %v2571 = vpop.f32.mrf.mxu0
      %2572 = vdwg.mxu0
      %v2574 = vsel %vm101, %v2570, 0
      %2576 = vmatprep.subr.mxu0 0.0
      %2577 = vmatpush1.msra.mxu0 0.0
      %2578 = vmatprep.subr.mxu0 0.0
      %2579 = vmatpush1.msra.mxu0 0.0
      %2580 = vmatprep.subr.mxu0 0.0
      %2581 = vmatpush1.msra.mxu0 0.0
      %2582 = vmatprep.subr.mxu0 0.0
      %2583 = vmatpush1.msra.mxu0 0.0
      %2584 = vmatprep.subr.mxu0 0.0
      %2585 = vmatpush1.msra.mxu0 0.0
      %2586 = vmatprep.subr.mxu0 0.0
      %2587 = vmatpush1.msra.mxu0 0.0
      %2588 = vmatprep.subr.mxu0 0.0
      %2589 = vmatpush1.msra.mxu0 0.0
      %2590 = vmatprep.subr.mxu0 0.0
      %2591 = vmatpush1.msra.mxu0 0.0
      %2592 = vmatprep.subr.mxu0 0.0
      %2593 = vmatpush1.msra.mxu0 0.0
      %2594 = vmatprep.subr.mxu0 0.0
      %2595 = vmatpush1.msra.mxu0 0.0
      %2596 = vmatprep.subr.mxu0 0.0
      %2597 = vmatpush1.msra.mxu0 0.0
      %2598 = vmatprep.subr.mxu0 0.0
      %2599 = vmatpush1.msra.mxu0 0.0
      %2600 = vmatprep.subr.mxu0 0.0
      %2601 = vmatpush1.msra.mxu0 0.0
      %2602 = vmatprep.subr.mxu0 0.0
      %2603 = vmatpush1.msra.mxu0 0.0
      %2604 = vmatprep.subr.mxu0 0.0
      %2605 = vmatpush1.msra.mxu0 0.0
      %2606 = vmatprep.subr.mxu0 0.0
      %2607 = vmatpush1.msra.mxu0 %v2425
      %2608 = vmatprep.subr.mxu0 0.0
      %2609 = vmatpush2.msra.mxu0 0.0
      %2610 = vmatprep.subr.mxu0 0.0
      %2611 = vmatpush2.msra.mxu0 0.0
      %2612 = vmatprep.subr.mxu0 0.0
      %2613 = vmatpush2.msra.mxu0 0.0
      %2614 = vmatprep.subr.mxu0 0.0
      %2615 = vmatpush2.msra.mxu0 0.0
      %2616 = vmatprep.subr.mxu0 0.0
      %2617 = vmatpush2.msra.mxu0 0.0
      %2618 = vmatprep.subr.mxu0 0.0
      %2619 = vmatpush2.msra.mxu0 0.0
      %2620 = vmatprep.subr.mxu0 0.0
      %2621 = vmatpush2.msra.mxu0 0.0
      %2622 = vmatprep.subr.mxu0 0.0
      %2623 = vmatpush2.msra.mxu0 0.0
      %2624 = vmatprep.subr.mxu0 0.0
      %2625 = vmatpush2.msra.mxu0 0.0
      %2626 = vmatprep.subr.mxu0 0.0
      %2627 = vmatpush2.msra.mxu0 0.0
      %2628 = vmatprep.subr.mxu0 0.0
      %2629 = vmatpush2.msra.mxu0 0.0
      %2630 = vmatprep.subr.mxu0 0.0
      %2631 = vmatpush2.msra.mxu0 0.0
      %2632 = vmatprep.subr.mxu0 0.0
      %2633 = vmatpush2.msra.mxu0 0.0
      %2634 = vmatprep.subr.mxu0 0.0
      %2635 = vmatpush2.msra.mxu0 0.0
      %2636 = vmatprep.subr.mxu0 0.0
      %2637 = vmatpush2.msra.mxu0 0.0
      %2638 = vmatprep.subr.mxu0 0.0
      %2639 = vmatpush2.msra.mxu0 0.0
      %2640 = vmatprep.mubr.f32.mxu0 0.0
      %2641 = vmatmul.mubr.f32.gmra.mxu0 %v2574
      %v2642 = vpop.f32.mrf.mxu0
      %v2643 = vadd.f32 0.0, %v2642
      %v2644 = vpop.f32.mrf.mxu0
      %2645 = vdwg.mxu0
      %2646 = vmatprep.subr.mxu0 0.0
      %2647 = vmatpush1.xpose.msra.mxu0 0.0
      %2648 = vmatprep.subr.mxu0 0.0
      %2649 = vmatpush1.xpose.msra.mxu0 0.0
      %2650 = vmatprep.subr.mxu0 0.0
      %2651 = vmatpush1.xpose.msra.mxu0 0.0
      %2652 = vmatprep.subr.mxu0 0.0
      %2653 = vmatpush1.xpose.msra.mxu0 0.0
      %2654 = vmatprep.subr.mxu0 0.0
      %2655 = vmatpush1.xpose.msra.mxu0 0.0
      %2656 = vmatprep.subr.mxu0 0.0
      %2657 = vmatpush1.xpose.msra.mxu0 0.0
      %2658 = vmatprep.subr.mxu0 0.0
      %2659 = vmatpush1.xpose.msra.mxu0 0.0
      %2660 = vmatprep.subr.mxu0 0.0
      %2661 = vmatpush1.xpose.msra.mxu0 0.0
      %2662 = vmatprep.subr.mxu0 0.0
      %2663 = vmatpush1.xpose.msra.mxu0 0.0
      %2664 = vmatprep.subr.mxu0 0.0
      %2665 = vmatpush1.xpose.msra.mxu0 0.0
      %2666 = vmatprep.subr.mxu0 0.0
      %2667 = vmatpush1.xpose.msra.mxu0 0.0
      %2668 = vmatprep.subr.mxu0 0.0
      %2669 = vmatpush1.xpose.msra.mxu0 0.0
      %2670 = vmatprep.subr.mxu0 0.0
      %2671 = vmatpush1.xpose.msra.mxu0 0.0
      %2672 = vmatprep.subr.mxu0 0.0
      %2673 = vmatpush1.xpose.msra.mxu0 0.0
      %2674 = vmatprep.subr.mxu0 0.0
      %2675 = vmatpush1.xpose.msra.mxu0 0.0
      %2676 = vmatprep.subr.mxu0 0.0
      %2677 = vmatpush1.xpose.msra.mxu0 %v2643
      %2678 = vmatprep.subr.mxu0 0.0
      %2679 = vmatpush2.xpose.msra.mxu0 0.0
      %2680 = vmatprep.subr.mxu0 0.0
      %2681 = vmatpush2.xpose.msra.mxu0 0.0
      %2682 = vmatprep.subr.mxu0 0.0
      %2683 = vmatpush2.xpose.msra.mxu0 0.0
      %2684 = vmatprep.subr.mxu0 0.0
      %2685 = vmatpush2.xpose.msra.mxu0 0.0
      %2686 = vmatprep.subr.mxu0 0.0
      %2687 = vmatpush2.xpose.msra.mxu0 0.0
      %2688 = vmatprep.subr.mxu0 0.0
      %2689 = vmatpush2.xpose.msra.mxu0 0.0
      %2690 = vmatprep.subr.mxu0 0.0
      %2691 = vmatpush2.xpose.msra.mxu0 0.0
      %2692 = vmatprep.subr.mxu0 0.0
      %2693 = vmatpush2.xpose.msra.mxu0 0.0
      %2694 = vmatprep.subr.mxu0 0.0
      %2695 = vmatpush2.xpose.msra.mxu0 0.0
      %2696 = vmatprep.subr.mxu0 0.0
      %2697 = vmatpush2.xpose.msra.mxu0 0.0
      %2698 = vmatprep.subr.mxu0 0.0
      %2699 = vmatpush2.xpose.msra.mxu0 0.0
      %2700 = vmatprep.subr.mxu0 0.0
      %2701 = vmatpush2.xpose.msra.mxu0 0.0
      %2702 = vmatprep.subr.mxu0 0.0
      %2703 = vmatpush2.xpose.msra.mxu0 0.0
      %2704 = vmatprep.subr.mxu0 0.0
      %2705 = vmatpush2.xpose.msra.mxu0 0.0
      %2706 = vmatprep.subr.mxu0 0.0
      %2707 = vmatpush2.xpose.msra.mxu0 0.0
      %2708 = vmatprep.subr.mxu0 0.0
      %2709 = vmatpush2.xpose.msra.mxu0 0.0
      %2710 = vmatprep.mubr.f32.mxu0 0.0
      %2711 = vmatmul.mubr.f32.gmra.mxu0 %v2643
      %v2712 = vpop.f32.mrf.mxu0
      %v2713 = vadd.f32 0.0, %v2712
      %v2714 = vpop.f32.mrf.mxu0
      %2715 = vdwg.mxu0
      %v2716 = vmul.f32 %v2713, 0.375
      %v2717 = vsub.f32 %v2716, %v98
      %v2719 = vsel %vm101, %v2713, 0
      %2721 = vmatprep.subr.mxu0 0.0
      %2722 = vmatpush1.msra.mxu0 0.0
      %2723 = vmatprep.subr.mxu0 0.0
      %2724 = vmatpush1.msra.mxu0 0.0
      %2725 = vmatprep.subr.mxu0 0.0
      %2726 = vmatpush1.msra.mxu0 0.0
      %2727 = vmatprep.subr.mxu0 0.0
      %2728 = vmatpush1.msra.mxu0 0.0
      %2729 = vmatprep.subr.mxu0 0.0
      %2730 = vmatpush1.msra.mxu0 0.0
      %2731 = vmatprep.subr.mxu0 0.0
      %2732 = vmatpush1.msra.mxu0 0.0
      %2733 = vmatprep.subr.mxu0 0.0
      %2734 = vmatpush1.msra.mxu0 0.0
      %2735 = vmatprep.subr.mxu0 0.0
      %2736 = vmatpush1.msra.mxu0 0.0
      %2737 = vmatprep.subr.mxu0 0.0
      %2738 = vmatpush1.msra.mxu0 0.0
      %2739 = vmatprep.subr.mxu0 0.0
      %2740 = vmatpush1.msra.mxu0 0.0
      %2741 = vmatprep.subr.mxu0 0.0
      %2742 = vmatpush1.msra.mxu0 0.0
      %2743 = vmatprep.subr.mxu0 0.0
      %2744 = vmatpush1.msra.mxu0 0.0
      %2745 = vmatprep.subr.mxu0 0.0
      %2746 = vmatpush1.msra.mxu0 0.0
      %2747 = vmatprep.subr.mxu0 0.0
      %2748 = vmatpush1.msra.mxu0 0.0
      %2749 = vmatprep.subr.mxu0 0.0
      %2750 = vmatpush1.msra.mxu0 0.0
      %2751 = vmatprep.subr.mxu0 0.0
      %2752 = vmatpush1.msra.mxu0 %v2717
      %2753 = vmatprep.subr.mxu0 0.0
      %2754 = vmatpush2.msra.mxu0 0.0
      %2755 = vmatprep.subr.mxu0 0.0
      %2756 = vmatpush2.msra.mxu0 0.0
      %2757 = vmatprep.subr.mxu0 0.0
      %2758 = vmatpush2.msra.mxu0 0.0
      %2759 = vmatprep.subr.mxu0 0.0
      %2760 = vmatpush2.msra.mxu0 0.0
      %2761 = vmatprep.subr.mxu0 0.0
      %2762 = vmatpush2.msra.mxu0 0.0
      %2763 = vmatprep.subr.mxu0 0.0
      %2764 = vmatpush2.msra.mxu0 0.0
      %2765 = vmatprep.subr.mxu0 0.0
      %2766 = vmatpush2.msra.mxu0 0.0
      %2767 = vmatprep.subr.mxu0 0.0
      %2768 = vmatpush2.msra.mxu0 0.0
      %2769 = vmatprep.subr.mxu0 0.0
      %2770 = vmatpush2.msra.mxu0 0.0
      %2771 = vmatprep.subr.mxu0 0.0
      %2772 = vmatpush2.msra.mxu0 0.0
      %2773 = vmatprep.subr.mxu0 0.0
      %2774 = vmatpush2.msra.mxu0 0.0
      %2775 = vmatprep.subr.mxu0 0.0
      %2776 = vmatpush2.msra.mxu0 0.0
      %2777 = vmatprep.subr.mxu0 0.0
      %2778 = vmatpush2.msra.mxu0 0.0
      %2779 = vmatprep.subr.mxu0 0.0
      %2780 = vmatpush2.msra.mxu0 0.0
      %2781 = vmatprep.subr.mxu0 0.0
      %2782 = vmatpush2.msra.mxu0 0.0
      %2783 = vmatprep.subr.mxu0 0.0
      %2784 = vmatpush2.msra.mxu0 0.0
      %2785 = vmatprep.mubr.f32.mxu0 0.0
      %2786 = vmatmul.mubr.f32.gmra.mxu0 %v2719
      %v2787 = vpop.f32.mrf.mxu0
      %v2788 = vadd.f32 %v100, %v2787
      %v2789 = vpop.f32.mrf.mxu0
      %2790 = vdwg.mxu0
      %v2792 = vsel %vm101, %v2788, 0
      %2794 = vmatprep.subr.mxu0 0.0
      %2795 = vmatpush1.msra.mxu0 0.0
      %2796 = vmatprep.subr.mxu0 0.0
      %2797 = vmatpush1.msra.mxu0 0.0
      %2798 = vmatprep.subr.mxu0 0.0
      %2799 = vmatpush1.msra.mxu0 0.0
      %2800 = vmatprep.subr.mxu0 0.0
      %2801 = vmatpush1.msra.mxu0 0.0
      %2802 = vmatprep.subr.mxu0 0.0
      %2803 = vmatpush1.msra.mxu0 0.0
      %2804 = vmatprep.subr.mxu0 0.0
      %2805 = vmatpush1.msra.mxu0 0.0
      %2806 = vmatprep.subr.mxu0 0.0
      %2807 = vmatpush1.msra.mxu0 0.0
      %2808 = vmatprep.subr.mxu0 0.0
      %2809 = vmatpush1.msra.mxu0 0.0
      %2810 = vmatprep.subr.mxu0 0.0
      %2811 = vmatpush1.msra.mxu0 0.0
      %2812 = vmatprep.subr.mxu0 0.0
      %2813 = vmatpush1.msra.mxu0 0.0
      %2814 = vmatprep.subr.mxu0 0.0
      %2815 = vmatpush1.msra.mxu0 0.0
      %2816 = vmatprep.subr.mxu0 0.0
      %2817 = vmatpush1.msra.mxu0 0.0
      %2818 = vmatprep.subr.mxu0 0.0
      %2819 = vmatpush1.msra.mxu0 0.0
      %2820 = vmatprep.subr.mxu0 0.0
      %2821 = vmatpush1.msra.mxu0 0.0
      %2822 = vmatprep.subr.mxu0 0.0
      %2823 = vmatpush1.msra.mxu0 0.0
      %2824 = vmatprep.subr.mxu0 0.0
      %2825 = vmatpush1.msra.mxu0 %v2643
      %2826 = vmatprep.subr.mxu0 0.0
      %2827 = vmatpush2.msra.mxu0 0.0
      %2828 = vmatprep.subr.mxu0 0.0
      %2829 = vmatpush2.msra.mxu0 0.0
      %2830 = vmatprep.subr.mxu0 0.0
      %2831 = vmatpush2.msra.mxu0 0.0
      %2832 = vmatprep.subr.mxu0 0.0
      %2833 = vmatpush2.msra.mxu0 0.0
      %2834 = vmatprep.subr.mxu0 0.0
      %2835 = vmatpush2.msra.mxu0 0.0
      %2836 = vmatprep.subr.mxu0 0.0
      %2837 = vmatpush2.msra.mxu0 0.0
      %2838 = vmatprep.subr.mxu0 0.0
      %2839 = vmatpush2.msra.mxu0 0.0
      %2840 = vmatprep.subr.mxu0 0.0
      %2841 = vmatpush2.msra.mxu0 0.0
      %2842 = vmatprep.subr.mxu0 0.0
      %2843 = vmatpush2.msra.mxu0 0.0
      %2844 = vmatprep.subr.mxu0 0.0
      %2845 = vmatpush2.msra.mxu0 0.0
      %2846 = vmatprep.subr.mxu0 0.0
      %2847 = vmatpush2.msra.mxu0 0.0
      %2848 = vmatprep.subr.mxu0 0.0
      %2849 = vmatpush2.msra.mxu0 0.0
      %2850 = vmatprep.subr.mxu0 0.0
      %2851 = vmatpush2.msra.mxu0 0.0
      %2852 = vmatprep.subr.mxu0 0.0
      %2853 = vmatpush2.msra.mxu0 0.0
      %2854 = vmatprep.subr.mxu0 0.0
      %2855 = vmatpush2.msra.mxu0 0.0
      %2856 = vmatprep.subr.mxu0 0.0
      %2857 = vmatpush2.msra.mxu0 0.0
      %2858 = vmatprep.mubr.f32.mxu0 0.0
      %2859 = vmatmul.mubr.f32.gmra.mxu0 %v2792
      %v2860 = vpop.f32.mrf.mxu0
      %v2861 = vadd.f32 0.0, %v2860
      %v2862 = vpop.f32.mrf.mxu0
      %2863 = vdwg.mxu0
      %2864 = vmatprep.subr.mxu0 0.0
      %2865 = vmatpush1.xpose.msra.mxu0 0.0
      %2866 = vmatprep.subr.mxu0 0.0
      %2867 = vmatpush1.xpose.msra.mxu0 0.0
      %2868 = vmatprep.subr.mxu0 0.0
      %2869 = vmatpush1.xpose.msra.mxu0 0.0
      %2870 = vmatprep.subr.mxu0 0.0
      %2871 = vmatpush1.xpose.msra.mxu0 0.0
      %2872 = vmatprep.subr.mxu0 0.0
      %2873 = vmatpush1.xpose.msra.mxu0 0.0
      %2874 = vmatprep.subr.mxu0 0.0
      %2875 = vmatpush1.xpose.msra.mxu0 0.0
      %2876 = vmatprep.subr.mxu0 0.0
      %2877 = vmatpush1.xpose.msra.mxu0 0.0
      %2878 = vmatprep.subr.mxu0 0.0
      %2879 = vmatpush1.xpose.msra.mxu0 0.0
      %2880 = vmatprep.subr.mxu0 0.0
      %2881 = vmatpush1.xpose.msra.mxu0 0.0
      %2882 = vmatprep.subr.mxu0 0.0
      %2883 = vmatpush1.xpose.msra.mxu0 0.0
      %2884 = vmatprep.subr.mxu0 0.0
      %2885 = vmatpush1.xpose.msra.mxu0 0.0
      %2886 = vmatprep.subr.mxu0 0.0
      %2887 = vmatpush1.xpose.msra.mxu0 0.0
      %2888 = vmatprep.subr.mxu0 0.0
      %2889 = vmatpush1.xpose.msra.mxu0 0.0
      %2890 = vmatprep.subr.mxu0 0.0
      %2891 = vmatpush1.xpose.msra.mxu0 0.0
      %2892 = vmatprep.subr.mxu0 0.0
      %2893 = vmatpush1.xpose.msra.mxu0 0.0
      %2894 = vmatprep.subr.mxu0 0.0
      %2895 = vmatpush1.xpose.msra.mxu0 %v2861
      %2896 = vmatprep.subr.mxu0 0.0
      %2897 = vmatpush2.xpose.msra.mxu0 0.0
      %2898 = vmatprep.subr.mxu0 0.0
      %2899 = vmatpush2.xpose.msra.mxu0 0.0
      %2900 = vmatprep.subr.mxu0 0.0
      %2901 = vmatpush2.xpose.msra.mxu0 0.0
      %2902 = vmatprep.subr.mxu0 0.0
      %2903 = vmatpush2.xpose.msra.mxu0 0.0
      %2904 = vmatprep.subr.mxu0 0.0
      %2905 = vmatpush2.xpose.msra.mxu0 0.0
      %2906 = vmatprep.subr.mxu0 0.0
      %2907 = vmatpush2.xpose.msra.mxu0 0.0
      %2908 = vmatprep.subr.mxu0 0.0
      %2909 = vmatpush2.xpose.msra.mxu0 0.0
      %2910 = vmatprep.subr.mxu0 0.0
      %2911 = vmatpush2.xpose.msra.mxu0 0.0
      %2912 = vmatprep.subr.mxu0 0.0
      %2913 = vmatpush2.xpose.msra.mxu0 0.0
      %2914 = vmatprep.subr.mxu0 0.0
      %2915 = vmatpush2.xpose.msra.mxu0 0.0
      %2916 = vmatprep.subr.mxu0 0.0
      %2917 = vmatpush2.xpose.msra.mxu0 0.0
      %2918 = vmatprep.subr.mxu0 0.0
      %2919 = vmatpush2.xpose.msra.mxu0 0.0
      %2920 = vmatprep.subr.mxu0 0.0
      %2921 = vmatpush2.xpose.msra.mxu0 0.0
      %2922 = vmatprep.subr.mxu0 0.0
      %2923 = vmatpush2.xpose.msra.mxu0 0.0
      %2924 = vmatprep.subr.mxu0 0.0
      %2925 = vmatpush2.xpose.msra.mxu0 0.0
      %2926 = vmatprep.subr.mxu0 0.0
      %2927 = vmatpush2.xpose.msra.mxu0 0.0
      %2928 = vmatprep.mubr.f32.mxu0 0.0
      %2929 = vmatmul.mubr.f32.gmra.mxu0 %v2861
      %v2930 = vpop.f32.mrf.mxu0
      %v2931 = vadd.f32 0.0, %v2930
      %v2932 = vpop.f32.mrf.mxu0
      %2933 = vdwg.mxu0
      %v2934 = vmul.f32 %v2931, 0.375
      %v2935 = vsub.f32 %v2934, %v98
      %v2937 = vsel %vm101, %v2931, 0
      %2939 = vmatprep.subr.mxu0 0.0
      %2940 = vmatpush1.msra.mxu0 0.0
      %2941 = vmatprep.subr.mxu0 0.0
      %2942 = vmatpush1.msra.mxu0 0.0
      %2943 = vmatprep.subr.mxu0 0.0
      %2944 = vmatpush1.msra.mxu0 0.0
      %2945 = vmatprep.subr.mxu0 0.0
      %2946 = vmatpush1.msra.mxu0 0.0
      %2947 = vmatprep.subr.mxu0 0.0
      %2948 = vmatpush1.msra.mxu0 0.0
      %2949 = vmatprep.subr.mxu0 0.0
      %2950 = vmatpush1.msra.mxu0 0.0
      %2951 = vmatprep.subr.mxu0 0.0
      %2952 = vmatpush1.msra.mxu0 0.0
      %2953 = vmatprep.subr.mxu0 0.0
      %2954 = vmatpush1.msra.mxu0 0.0
      %2955 = vmatprep.subr.mxu0 0.0
      %2956 = vmatpush1.msra.mxu0 0.0
      %2957 = vmatprep.subr.mxu0 0.0
      %2958 = vmatpush1.msra.mxu0 0.0
      %2959 = vmatprep.subr.mxu0 0.0
      %2960 = vmatpush1.msra.mxu0 0.0
      %2961 = vmatprep.subr.mxu0 0.0
      %2962 = vmatpush1.msra.mxu0 0.0
      %2963 = vmatprep.subr.mxu0 0.0
      %2964 = vmatpush1.msra.mxu0 0.0
      %2965 = vmatprep.subr.mxu0 0.0
      %2966 = vmatpush1.msra.mxu0 0.0
      %2967 = vmatprep.subr.mxu0 0.0
      %2968 = vmatpush1.msra.mxu0 0.0
      %2969 = vmatprep.subr.mxu0 0.0
      %2970 = vmatpush1.msra.mxu0 %v2935
      %2971 = vmatprep.subr.mxu0 0.0
      %2972 = vmatpush2.msra.mxu0 0.0
      %2973 = vmatprep.subr.mxu0 0.0
      %2974 = vmatpush2.msra.mxu0 0.0
      %2975 = vmatprep.subr.mxu0 0.0
      %2976 = vmatpush2.msra.mxu0 0.0
      %2977 = vmatprep.subr.mxu0 0.0
      %2978 = vmatpush2.msra.mxu0 0.0
      %2979 = vmatprep.subr.mxu0 0.0
      %2980 = vmatpush2.msra.mxu0 0.0
      %2981 = vmatprep.subr.mxu0 0.0
      %2982 = vmatpush2.msra.mxu0 0.0
      %2983 = vmatprep.subr.mxu0 0.0
      %2984 = vmatpush2.msra.mxu0 0.0
      %2985 = vmatprep.subr.mxu0 0.0
      %2986 = vmatpush2.msra.mxu0 0.0
      %2987 = vmatprep.subr.mxu0 0.0
      %2988 = vmatpush2.msra.mxu0 0.0
      %2989 = vmatprep.subr.mxu0 0.0
      %2990 = vmatpush2.msra.mxu0 0.0
      %2991 = vmatprep.subr.mxu0 0.0
      %2992 = vmatpush2.msra.mxu0 0.0
      %2993 = vmatprep.subr.mxu0 0.0
      %2994 = vmatpush2.msra.mxu0 0.0
      %2995 = vmatprep.subr.mxu0 0.0
      %2996 = vmatpush2.msra.mxu0 0.0
      %2997 = vmatprep.subr.mxu0 0.0
      %2998 = vmatpush2.msra.mxu0 0.0
      %2999 = vmatprep.subr.mxu0 0.0
      %3000 = vmatpush2.msra.mxu0 0.0
      %3001 = vmatprep.subr.mxu0 0.0
      %3002 = vmatpush2.msra.mxu0 0.0
      %3003 = vmatprep.mubr.f32.mxu0 0.0
      %3004 = vmatmul.mubr.f32.gmra.mxu0 %v2937
      %v3005 = vpop.f32.mrf.mxu0
      %v3006 = vadd.f32 %v100, %v3005
      %v3007 = vpop.f32.mrf.mxu0
      %3008 = vdwg.mxu0
      %v3010 = vsel %vm101, %v3006, 0
      %3012 = vmatprep.subr.mxu0 0.0
      %3013 = vmatpush1.msra.mxu0 0.0
      %3014 = vmatprep.subr.mxu0 0.0
      %3015 = vmatpush1.msra.mxu0 0.0
      %3016 = vmatprep.subr.mxu0 0.0
      %3017 = vmatpush1.msra.mxu0 0.0
      %3018 = vmatprep.subr.mxu0 0.0
      %3019 = vmatpush1.msra.mxu0 0.0
      %3020 = vmatprep.subr.mxu0 0.0
      %3021 = vmatpush1.msra.mxu0 0.0
      %3022 = vmatprep.subr.mxu0 0.0
      %3023 = vmatpush1.msra.mxu0 0.0
      %3024 = vmatprep.subr.mxu0 0.0
      %3025 = vmatpush1.msra.mxu0 0.0
      %3026 = vmatprep.subr.mxu0 0.0
      %3027 = vmatpush1.msra.mxu0 0.0
      %3028 = vmatprep.subr.mxu0 0.0
      %3029 = vmatpush1.msra.mxu0 0.0
      %3030 = vmatprep.subr.mxu0 0.0
      %3031 = vmatpush1.msra.mxu0 0.0
      %3032 = vmatprep.subr.mxu0 0.0
      %3033 = vmatpush1.msra.mxu0 0.0
      %3034 = vmatprep.subr.mxu0 0.0
      %3035 = vmatpush1.msra.mxu0 0.0
      %3036 = vmatprep.subr.mxu0 0.0
      %3037 = vmatpush1.msra.mxu0 0.0
      %3038 = vmatprep.subr.mxu0 0.0
      %3039 = vmatpush1.msra.mxu0 0.0
      %3040 = vmatprep.subr.mxu0 0.0
      %3041 = vmatpush1.msra.mxu0 0.0
      %3042 = vmatprep.subr.mxu0 0.0
      %3043 = vmatpush1.msra.mxu0 %v2861
      %3044 = vmatprep.subr.mxu0 0.0
      %3045 = vmatpush2.msra.mxu0 0.0
      %3046 = vmatprep.subr.mxu0 0.0
      %3047 = vmatpush2.msra.mxu0 0.0
      %3048 = vmatprep.subr.mxu0 0.0
      %3049 = vmatpush2.msra.mxu0 0.0
      %3050 = vmatprep.subr.mxu0 0.0
      %3051 = vmatpush2.msra.mxu0 0.0
      %3052 = vmatprep.subr.mxu0 0.0
      %3053 = vmatpush2.msra.mxu0 0.0
      %3054 = vmatprep.subr.mxu0 0.0
      %3055 = vmatpush2.msra.mxu0 0.0
      %3056 = vmatprep.subr.mxu0 0.0
      %3057 = vmatpush2.msra.mxu0 0.0
      %3058 = vmatprep.subr.mxu0 0.0
      %3059 = vmatpush2.msra.mxu0 0.0
      %3060 = vmatprep.subr.mxu0 0.0
      %3061 = vmatpush2.msra.mxu0 0.0
      %3062 = vmatprep.subr.mxu0 0.0
      %3063 = vmatpush2.msra.mxu0 0.0
      %3064 = vmatprep.subr.mxu0 0.0
      %3065 = vmatpush2.msra.mxu0 0.0
      %3066 = vmatprep.subr.mxu0 0.0
      %3067 = vmatpush2.msra.mxu0 0.0
      %3068 = vmatprep.subr.mxu0 0.0
      %3069 = vmatpush2.msra.mxu0 0.0
      %3070 = vmatprep.subr.mxu0 0.0
      %3071 = vmatpush2.msra.mxu0 0.0
      %3072 = vmatprep.subr.mxu0 0.0
      %3073 = vmatpush2.msra.mxu0 0.0
      %3074 = vmatprep.subr.mxu0 0.0
      %3075 = vmatpush2.msra.mxu0 0.0
      %3076 = vmatprep.mubr.f32.mxu0 0.0
      %3077 = vmatmul.mubr.f32.gmra.mxu0 %v3010
      %v3078 = vpop.f32.mrf.mxu0
      %v3079 = vadd.f32 0.0, %v3078
      %v3080 = vpop.f32.mrf.mxu0
      %3081 = vdwg.mxu0
      %3082 = vmatprep.subr.mxu0 0.0
      %3083 = vmatpush1.xpose.msra.mxu0 0.0
      %3084 = vmatprep.subr.mxu0 0.0
      %3085 = vmatpush1.xpose.msra.mxu0 0.0
      %3086 = vmatprep.subr.mxu0 0.0
      %3087 = vmatpush1.xpose.msra.mxu0 0.0
      %3088 = vmatprep.subr.mxu0 0.0
      %3089 = vmatpush1.xpose.msra.mxu0 0.0
      %3090 = vmatprep.subr.mxu0 0.0
      %3091 = vmatpush1.xpose.msra.mxu0 0.0
      %3092 = vmatprep.subr.mxu0 0.0
      %3093 = vmatpush1.xpose.msra.mxu0 0.0
      %3094 = vmatprep.subr.mxu0 0.0
      %3095 = vmatpush1.xpose.msra.mxu0 0.0
      %3096 = vmatprep.subr.mxu0 0.0
      %3097 = vmatpush1.xpose.msra.mxu0 0.0
      %3098 = vmatprep.subr.mxu0 0.0
      %3099 = vmatpush1.xpose.msra.mxu0 0.0
      %3100 = vmatprep.subr.mxu0 0.0
      %3101 = vmatpush1.xpose.msra.mxu0 0.0
      %3102 = vmatprep.subr.mxu0 0.0
      %3103 = vmatpush1.xpose.msra.mxu0 0.0
      %3104 = vmatprep.subr.mxu0 0.0
      %3105 = vmatpush1.xpose.msra.mxu0 0.0
      %3106 = vmatprep.subr.mxu0 0.0
      %3107 = vmatpush1.xpose.msra.mxu0 0.0
      %3108 = vmatprep.subr.mxu0 0.0
      %3109 = vmatpush1.xpose.msra.mxu0 0.0
      %3110 = vmatprep.subr.mxu0 0.0
      %3111 = vmatpush1.xpose.msra.mxu0 0.0
      %3112 = vmatprep.subr.mxu0 0.0
      %3113 = vmatpush1.xpose.msra.mxu0 %v3079
      %3114 = vmatprep.subr.mxu0 0.0
      %3115 = vmatpush2.xpose.msra.mxu0 0.0
      %3116 = vmatprep.subr.mxu0 0.0
      %3117 = vmatpush2.xpose.msra.mxu0 0.0
      %3118 = vmatprep.subr.mxu0 0.0
      %3119 = vmatpush2.xpose.msra.mxu0 0.0
      %3120 = vmatprep.subr.mxu0 0.0
      %3121 = vmatpush2.xpose.msra.mxu0 0.0
      %3122 = vmatprep.subr.mxu0 0.0
      %3123 = vmatpush2.xpose.msra.mxu0 0.0
      %3124 = vmatprep.subr.mxu0 0.0
      %3125 = vmatpush2.xpose.msra.mxu0 0.0
      %3126 = vmatprep.subr.mxu0 0.0
      %3127 = vmatpush2.xpose.msra.mxu0 0.0
      %3128 = vmatprep.subr.mxu0 0.0
      %3129 = vmatpush2.xpose.msra.mxu0 0.0
      %3130 = vmatprep.subr.mxu0 0.0
      %3131 = vmatpush2.xpose.msra.mxu0 0.0
      %3132 = vmatprep.subr.mxu0 0.0
      %3133 = vmatpush2.xpose.msra.mxu0 0.0
      %3134 = vmatprep.subr.mxu0 0.0
      %3135 = vmatpush2.xpose.msra.mxu0 0.0
      %3136 = vmatprep.subr.mxu0 0.0
      %3137 = vmatpush2.xpose.msra.mxu0 0.0
      %3138 = vmatprep.subr.mxu0 0.0
      %3139 = vmatpush2.xpose.msra.mxu0 0.0
      %3140 = vmatprep.subr.mxu0 0.0
      %3141 = vmatpush2.xpose.msra.mxu0 0.0
      %3142 = vmatprep.subr.mxu0 0.0
      %3143 = vmatpush2.xpose.msra.mxu0 0.0
      %3144 = vmatprep.subr.mxu0 0.0
      %3145 = vmatpush2.xpose.msra.mxu0 0.0
      %3146 = vmatprep.mubr.f32.mxu0 0.0
      %3147 = vmatmul.mubr.f32.gmra.mxu0 %v3079
      %v3148 = vpop.f32.mrf.mxu0
      %v3149 = vadd.f32 0.0, %v3148
      %v3150 = vpop.f32.mrf.mxu0
      %3151 = vdwg.mxu0
      %v3152 = vmul.f32 %v3149, 0.375
      %v3153 = vsub.f32 %v3152, %v98
      %v3155 = vsel %vm101, %v3149, 0
      %3157 = vmatprep.subr.mxu0 0.0
      %3158 = vmatpush1.msra.mxu0 0.0
      %3159 = vmatprep.subr.mxu0 0.0
      %3160 = vmatpush1.msra.mxu0 0.0
      %3161 = vmatprep.subr.mxu0 0.0
      %3162 = vmatpush1.msra.mxu0 0.0
      %3163 = vmatprep.subr.mxu0 0.0
      %3164 = vmatpush1.msra.mxu0 0.0
      %3165 = vmatprep.subr.mxu0 0.0
      %3166 = vmatpush1.msra.mxu0 0.0
      %3167 = vmatprep.subr.mxu0 0.0
      %3168 = vmatpush1.msra.mxu0 0.0
      %3169 = vmatprep.subr.mxu0 0.0
      %3170 = vmatpush1.msra.mxu0 0.0
      %3171 = vmatprep.subr.mxu0 0.0
      %3172 = vmatpush1.msra.mxu0 0.0
      %3173 = vmatprep.subr.mxu0 0.0
      %3174 = vmatpush1.msra.mxu0 0.0
      %3175 = vmatprep.subr.mxu0 0.0
      %3176 = vmatpush1.msra.mxu0 0.0
      %3177 = vmatprep.subr.mxu0 0.0
      %3178 = vmatpush1.msra.mxu0 0.0
      %3179 = vmatprep.subr.mxu0 0.0
      %3180 = vmatpush1.msra.mxu0 0.0
      %3181 = vmatprep.subr.mxu0 0.0
      %3182 = vmatpush1.msra.mxu0 0.0
      %3183 = vmatprep.subr.mxu0 0.0
      %3184 = vmatpush1.msra.mxu0 0.0
      %3185 = vmatprep.subr.mxu0 0.0
      %3186 = vmatpush1.msra.mxu0 0.0
      %3187 = vmatprep.subr.mxu0 0.0
      %3188 = vmatpush1.msra.mxu0 %v3153
      %3189 = vmatprep.subr.mxu0 0.0
      %3190 = vmatpush2.msra.mxu0 0.0
      %3191 = vmatprep.subr.mxu0 0.0
      %3192 = vmatpush2.msra.mxu0 0.0
      %3193 = vmatprep.subr.mxu0 0.0
      %3194 = vmatpush2.msra.mxu0 0.0
      %3195 = vmatprep.subr.mxu0 0.0
      %3196 = vmatpush2.msra.mxu0 0.0
      %3197 = vmatprep.subr.mxu0 0.0
      %3198 = vmatpush2.msra.mxu0 0.0
      %3199 = vmatprep.subr.mxu0 0.0
      %3200 = vmatpush2.msra.mxu0 0.0
      %3201 = vmatprep.subr.mxu0 0.0
      %3202 = vmatpush2.msra.mxu0 0.0
      %3203 = vmatprep.subr.mxu0 0.0
      %3204 = vmatpush2.msra.mxu0 0.0
      %3205 = vmatprep.subr.mxu0 0.0
      %3206 = vmatpush2.msra.mxu0 0.0
      %3207 = vmatprep.subr.mxu0 0.0
      %3208 = vmatpush2.msra.mxu0 0.0
      %3209 = vmatprep.subr.mxu0 0.0
      %3210 = vmatpush2.msra.mxu0 0.0
      %3211 = vmatprep.subr.mxu0 0.0
      %3212 = vmatpush2.msra.mxu0 0.0
      %3213 = vmatprep.subr.mxu0 0.0
      %3214 = vmatpush2.msra.mxu0 0.0
      %3215 = vmatprep.subr.mxu0 0.0
      %3216 = vmatpush2.msra.mxu0 0.0
      %3217 = vmatprep.subr.mxu0 0.0
      %3218 = vmatpush2.msra.mxu0 0.0
      %3219 = vmatprep.subr.mxu0 0.0
      %3220 = vmatpush2.msra.mxu0 0.0
      %3221 = vmatprep.mubr.f32.mxu0 0.0
      %3222 = vmatmul.mubr.f32.gmra.mxu0 %v3155
      %v3223 = vpop.f32.mrf.mxu0
      %v3224 = vadd.f32 %v100, %v3223
      %v3225 = vpop.f32.mrf.mxu0
      %3226 = vdwg.mxu0
      %v3228 = vsel %vm101, %v3224, 0
      %3230 = vmatprep.subr.mxu0 0.0
      %3231 = vmatpush1.msra.mxu0 0.0
      %3232 = vmatprep.subr.mxu0 0.0
      %3233 = vmatpush1.msra.mxu0 0.0
      %3234 = vmatprep.subr.mxu0 0.0
      %3235 = vmatpush1.msra.mxu0 0.0
      %3236 = vmatprep.subr.mxu0 0.0
      %3237 = vmatpush1.msra.mxu0 0.0
      %3238 = vmatprep.subr.mxu0 0.0
      %3239 = vmatpush1.msra.mxu0 0.0
      %3240 = vmatprep.subr.mxu0 0.0
      %3241 = vmatpush1.msra.mxu0 0.0
      %3242 = vmatprep.subr.mxu0 0.0
      %3243 = vmatpush1.msra.mxu0 0.0
      %3244 = vmatprep.subr.mxu0 0.0
      %3245 = vmatpush1.msra.mxu0 0.0
      %3246 = vmatprep.subr.mxu0 0.0
      %3247 = vmatpush1.msra.mxu0 0.0
      %3248 = vmatprep.subr.mxu0 0.0
      %3249 = vmatpush1.msra.mxu0 0.0
      %3250 = vmatprep.subr.mxu0 0.0
      %3251 = vmatpush1.msra.mxu0 0.0
      %3252 = vmatprep.subr.mxu0 0.0
      %3253 = vmatpush1.msra.mxu0 0.0
      %3254 = vmatprep.subr.mxu0 0.0
      %3255 = vmatpush1.msra.mxu0 0.0
      %3256 = vmatprep.subr.mxu0 0.0
      %3257 = vmatpush1.msra.mxu0 0.0
      %3258 = vmatprep.subr.mxu0 0.0
      %3259 = vmatpush1.msra.mxu0 0.0
      %3260 = vmatprep.subr.mxu0 0.0
      %3261 = vmatpush1.msra.mxu0 %v3079
      %3262 = vmatprep.subr.mxu0 0.0
      %3263 = vmatpush2.msra.mxu0 0.0
      %3264 = vmatprep.subr.mxu0 0.0
      %3265 = vmatpush2.msra.mxu0 0.0
      %3266 = vmatprep.subr.mxu0 0.0
      %3267 = vmatpush2.msra.mxu0 0.0
      %3268 = vmatprep.subr.mxu0 0.0
      %3269 = vmatpush2.msra.mxu0 0.0
      %3270 = vmatprep.subr.mxu0 0.0
      %3271 = vmatpush2.msra.mxu0 0.0
      %3272 = vmatprep.subr.mxu0 0.0
      %3273 = vmatpush2.msra.mxu0 0.0
      %3274 = vmatprep.subr.mxu0 0.0
      %3275 = vmatpush2.msra.mxu0 0.0
      %3276 = vmatprep.subr.mxu0 0.0
      %3277 = vmatpush2.msra.mxu0 0.0
      %3278 = vmatprep.subr.mxu0 0.0
      %3279 = vmatpush2.msra.mxu0 0.0
      %3280 = vmatprep.subr.mxu0 0.0
      %3281 = vmatpush2.msra.mxu0 0.0
      %3282 = vmatprep.subr.mxu0 0.0
      %3283 = vmatpush2.msra.mxu0 0.0
      %3284 = vmatprep.subr.mxu0 0.0
      %3285 = vmatpush2.msra.mxu0 0.0
      %3286 = vmatprep.subr.mxu0 0.0
      %3287 = vmatpush2.msra.mxu0 0.0
      %3288 = vmatprep.subr.mxu0 0.0
      %3289 = vmatpush2.msra.mxu0 0.0
      %3290 = vmatprep.subr.mxu0 0.0
      %3291 = vmatpush2.msra.mxu0 0.0
      %3292 = vmatprep.subr.mxu0 0.0
      %3293 = vmatpush2.msra.mxu0 0.0
      %3294 = vmatprep.mubr.f32.mxu0 0.0
      %3295 = vmatmul.mubr.f32.gmra.mxu0 %v3228
      %v3296 = vpop.f32.mrf.mxu0
      %v3297 = vadd.f32 0.0, %v3296
      %v3298 = vpop.f32.mrf.mxu0
      %3299 = vdwg.mxu0
      %3300 = vmatprep.subr.mxu0 0.0
      %3301 = vmatpush1.xpose.msra.mxu0 0.0
      %3302 = vmatprep.subr.mxu0 0.0
      %3303 = vmatpush1.xpose.msra.mxu0 0.0
      %3304 = vmatprep.subr.mxu0 0.0
      %3305 = vmatpush1.xpose.msra.mxu0 0.0
      %3306 = vmatprep.subr.mxu0 0.0
      %3307 = vmatpush1.xpose.msra.mxu0 0.0
      %3308 = vmatprep.subr.mxu0 0.0
      %3309 = vmatpush1.xpose.msra.mxu0 0.0
      %3310 = vmatprep.subr.mxu0 0.0
      %3311 = vmatpush1.xpose.msra.mxu0 0.0
      %3312 = vmatprep.subr.mxu0 0.0
      %3313 = vmatpush1.xpose.msra.mxu0 0.0
      %3314 = vmatprep.subr.mxu0 0.0
      %3315 = vmatpush1.xpose.msra.mxu0 0.0
      %3316 = vmatprep.subr.mxu0 0.0
      %3317 = vmatpush1.xpose.msra.mxu0 0.0
      %3318 = vmatprep.subr.mxu0 0.0
      %3319 = vmatpush1.xpose.msra.mxu0 0.0
      %3320 = vmatprep.subr.mxu0 0.0
      %3321 = vmatpush1.xpose.msra.mxu0 0.0
      %3322 = vmatprep.subr.mxu0 0.0
      %3323 = vmatpush1.xpose.msra.mxu0 0.0
      %3324 = vmatprep.subr.mxu0 0.0
      %3325 = vmatpush1.xpose.msra.mxu0 0.0
      %3326 = vmatprep.subr.mxu0 0.0
      %3327 = vmatpush1.xpose.msra.mxu0 0.0
      %3328 = vmatprep.subr.mxu0 0.0
      %3329 = vmatpush1.xpose.msra.mxu0 0.0
      %3330 = vmatprep.subr.mxu0 0.0
      %3331 = vmatpush1.xpose.msra.mxu0 %v3297
      %3332 = vmatprep.subr.mxu0 0.0
      %3333 = vmatpush2.xpose.msra.mxu0 0.0
      %3334 = vmatprep.subr.mxu0 0.0
      %3335 = vmatpush2.xpose.msra.mxu0 0.0
      %3336 = vmatprep.subr.mxu0 0.0
      %3337 = vmatpush2.xpose.msra.mxu0 0.0
      %3338 = vmatprep.subr.mxu0 0.0
      %3339 = vmatpush2.xpose.msra.mxu0 0.0
      %3340 = vmatprep.subr.mxu0 0.0
      %3341 = vmatpush2.xpose.msra.mxu0 0.0
      %3342 = vmatprep.subr.mxu0 0.0
      %3343 = vmatpush2.xpose.msra.mxu0 0.0
      %3344 = vmatprep.subr.mxu0 0.0
      %3345 = vmatpush2.xpose.msra.mxu0 0.0
      %3346 = vmatprep.subr.mxu0 0.0
      %3347 = vmatpush2.xpose.msra.mxu0 0.0
      %3348 = vmatprep.subr.mxu0 0.0
      %3349 = vmatpush2.xpose.msra.mxu0 0.0
      %3350 = vmatprep.subr.mxu0 0.0
      %3351 = vmatpush2.xpose.msra.mxu0 0.0
      %3352 = vmatprep.subr.mxu0 0.0
      %3353 = vmatpush2.xpose.msra.mxu0 0.0
      %3354 = vmatprep.subr.mxu0 0.0
      %3355 = vmatpush2.xpose.msra.mxu0 0.0
      %3356 = vmatprep.subr.mxu0 0.0
      %3357 = vmatpush2.xpose.msra.mxu0 0.0
      %3358 = vmatprep.subr.mxu0 0.0
      %3359 = vmatpush2.xpose.msra.mxu0 0.0
      %3360 = vmatprep.subr.mxu0 0.0
      %3361 = vmatpush2.xpose.msra.mxu0 0.0
      %3362 = vmatprep.subr.mxu0 0.0
      %3363 = vmatpush2.xpose.msra.mxu0 0.0
      %3364 = vmatprep.mubr.f32.mxu0 0.0
      %3365 = vmatmul.mubr.f32.gmra.mxu0 %v3297
      %v3366 = vpop.f32.mrf.mxu0
      %v3367 = vadd.f32 0.0, %v3366
      %v3368 = vpop.f32.mrf.mxu0
      %3369 = vdwg.mxu0
      %v3370 = vmul.f32 %v3367, 0.375
      %v3371 = vsub.f32 %v3370, %v98
      %v3373 = vsel %vm101, %v3367, 0
      %3375 = vmatprep.subr.mxu0 0.0
      %3376 = vmatpush1.msra.mxu0 0.0
      %3377 = vmatprep.subr.mxu0 0.0
      %3378 = vmatpush1.msra.mxu0 0.0
      %3379 = vmatprep.subr.mxu0 0.0
      %3380 = vmatpush1.msra.mxu0 0.0
      %3381 = vmatprep.subr.mxu0 0.0
      %3382 = vmatpush1.msra.mxu0 0.0
      %3383 = vmatprep.subr.mxu0 0.0
      %3384 = vmatpush1.msra.mxu0 0.0
      %3385 = vmatprep.subr.mxu0 0.0
      %3386 = vmatpush1.msra.mxu0 0.0
      %3387 = vmatprep.subr.mxu0 0.0
      %3388 = vmatpush1.msra.mxu0 0.0
      %3389 = vmatprep.subr.mxu0 0.0
      %3390 = vmatpush1.msra.mxu0 0.0
      %3391 = vmatprep.subr.mxu0 0.0
      %3392 = vmatpush1.msra.mxu0 0.0
      %3393 = vmatprep.subr.mxu0 0.0
      %3394 = vmatpush1.msra.mxu0 0.0
      %3395 = vmatprep.subr.mxu0 0.0
      %3396 = vmatpush1.msra.mxu0 0.0
      %3397 = vmatprep.subr.mxu0 0.0
      %3398 = vmatpush1.msra.mxu0 0.0
      %3399 = vmatprep.subr.mxu0 0.0
      %3400 = vmatpush1.msra.mxu0 0.0
      %3401 = vmatprep.subr.mxu0 0.0
      %3402 = vmatpush1.msra.mxu0 0.0
      %3403 = vmatprep.subr.mxu0 0.0
      %3404 = vmatpush1.msra.mxu0 0.0
      %3405 = vmatprep.subr.mxu0 0.0
      %3406 = vmatpush1.msra.mxu0 %v3371
      %3407 = vmatprep.subr.mxu0 0.0
      %3408 = vmatpush2.msra.mxu0 0.0
      %3409 = vmatprep.subr.mxu0 0.0
      %3410 = vmatpush2.msra.mxu0 0.0
      %3411 = vmatprep.subr.mxu0 0.0
      %3412 = vmatpush2.msra.mxu0 0.0
      %3413 = vmatprep.subr.mxu0 0.0
      %3414 = vmatpush2.msra.mxu0 0.0
      %3415 = vmatprep.subr.mxu0 0.0
      %3416 = vmatpush2.msra.mxu0 0.0
      %3417 = vmatprep.subr.mxu0 0.0
      %3418 = vmatpush2.msra.mxu0 0.0
      %3419 = vmatprep.subr.mxu0 0.0
      %3420 = vmatpush2.msra.mxu0 0.0
      %3421 = vmatprep.subr.mxu0 0.0
      %3422 = vmatpush2.msra.mxu0 0.0
      %3423 = vmatprep.subr.mxu0 0.0
      %3424 = vmatpush2.msra.mxu0 0.0
      %3425 = vmatprep.subr.mxu0 0.0
      %3426 = vmatpush2.msra.mxu0 0.0
      %3427 = vmatprep.subr.mxu0 0.0
      %3428 = vmatpush2.msra.mxu0 0.0
      %3429 = vmatprep.subr.mxu0 0.0
      %3430 = vmatpush2.msra.mxu0 0.0
      %3431 = vmatprep.subr.mxu0 0.0
      %3432 = vmatpush2.msra.mxu0 0.0
      %3433 = vmatprep.subr.mxu0 0.0
      %3434 = vmatpush2.msra.mxu0 0.0
      %3435 = vmatprep.subr.mxu0 0.0
      %3436 = vmatpush2.msra.mxu0 0.0
      %3437 = vmatprep.subr.mxu0 0.0
      %3438 = vmatpush2.msra.mxu0 0.0
      %3439 = vmatprep.mubr.f32.mxu0 0.0
      %3440 = vmatmul.mubr.f32.gmra.mxu0 %v3373
      %v3441 = vpop.f32.mrf.mxu0
      %v3442 = vadd.f32 %v100, %v3441
      %v3443 = vpop.f32.mrf.mxu0
      %3444 = vdwg.mxu0
      %v3446 = vsel %vm101, %v3442, 0
      %3448 = vmatprep.subr.mxu0 0.0
      %3449 = vmatpush1.msra.mxu0 0.0
      %3450 = vmatprep.subr.mxu0 0.0
      %3451 = vmatpush1.msra.mxu0 0.0
      %3452 = vmatprep.subr.mxu0 0.0
      %3453 = vmatpush1.msra.mxu0 0.0
      %3454 = vmatprep.subr.mxu0 0.0
      %3455 = vmatpush1.msra.mxu0 0.0
      %3456 = vmatprep.subr.mxu0 0.0
      %3457 = vmatpush1.msra.mxu0 0.0
      %3458 = vmatprep.subr.mxu0 0.0
      %3459 = vmatpush1.msra.mxu0 0.0
      %3460 = vmatprep.subr.mxu0 0.0
      %3461 = vmatpush1.msra.mxu0 0.0
      %3462 = vmatprep.subr.mxu0 0.0
      %3463 = vmatpush1.msra.mxu0 0.0
      %3464 = vmatprep.subr.mxu0 0.0
      %3465 = vmatpush1.msra.mxu0 0.0
      %3466 = vmatprep.subr.mxu0 0.0
      %3467 = vmatpush1.msra.mxu0 0.0
      %3468 = vmatprep.subr.mxu0 0.0
      %3469 = vmatpush1.msra.mxu0 0.0
      %3470 = vmatprep.subr.mxu0 0.0
      %3471 = vmatpush1.msra.mxu0 0.0
      %3472 = vmatprep.subr.mxu0 0.0
      %3473 = vmatpush1.msra.mxu0 0.0
      %3474 = vmatprep.subr.mxu0 0.0
      %3475 = vmatpush1.msra.mxu0 0.0
      %3476 = vmatprep.subr.mxu0 0.0
      %3477 = vmatpush1.msra.mxu0 0.0
      %3478 = vmatprep.subr.mxu0 0.0
      %3479 = vmatpush1.msra.mxu0 %v3297
      %3480 = vmatprep.subr.mxu0 0.0
      %3481 = vmatpush2.msra.mxu0 0.0
      %3482 = vmatprep.subr.mxu0 0.0
      %3483 = vmatpush2.msra.mxu0 0.0
      %3484 = vmatprep.subr.mxu0 0.0
      %3485 = vmatpush2.msra.mxu0 0.0
      %3486 = vmatprep.subr.mxu0 0.0
      %3487 = vmatpush2.msra.mxu0 0.0
      %3488 = vmatprep.subr.mxu0 0.0
      %3489 = vmatpush2.msra.mxu0 0.0
      %3490 = vmatprep.subr.mxu0 0.0
      %3491 = vmatpush2.msra.mxu0 0.0
      %3492 = vmatprep.subr.mxu0 0.0
      %3493 = vmatpush2.msra.mxu0 0.0
      %3494 = vmatprep.subr.mxu0 0.0
      %3495 = vmatpush2.msra.mxu0 0.0
      %3496 = vmatprep.subr.mxu0 0.0
      %3497 = vmatpush2.msra.mxu0 0.0
      %3498 = vmatprep.subr.mxu0 0.0
      %3499 = vmatpush2.msra.mxu0 0.0
      %3500 = vmatprep.subr.mxu0 0.0
      %3501 = vmatpush2.msra.mxu0 0.0
      %3502 = vmatprep.subr.mxu0 0.0
      %3503 = vmatpush2.msra.mxu0 0.0
      %3504 = vmatprep.subr.mxu0 0.0
      %3505 = vmatpush2.msra.mxu0 0.0
      %3506 = vmatprep.subr.mxu0 0.0
      %3507 = vmatpush2.msra.mxu0 0.0
      %3508 = vmatprep.subr.mxu0 0.0
      %3509 = vmatpush2.msra.mxu0 0.0
      %3510 = vmatprep.subr.mxu0 0.0
      %3511 = vmatpush2.msra.mxu0 0.0
      %3512 = vmatprep.mubr.f32.mxu0 0.0
      %3513 = vmatmul.mubr.f32.gmra.mxu0 %v3446
      %v3514 = vpop.f32.mrf.mxu0
      %v3515 = vadd.f32 0.0, %v3514
      %v3516 = vpop.f32.mrf.mxu0
      %3517 = vdwg.mxu0
      %3518 = vmatprep.subr.mxu0 0.0
      %3519 = vmatpush1.xpose.msra.mxu0 0.0
      %3520 = vmatprep.subr.mxu0 0.0
      %3521 = vmatpush1.xpose.msra.mxu0 0.0
      %3522 = vmatprep.subr.mxu0 0.0
      %3523 = vmatpush1.xpose.msra.mxu0 0.0
      %3524 = vmatprep.subr.mxu0 0.0
      %3525 = vmatpush1.xpose.msra.mxu0 0.0
      %3526 = vmatprep.subr.mxu0 0.0
      %3527 = vmatpush1.xpose.msra.mxu0 0.0
      %3528 = vmatprep.subr.mxu0 0.0
      %3529 = vmatpush1.xpose.msra.mxu0 0.0
      %3530 = vmatprep.subr.mxu0 0.0
      %3531 = vmatpush1.xpose.msra.mxu0 0.0
      %3532 = vmatprep.subr.mxu0 0.0
      %3533 = vmatpush1.xpose.msra.mxu0 0.0
      %3534 = vmatprep.subr.mxu0 0.0
      %3535 = vmatpush1.xpose.msra.mxu0 0.0
      %3536 = vmatprep.subr.mxu0 0.0
      %3537 = vmatpush1.xpose.msra.mxu0 0.0
      %3538 = vmatprep.subr.mxu0 0.0
      %3539 = vmatpush1.xpose.msra.mxu0 0.0
      %3540 = vmatprep.subr.mxu0 0.0
      %3541 = vmatpush1.xpose.msra.mxu0 0.0
      %3542 = vmatprep.subr.mxu0 0.0
      %3543 = vmatpush1.xpose.msra.mxu0 0.0
      %3544 = vmatprep.subr.mxu0 0.0
      %3545 = vmatpush1.xpose.msra.mxu0 0.0
      %3546 = vmatprep.subr.mxu0 0.0
      %3547 = vmatpush1.xpose.msra.mxu0 0.0
      %3548 = vmatprep.subr.mxu0 0.0
      %3549 = vmatpush1.xpose.msra.mxu0 %v3515
      %3550 = vmatprep.subr.mxu0 0.0
      %3551 = vmatpush2.xpose.msra.mxu0 0.0
      %3552 = vmatprep.subr.mxu0 0.0
      %3553 = vmatpush2.xpose.msra.mxu0 0.0
      %3554 = vmatprep.subr.mxu0 0.0
      %3555 = vmatpush2.xpose.msra.mxu0 0.0
      %3556 = vmatprep.subr.mxu0 0.0
      %3557 = vmatpush2.xpose.msra.mxu0 0.0
      %3558 = vmatprep.subr.mxu0 0.0
      %3559 = vmatpush2.xpose.msra.mxu0 0.0
      %3560 = vmatprep.subr.mxu0 0.0
      %3561 = vmatpush2.xpose.msra.mxu0 0.0
      %3562 = vmatprep.subr.mxu0 0.0
      %3563 = vmatpush2.xpose.msra.mxu0 0.0
      %3564 = vmatprep.subr.mxu0 0.0
      %3565 = vmatpush2.xpose.msra.mxu0 0.0
      %3566 = vmatprep.subr.mxu0 0.0
      %3567 = vmatpush2.xpose.msra.mxu0 0.0
      %3568 = vmatprep.subr.mxu0 0.0
      %3569 = vmatpush2.xpose.msra.mxu0 0.0
      %3570 = vmatprep.subr.mxu0 0.0
      %3571 = vmatpush2.xpose.msra.mxu0 0.0
      %3572 = vmatprep.subr.mxu0 0.0
      %3573 = vmatpush2.xpose.msra.mxu0 0.0
      %3574 = vmatprep.subr.mxu0 0.0
      %3575 = vmatpush2.xpose.msra.mxu0 0.0
      %3576 = vmatprep.subr.mxu0 0.0
      %3577 = vmatpush2.xpose.msra.mxu0 0.0
      %3578 = vmatprep.subr.mxu0 0.0
      %3579 = vmatpush2.xpose.msra.mxu0 0.0
      %3580 = vmatprep.subr.mxu0 0.0
      %3581 = vmatpush2.xpose.msra.mxu0 0.0
      %3582 = vmatprep.mubr.f32.mxu0 0.0
      %3583 = vmatmul.mubr.f32.gmra.mxu0 %v3515
      %v3584 = vpop.f32.mrf.mxu0
      %v3585 = vadd.f32 0.0, %v3584
      %v3586 = vpop.f32.mrf.mxu0
      %3587 = vdwg.mxu0
      %v3588 = vmul.f32 %v3585, 0.375
      %v3589 = vsub.f32 %v3588, %v98
      %v3591 = vsel %vm101, %v3585, 0
      %3593 = vmatprep.subr.mxu0 0.0
      %3594 = vmatpush1.msra.mxu0 0.0
      %3595 = vmatprep.subr.mxu0 0.0
      %3596 = vmatpush1.msra.mxu0 0.0
      %3597 = vmatprep.subr.mxu0 0.0
      %3598 = vmatpush1.msra.mxu0 0.0
      %3599 = vmatprep.subr.mxu0 0.0
      %3600 = vmatpush1.msra.mxu0 0.0
      %3601 = vmatprep.subr.mxu0 0.0
      %3602 = vmatpush1.msra.mxu0 0.0
      %3603 = vmatprep.subr.mxu0 0.0
      %3604 = vmatpush1.msra.mxu0 0.0
      %3605 = vmatprep.subr.mxu0 0.0
      %3606 = vmatpush1.msra.mxu0 0.0
      %3607 = vmatprep.subr.mxu0 0.0
      %3608 = vmatpush1.msra.mxu0 0.0
      %3609 = vmatprep.subr.mxu0 0.0
      %3610 = vmatpush1.msra.mxu0 0.0
      %3611 = vmatprep.subr.mxu0 0.0
      %3612 = vmatpush1.msra.mxu0 0.0
      %3613 = vmatprep.subr.mxu0 0.0
      %3614 = vmatpush1.msra.mxu0 0.0
      %3615 = vmatprep.subr.mxu0 0.0
      %3616 = vmatpush1.msra.mxu0 0.0
      %3617 = vmatprep.subr.mxu0 0.0
      %3618 = vmatpush1.msra.mxu0 0.0
      %3619 = vmatprep.subr.mxu0 0.0
      %3620 = vmatpush1.msra.mxu0 0.0
      %3621 = vmatprep.subr.mxu0 0.0
      %3622 = vmatpush1.msra.mxu0 0.0
      %3623 = vmatprep.subr.mxu0 0.0
      %3624 = vmatpush1.msra.mxu0 %v3589
      %3625 = vmatprep.subr.mxu0 0.0
      %3626 = vmatpush2.msra.mxu0 0.0
      %3627 = vmatprep.subr.mxu0 0.0
      %3628 = vmatpush2.msra.mxu0 0.0
      %3629 = vmatprep.subr.mxu0 0.0
      %3630 = vmatpush2.msra.mxu0 0.0
      %3631 = vmatprep.subr.mxu0 0.0
      %3632 = vmatpush2.msra.mxu0 0.0
      %3633 = vmatprep.subr.mxu0 0.0
      %3634 = vmatpush2.msra.mxu0 0.0
      %3635 = vmatprep.subr.mxu0 0.0
      %3636 = vmatpush2.msra.mxu0 0.0
      %3637 = vmatprep.subr.mxu0 0.0
      %3638 = vmatpush2.msra.mxu0 0.0
      %3639 = vmatprep.subr.mxu0 0.0
      %3640 = vmatpush2.msra.mxu0 0.0
      %3641 = vmatprep.subr.mxu0 0.0
      %3642 = vmatpush2.msra.mxu0 0.0
      %3643 = vmatprep.subr.mxu0 0.0
      %3644 = vmatpush2.msra.mxu0 0.0
      %3645 = vmatprep.subr.mxu0 0.0
      %3646 = vmatpush2.msra.mxu0 0.0
      %3647 = vmatprep.subr.mxu0 0.0
      %3648 = vmatpush2.msra.mxu0 0.0
      %3649 = vmatprep.subr.mxu0 0.0
      %3650 = vmatpush2.msra.mxu0 0.0
      %3651 = vmatprep.subr.mxu0 0.0
      %3652 = vmatpush2.msra.mxu0 0.0
      %3653 = vmatprep.subr.mxu0 0.0
      %3654 = vmatpush2.msra.mxu0 0.0
      %3655 = vmatprep.subr.mxu0 0.0
      %3656 = vmatpush2.msra.mxu0 0.0
      %3657 = vmatprep.mubr.f32.mxu0 0.0
      %3658 = vmatmul.mubr.f32.gmra.mxu0 %v3591
      %v3659 = vpop.f32.mrf.mxu0
      %v3660 = vadd.f32 %v100, %v3659
      %v3661 = vpop.f32.mrf.mxu0
      %3662 = vdwg.mxu0
      %v3664 = vsel %vm101, %v3660, 0
      %3666 = vmatprep.subr.mxu0 0.0
      %3667 = vmatpush1.msra.mxu0 0.0
      %3668 = vmatprep.subr.mxu0 0.0
      %3669 = vmatpush1.msra.mxu0 0.0
      %3670 = vmatprep.subr.mxu0 0.0
      %3671 = vmatpush1.msra.mxu0 0.0
      %3672 = vmatprep.subr.mxu0 0.0
      %3673 = vmatpush1.msra.mxu0 0.0
      %3674 = vmatprep.subr.mxu0 0.0
      %3675 = vmatpush1.msra.mxu0 0.0
      %3676 = vmatprep.subr.mxu0 0.0
      %3677 = vmatpush1.msra.mxu0 0.0
      %3678 = vmatprep.subr.mxu0 0.0
      %3679 = vmatpush1.msra.mxu0 0.0
      %3680 = vmatprep.subr.mxu0 0.0
      %3681 = vmatpush1.msra.mxu0 0.0
      %3682 = vmatprep.subr.mxu0 0.0
      %3683 = vmatpush1.msra.mxu0 0.0
      %3684 = vmatprep.subr.mxu0 0.0
      %3685 = vmatpush1.msra.mxu0 0.0
      %3686 = vmatprep.subr.mxu0 0.0
      %3687 = vmatpush1.msra.mxu0 0.0
      %3688 = vmatprep.subr.mxu0 0.0
      %3689 = vmatpush1.msra.mxu0 0.0
      %3690 = vmatprep.subr.mxu0 0.0
      %3691 = vmatpush1.msra.mxu0 0.0
      %3692 = vmatprep.subr.mxu0 0.0
      %3693 = vmatpush1.msra.mxu0 0.0
      %3694 = vmatprep.subr.mxu0 0.0
      %3695 = vmatpush1.msra.mxu0 0.0
      %3696 = vmatprep.subr.mxu0 0.0
      %3697 = vmatpush1.msra.mxu0 %v3515
      %3698 = vmatprep.subr.mxu0 0.0
      %3699 = vmatpush2.msra.mxu0 0.0
      %3700 = vmatprep.subr.mxu0 0.0
      %3701 = vmatpush2.msra.mxu0 0.0
      %3702 = vmatprep.subr.mxu0 0.0
      %3703 = vmatpush2.msra.mxu0 0.0
      %3704 = vmatprep.subr.mxu0 0.0
      %3705 = vmatpush2.msra.mxu0 0.0
      %3706 = vmatprep.subr.mxu0 0.0
      %3707 = vmatpush2.msra.mxu0 0.0
      %3708 = vmatprep.subr.mxu0 0.0
      %3709 = vmatpush2.msra.mxu0 0.0
      %3710 = vmatprep.subr.mxu0 0.0
      %3711 = vmatpush2.msra.mxu0 0.0
      %3712 = vmatprep.subr.mxu0 0.0
      %3713 = vmatpush2.msra.mxu0 0.0
      %3714 = vmatprep.subr.mxu0 0.0
      %3715 = vmatpush2.msra.mxu0 0.0
      %3716 = vmatprep.subr.mxu0 0.0
      %3717 = vmatpush2.msra.mxu0 0.0
      %3718 = vmatprep.subr.mxu0 0.0
      %3719 = vmatpush2.msra.mxu0 0.0
      %3720 = vmatprep.subr.mxu0 0.0
      %3721 = vmatpush2.msra.mxu0 0.0
      %3722 = vmatprep.subr.mxu0 0.0
      %3723 = vmatpush2.msra.mxu0 0.0
      %3724 = vmatprep.subr.mxu0 0.0
      %3725 = vmatpush2.msra.mxu0 0.0
      %3726 = vmatprep.subr.mxu0 0.0
      %3727 = vmatpush2.msra.mxu0 0.0
      %3728 = vmatprep.subr.mxu0 0.0
      %3729 = vmatpush2.msra.mxu0 0.0
      %3730 = vmatprep.mubr.f32.mxu0 0.0
      %3731 = vmatmul.mubr.f32.gmra.mxu0 %v3664
      %v3732 = vpop.f32.mrf.mxu0
      %v3733 = vadd.f32 0.0, %v3732
      %v3734 = vpop.f32.mrf.mxu0
      %3735 = vdwg.mxu0
      %3736 = vmatprep.subr.mxu0 0.0
      %3737 = vmatpush1.xpose.msra.mxu0 0.0
      %3738 = vmatprep.subr.mxu0 0.0
      %3739 = vmatpush1.xpose.msra.mxu0 0.0
      %3740 = vmatprep.subr.mxu0 0.0
      %3741 = vmatpush1.xpose.msra.mxu0 0.0
      %3742 = vmatprep.subr.mxu0 0.0
      %3743 = vmatpush1.xpose.msra.mxu0 0.0
      %3744 = vmatprep.subr.mxu0 0.0
      %3745 = vmatpush1.xpose.msra.mxu0 0.0
      %3746 = vmatprep.subr.mxu0 0.0
      %3747 = vmatpush1.xpose.msra.mxu0 0.0
      %3748 = vmatprep.subr.mxu0 0.0
      %3749 = vmatpush1.xpose.msra.mxu0 0.0
      %3750 = vmatprep.subr.mxu0 0.0
      %3751 = vmatpush1.xpose.msra.mxu0 0.0
      %3752 = vmatprep.subr.mxu0 0.0
      %3753 = vmatpush1.xpose.msra.mxu0 0.0
      %3754 = vmatprep.subr.mxu0 0.0
      %3755 = vmatpush1.xpose.msra.mxu0 0.0
      %3756 = vmatprep.subr.mxu0 0.0
      %3757 = vmatpush1.xpose.msra.mxu0 0.0
      %3758 = vmatprep.subr.mxu0 0.0
      %3759 = vmatpush1.xpose.msra.mxu0 0.0
      %3760 = vmatprep.subr.mxu0 0.0
      %3761 = vmatpush1.xpose.msra.mxu0 0.0
      %3762 = vmatprep.subr.mxu0 0.0
      %3763 = vmatpush1.xpose.msra.mxu0 0.0
      %3764 = vmatprep.subr.mxu0 0.0
      %3765 = vmatpush1.xpose.msra.mxu0 0.0
      %3766 = vmatprep.subr.mxu0 0.0
      %3767 = vmatpush1.xpose.msra.mxu0 %v3733
      %3768 = vmatprep.subr.mxu0 0.0
      %3769 = vmatpush2.xpose.msra.mxu0 0.0
      %3770 = vmatprep.subr.mxu0 0.0
      %3771 = vmatpush2.xpose.msra.mxu0 0.0
      %3772 = vmatprep.subr.mxu0 0.0
      %3773 = vmatpush2.xpose.msra.mxu0 0.0
      %3774 = vmatprep.subr.mxu0 0.0
      %3775 = vmatpush2.xpose.msra.mxu0 0.0
      %3776 = vmatprep.subr.mxu0 0.0
      %3777 = vmatpush2.xpose.msra.mxu0 0.0
      %3778 = vmatprep.subr.mxu0 0.0
      %3779 = vmatpush2.xpose.msra.mxu0 0.0
      %3780 = vmatprep.subr.mxu0 0.0
      %3781 = vmatpush2.xpose.msra.mxu0 0.0
      %3782 = vmatprep.subr.mxu0 0.0
      %3783 = vmatpush2.xpose.msra.mxu0 0.0
      %3784 = vmatprep.subr.mxu0 0.0
      %3785 = vmatpush2.xpose.msra.mxu0 0.0
      %3786 = vmatprep.subr.mxu0 0.0
      %3787 = vmatpush2.xpose.msra.mxu0 0.0
      %3788 = vmatprep.subr.mxu0 0.0
      %3789 = vmatpush2.xpose.msra.mxu0 0.0
      %3790 = vmatprep.subr.mxu0 0.0
      %3791 = vmatpush2.xpose.msra.mxu0 0.0
      %3792 = vmatprep.subr.mxu0 0.0
      %3793 = vmatpush2.xpose.msra.mxu0 0.0
      %3794 = vmatprep.subr.mxu0 0.0
      %3795 = vmatpush2.xpose.msra.mxu0 0.0
      %3796 = vmatprep.subr.mxu0 0.0
      %3797 = vmatpush2.xpose.msra.mxu0 0.0
      %3798 = vmatprep.subr.mxu0 0.0
      %3799 = vmatpush2.xpose.msra.mxu0 0.0
      %3800 = vmatprep.mubr.f32.mxu0 0.0
      %3801 = vmatmul.mubr.f32.gmra.mxu0 %v3733
      %v3802 = vpop.f32.mrf.mxu0
      %v3803 = vadd.f32 0.0, %v3802
      %v3804 = vpop.f32.mrf.mxu0
      %3805 = vdwg.mxu0
      %v3806 = vmul.f32 %v3803, 0.375
      %v3807 = vsub.f32 %v3806, %v98
      %v3809 = vsel %vm101, %v3803, 0
      %3811 = vmatprep.subr.mxu0 0.0
      %3812 = vmatpush1.msra.mxu0 0.0
      %3813 = vmatprep.subr.mxu0 0.0
      %3814 = vmatpush1.msra.mxu0 0.0
      %3815 = vmatprep.subr.mxu0 0.0
      %3816 = vmatpush1.msra.mxu0 0.0
      %3817 = vmatprep.subr.mxu0 0.0
      %3818 = vmatpush1.msra.mxu0 0.0
      %3819 = vmatprep.subr.mxu0 0.0
      %3820 = vmatpush1.msra.mxu0 0.0
      %3821 = vmatprep.subr.mxu0 0.0
      %3822 = vmatpush1.msra.mxu0 0.0
      %3823 = vmatprep.subr.mxu0 0.0
      %3824 = vmatpush1.msra.mxu0 0.0
      %3825 = vmatprep.subr.mxu0 0.0
      %3826 = vmatpush1.msra.mxu0 0.0
      %3827 = vmatprep.subr.mxu0 0.0
      %3828 = vmatpush1.msra.mxu0 0.0
      %3829 = vmatprep.subr.mxu0 0.0
      %3830 = vmatpush1.msra.mxu0 0.0
      %3831 = vmatprep.subr.mxu0 0.0
      %3832 = vmatpush1.msra.mxu0 0.0
      %3833 = vmatprep.subr.mxu0 0.0
      %3834 = vmatpush1.msra.mxu0 0.0
      %3835 = vmatprep.subr.mxu0 0.0
      %3836 = vmatpush1.msra.mxu0 0.0
      %3837 = vmatprep.subr.mxu0 0.0
      %3838 = vmatpush1.msra.mxu0 0.0
      %3839 = vmatprep.subr.mxu0 0.0
      %3840 = vmatpush1.msra.mxu0 0.0
      %3841 = vmatprep.subr.mxu0 0.0
      %3842 = vmatpush1.msra.mxu0 %v3807
      %3843 = vmatprep.subr.mxu0 0.0
      %3844 = vmatpush2.msra.mxu0 0.0
      %3845 = vmatprep.subr.mxu0 0.0
      %3846 = vmatpush2.msra.mxu0 0.0
      %3847 = vmatprep.subr.mxu0 0.0
      %3848 = vmatpush2.msra.mxu0 0.0
      %3849 = vmatprep.subr.mxu0 0.0
      %3850 = vmatpush2.msra.mxu0 0.0
      %3851 = vmatprep.subr.mxu0 0.0
      %3852 = vmatpush2.msra.mxu0 0.0
      %3853 = vmatprep.subr.mxu0 0.0
      %3854 = vmatpush2.msra.mxu0 0.0
      %3855 = vmatprep.subr.mxu0 0.0
      %3856 = vmatpush2.msra.mxu0 0.0
      %3857 = vmatprep.subr.mxu0 0.0
      %3858 = vmatpush2.msra.mxu0 0.0
      %3859 = vmatprep.subr.mxu0 0.0
      %3860 = vmatpush2.msra.mxu0 0.0
      %3861 = vmatprep.subr.mxu0 0.0
      %3862 = vmatpush2.msra.mxu0 0.0
      %3863 = vmatprep.subr.mxu0 0.0
      %3864 = vmatpush2.msra.mxu0 0.0
      %3865 = vmatprep.subr.mxu0 0.0
      %3866 = vmatpush2.msra.mxu0 0.0
      %3867 = vmatprep.subr.mxu0 0.0
      %3868 = vmatpush2.msra.mxu0 0.0
      %3869 = vmatprep.subr.mxu0 0.0
      %3870 = vmatpush2.msra.mxu0 0.0
      %3871 = vmatprep.subr.mxu0 0.0
      %3872 = vmatpush2.msra.mxu0 0.0
      %3873 = vmatprep.subr.mxu0 0.0
      %3874 = vmatpush2.msra.mxu0 0.0
      %3875 = vmatprep.mubr.f32.mxu0 0.0
      %3876 = vmatmul.mubr.f32.gmra.mxu0 %v3809
      %v3877 = vpop.f32.mrf.mxu0
      %v3878 = vadd.f32 %v100, %v3877
      %v3879 = vpop.f32.mrf.mxu0
      %3880 = vdwg.mxu0
      %v3882 = vsel %vm101, %v3878, 0
      %3884 = vmatprep.subr.mxu0 0.0
      %3885 = vmatpush1.msra.mxu0 0.0
      %3886 = vmatprep.subr.mxu0 0.0
      %3887 = vmatpush1.msra.mxu0 0.0
      %3888 = vmatprep.subr.mxu0 0.0
      %3889 = vmatpush1.msra.mxu0 0.0
      %3890 = vmatprep.subr.mxu0 0.0
      %3891 = vmatpush1.msra.mxu0 0.0
      %3892 = vmatprep.subr.mxu0 0.0
      %3893 = vmatpush1.msra.mxu0 0.0
      %3894 = vmatprep.subr.mxu0 0.0
      %3895 = vmatpush1.msra.mxu0 0.0
      %3896 = vmatprep.subr.mxu0 0.0
      %3897 = vmatpush1.msra.mxu0 0.0
      %3898 = vmatprep.subr.mxu0 0.0
      %3899 = vmatpush1.msra.mxu0 0.0
      %3900 = vmatprep.subr.mxu0 0.0
      %3901 = vmatpush1.msra.mxu0 0.0
      %3902 = vmatprep.subr.mxu0 0.0
      %3903 = vmatpush1.msra.mxu0 0.0
      %3904 = vmatprep.subr.mxu0 0.0
      %3905 = vmatpush1.msra.mxu0 0.0
      %3906 = vmatprep.subr.mxu0 0.0
      %3907 = vmatpush1.msra.mxu0 0.0
      %3908 = vmatprep.subr.mxu0 0.0
      %3909 = vmatpush1.msra.mxu0 0.0
      %3910 = vmatprep.subr.mxu0 0.0
      %3911 = vmatpush1.msra.mxu0 0.0
      %3912 = vmatprep.subr.mxu0 0.0
      %3913 = vmatpush1.msra.mxu0 0.0
      %3914 = vmatprep.subr.mxu0 0.0
      %3915 = vmatpush1.msra.mxu0 %v3733
      %3916 = vmatprep.subr.mxu0 0.0
      %3917 = vmatpush2.msra.mxu0 0.0
      %3918 = vmatprep.subr.mxu0 0.0
      %3919 = vmatpush2.msra.mxu0 0.0
      %3920 = vmatprep.subr.mxu0 0.0
      %3921 = vmatpush2.msra.mxu0 0.0
      %3922 = vmatprep.subr.mxu0 0.0
      %3923 = vmatpush2.msra.mxu0 0.0
      %3924 = vmatprep.subr.mxu0 0.0
      %3925 = vmatpush2.msra.mxu0 0.0
      %3926 = vmatprep.subr.mxu0 0.0
      %3927 = vmatpush2.msra.mxu0 0.0
      %3928 = vmatprep.subr.mxu0 0.0
      %3929 = vmatpush2.msra.mxu0 0.0
      %3930 = vmatprep.subr.mxu0 0.0
      %3931 = vmatpush2.msra.mxu0 0.0
      %3932 = vmatprep.subr.mxu0 0.0
      %3933 = vmatpush2.msra.mxu0 0.0
      %3934 = vmatprep.subr.mxu0 0.0
      %3935 = vmatpush2.msra.mxu0 0.0
      %3936 = vmatprep.subr.mxu0 0.0
      %3937 = vmatpush2.msra.mxu0 0.0
      %3938 = vmatprep.subr.mxu0 0.0
      %3939 = vmatpush2.msra.mxu0 0.0
      %3940 = vmatprep.subr.mxu0 0.0
      %3941 = vmatpush2.msra.mxu0 0.0
      %3942 = vmatprep.subr.mxu0 0.0
      %3943 = vmatpush2.msra.mxu0 0.0
      %3944 = vmatprep.subr.mxu0 0.0
      %3945 = vmatpush2.msra.mxu0 0.0
      %3946 = vmatprep.subr.mxu0 0.0
      %3947 = vmatpush2.msra.mxu0 0.0
      %3948 = vmatprep.mubr.f32.mxu0 0.0
      %3949 = vmatmul.mubr.f32.gmra.mxu0 %v3882
      %v3950 = vpop.f32.mrf.mxu0
      %v3951 = vadd.f32 0.0, %v3950
      %v3952 = vpop.f32.mrf.mxu0
      %3953 = vdwg.mxu0
      %3954 = vmatprep.subr.mxu0 0.0
      %3955 = vmatpush1.xpose.msra.mxu0 0.0
      %3956 = vmatprep.subr.mxu0 0.0
      %3957 = vmatpush1.xpose.msra.mxu0 0.0
      %3958 = vmatprep.subr.mxu0 0.0
      %3959 = vmatpush1.xpose.msra.mxu0 0.0
      %3960 = vmatprep.subr.mxu0 0.0
      %3961 = vmatpush1.xpose.msra.mxu0 0.0
      %3962 = vmatprep.subr.mxu0 0.0
      %3963 = vmatpush1.xpose.msra.mxu0 0.0
      %3964 = vmatprep.subr.mxu0 0.0
      %3965 = vmatpush1.xpose.msra.mxu0 0.0
      %3966 = vmatprep.subr.mxu0 0.0
      %3967 = vmatpush1.xpose.msra.mxu0 0.0
      %3968 = vmatprep.subr.mxu0 0.0
      %3969 = vmatpush1.xpose.msra.mxu0 0.0
      %3970 = vmatprep.subr.mxu0 0.0
      %3971 = vmatpush1.xpose.msra.mxu0 0.0
      %3972 = vmatprep.subr.mxu0 0.0
      %3973 = vmatpush1.xpose.msra.mxu0 0.0
      %3974 = vmatprep.subr.mxu0 0.0
      %3975 = vmatpush1.xpose.msra.mxu0 0.0
      %3976 = vmatprep.subr.mxu0 0.0
      %3977 = vmatpush1.xpose.msra.mxu0 0.0
      %3978 = vmatprep.subr.mxu0 0.0
      %3979 = vmatpush1.xpose.msra.mxu0 0.0
      %3980 = vmatprep.subr.mxu0 0.0
      %3981 = vmatpush1.xpose.msra.mxu0 0.0
      %3982 = vmatprep.subr.mxu0 0.0
      %3983 = vmatpush1.xpose.msra.mxu0 0.0
      %3984 = vmatprep.subr.mxu0 0.0
      %3985 = vmatpush1.xpose.msra.mxu0 %v3951
      %3986 = vmatprep.subr.mxu0 0.0
      %3987 = vmatpush2.xpose.msra.mxu0 0.0
      %3988 = vmatprep.subr.mxu0 0.0
      %3989 = vmatpush2.xpose.msra.mxu0 0.0
      %3990 = vmatprep.subr.mxu0 0.0
      %3991 = vmatpush2.xpose.msra.mxu0 0.0
      %3992 = vmatprep.subr.mxu0 0.0
      %3993 = vmatpush2.xpose.msra.mxu0 0.0
      %3994 = vmatprep.subr.mxu0 0.0
      %3995 = vmatpush2.xpose.msra.mxu0 0.0
      %3996 = vmatprep.subr.mxu0 0.0
      %3997 = vmatpush2.xpose.msra.mxu0 0.0
      %3998 = vmatprep.subr.mxu0 0.0
      %3999 = vmatpush2.xpose.msra.mxu0 0.0
      %4000 = vmatprep.subr.mxu0 0.0
      %4001 = vmatpush2.xpose.msra.mxu0 0.0
      %4002 = vmatprep.subr.mxu0 0.0
      %4003 = vmatpush2.xpose.msra.mxu0 0.0
      %4004 = vmatprep.subr.mxu0 0.0
      %4005 = vmatpush2.xpose.msra.mxu0 0.0
      %4006 = vmatprep.subr.mxu0 0.0
      %4007 = vmatpush2.xpose.msra.mxu0 0.0
      %4008 = vmatprep.subr.mxu0 0.0
      %4009 = vmatpush2.xpose.msra.mxu0 0.0
      %4010 = vmatprep.subr.mxu0 0.0
      %4011 = vmatpush2.xpose.msra.mxu0 0.0
      %4012 = vmatprep.subr.mxu0 0.0
      %4013 = vmatpush2.xpose.msra.mxu0 0.0
      %4014 = vmatprep.subr.mxu0 0.0
      %4015 = vmatpush2.xpose.msra.mxu0 0.0
      %4016 = vmatprep.subr.mxu0 0.0
      %4017 = vmatpush2.xpose.msra.mxu0 0.0
      %4018 = vmatprep.mubr.f32.mxu0 0.0
      %4019 = vmatmul.mubr.f32.gmra.mxu0 %v3951
      %v4020 = vpop.f32.mrf.mxu0
      %v4021 = vadd.f32 0.0, %v4020
      %v4022 = vpop.f32.mrf.mxu0
      %4023 = vdwg.mxu0
      %v4024 = vmul.f32 %v4021, 0.375
      %v4025 = vsub.f32 %v4024, %v98
      %v4027 = vsel %vm101, %v4021, 0
      %4029 = vmatprep.subr.mxu0 0.0
      %4030 = vmatpush1.msra.mxu0 0.0
      %4031 = vmatprep.subr.mxu0 0.0
      %4032 = vmatpush1.msra.mxu0 0.0
      %4033 = vmatprep.subr.mxu0 0.0
      %4034 = vmatpush1.msra.mxu0 0.0
      %4035 = vmatprep.subr.mxu0 0.0
      %4036 = vmatpush1.msra.mxu0 0.0
      %4037 = vmatprep.subr.mxu0 0.0
      %4038 = vmatpush1.msra.mxu0 0.0
      %4039 = vmatprep.subr.mxu0 0.0
      %4040 = vmatpush1.msra.mxu0 0.0
      %4041 = vmatprep.subr.mxu0 0.0
      %4042 = vmatpush1.msra.mxu0 0.0
      %4043 = vmatprep.subr.mxu0 0.0
      %4044 = vmatpush1.msra.mxu0 0.0
      %4045 = vmatprep.subr.mxu0 0.0
      %4046 = vmatpush1.msra.mxu0 0.0
      %4047 = vmatprep.subr.mxu0 0.0
      %4048 = vmatpush1.msra.mxu0 0.0
      %4049 = vmatprep.subr.mxu0 0.0
      %4050 = vmatpush1.msra.mxu0 0.0
      %4051 = vmatprep.subr.mxu0 0.0
      %4052 = vmatpush1.msra.mxu0 0.0
      %4053 = vmatprep.subr.mxu0 0.0
      %4054 = vmatpush1.msra.mxu0 0.0
      %4055 = vmatprep.subr.mxu0 0.0
      %4056 = vmatpush1.msra.mxu0 0.0
      %4057 = vmatprep.subr.mxu0 0.0
      %4058 = vmatpush1.msra.mxu0 0.0
      %4059 = vmatprep.subr.mxu0 0.0
      %4060 = vmatpush1.msra.mxu0 %v4025
      %4061 = vmatprep.subr.mxu0 0.0
      %4062 = vmatpush2.msra.mxu0 0.0
      %4063 = vmatprep.subr.mxu0 0.0
      %4064 = vmatpush2.msra.mxu0 0.0
      %4065 = vmatprep.subr.mxu0 0.0
      %4066 = vmatpush2.msra.mxu0 0.0
      %4067 = vmatprep.subr.mxu0 0.0
      %4068 = vmatpush2.msra.mxu0 0.0
      %4069 = vmatprep.subr.mxu0 0.0
      %4070 = vmatpush2.msra.mxu0 0.0
      %4071 = vmatprep.subr.mxu0 0.0
      %4072 = vmatpush2.msra.mxu0 0.0
      %4073 = vmatprep.subr.mxu0 0.0
      %4074 = vmatpush2.msra.mxu0 0.0
      %4075 = vmatprep.subr.mxu0 0.0
      %4076 = vmatpush2.msra.mxu0 0.0
      %4077 = vmatprep.subr.mxu0 0.0
      %4078 = vmatpush2.msra.mxu0 0.0
      %4079 = vmatprep.subr.mxu0 0.0
      %4080 = vmatpush2.msra.mxu0 0.0
      %4081 = vmatprep.subr.mxu0 0.0
      %4082 = vmatpush2.msra.mxu0 0.0
      %4083 = vmatprep.subr.mxu0 0.0
      %4084 = vmatpush2.msra.mxu0 0.0
      %4085 = vmatprep.subr.mxu0 0.0
      %4086 = vmatpush2.msra.mxu0 0.0
      %4087 = vmatprep.subr.mxu0 0.0
      %4088 = vmatpush2.msra.mxu0 0.0
      %4089 = vmatprep.subr.mxu0 0.0
      %4090 = vmatpush2.msra.mxu0 0.0
      %4091 = vmatprep.subr.mxu0 0.0
      %4092 = vmatpush2.msra.mxu0 0.0
      %4093 = vmatprep.mubr.f32.mxu0 0.0
      %4094 = vmatmul.mubr.f32.gmra.mxu0 %v4027
      %v4095 = vpop.f32.mrf.mxu0
      %v4096 = vadd.f32 %v100, %v4095
      %v4097 = vpop.f32.mrf.mxu0
      %4098 = vdwg.mxu0
      %v4100 = vsel %vm101, %v4096, 0
      %4102 = vmatprep.subr.mxu0 0.0
      %4103 = vmatpush1.msra.mxu0 0.0
      %4104 = vmatprep.subr.mxu0 0.0
      %4105 = vmatpush1.msra.mxu0 0.0
      %4106 = vmatprep.subr.mxu0 0.0
      %4107 = vmatpush1.msra.mxu0 0.0
      %4108 = vmatprep.subr.mxu0 0.0
      %4109 = vmatpush1.msra.mxu0 0.0
      %4110 = vmatprep.subr.mxu0 0.0
      %4111 = vmatpush1.msra.mxu0 0.0
      %4112 = vmatprep.subr.mxu0 0.0
      %4113 = vmatpush1.msra.mxu0 0.0
      %4114 = vmatprep.subr.mxu0 0.0
      %4115 = vmatpush1.msra.mxu0 0.0
      %4116 = vmatprep.subr.mxu0 0.0
      %4117 = vmatpush1.msra.mxu0 0.0
      %4118 = vmatprep.subr.mxu0 0.0
      %4119 = vmatpush1.msra.mxu0 0.0
      %4120 = vmatprep.subr.mxu0 0.0
      %4121 = vmatpush1.msra.mxu0 0.0
      %4122 = vmatprep.subr.mxu0 0.0
      %4123 = vmatpush1.msra.mxu0 0.0
      %4124 = vmatprep.subr.mxu0 0.0
      %4125 = vmatpush1.msra.mxu0 0.0
      %4126 = vmatprep.subr.mxu0 0.0
      %4127 = vmatpush1.msra.mxu0 0.0
      %4128 = vmatprep.subr.mxu0 0.0
      %4129 = vmatpush1.msra.mxu0 0.0
      %4130 = vmatprep.subr.mxu0 0.0
      %4131 = vmatpush1.msra.mxu0 0.0
      %4132 = vmatprep.subr.mxu0 0.0
      %4133 = vmatpush1.msra.mxu0 %v3951
      %4134 = vmatprep.subr.mxu0 0.0
      %4135 = vmatpush2.msra.mxu0 0.0
      %4136 = vmatprep.subr.mxu0 0.0
      %4137 = vmatpush2.msra.mxu0 0.0
      %4138 = vmatprep.subr.mxu0 0.0
      %4139 = vmatpush2.msra.mxu0 0.0
      %4140 = vmatprep.subr.mxu0 0.0
      %4141 = vmatpush2.msra.mxu0 0.0
      %4142 = vmatprep.subr.mxu0 0.0
      %4143 = vmatpush2.msra.mxu0 0.0
      %4144 = vmatprep.subr.mxu0 0.0
      %4145 = vmatpush2.msra.mxu0 0.0
      %4146 = vmatprep.subr.mxu0 0.0
      %4147 = vmatpush2.msra.mxu0 0.0
      %4148 = vmatprep.subr.mxu0 0.0
      %4149 = vmatpush2.msra.mxu0 0.0
      %4150 = vmatprep.subr.mxu0 0.0
      %4151 = vmatpush2.msra.mxu0 0.0
      %4152 = vmatprep.subr.mxu0 0.0
      %4153 = vmatpush2.msra.mxu0 0.0
      %4154 = vmatprep.subr.mxu0 0.0
      %4155 = vmatpush2.msra.mxu0 0.0
      %4156 = vmatprep.subr.mxu0 0.0
      %4157 = vmatpush2.msra.mxu0 0.0
      %4158 = vmatprep.subr.mxu0 0.0
      %4159 = vmatpush2.msra.mxu0 0.0
      %4160 = vmatprep.subr.mxu0 0.0
      %4161 = vmatpush2.msra.mxu0 0.0
      %4162 = vmatprep.subr.mxu0 0.0
      %4163 = vmatpush2.msra.mxu0 0.0
      %4164 = vmatprep.subr.mxu0 0.0
      %4165 = vmatpush2.msra.mxu0 0.0
      %4166 = vmatprep.mubr.f32.mxu0 0.0
      %4167 = vmatmul.mubr.f32.gmra.mxu0 %v4100
      %v4168 = vpop.f32.mrf.mxu0
      %v4169 = vadd.f32 0.0, %v4168
      %v4170 = vpop.f32.mrf.mxu0
      %4171 = vdwg.mxu0
      %4172 = vmatprep.subr.mxu0 0.0
      %4173 = vmatpush1.xpose.msra.mxu0 0.0
      %4174 = vmatprep.subr.mxu0 0.0
      %4175 = vmatpush1.xpose.msra.mxu0 0.0
      %4176 = vmatprep.subr.mxu0 0.0
      %4177 = vmatpush1.xpose.msra.mxu0 0.0
      %4178 = vmatprep.subr.mxu0 0.0
      %4179 = vmatpush1.xpose.msra.mxu0 0.0
      %4180 = vmatprep.subr.mxu0 0.0
      %4181 = vmatpush1.xpose.msra.mxu0 0.0
      %4182 = vmatprep.subr.mxu0 0.0
      %4183 = vmatpush1.xpose.msra.mxu0 0.0
      %4184 = vmatprep.subr.mxu0 0.0
      %4185 = vmatpush1.xpose.msra.mxu0 0.0
      %4186 = vmatprep.subr.mxu0 0.0
      %4187 = vmatpush1.xpose.msra.mxu0 0.0
      %4188 = vmatprep.subr.mxu0 0.0
      %4189 = vmatpush1.xpose.msra.mxu0 0.0
      %4190 = vmatprep.subr.mxu0 0.0
      %4191 = vmatpush1.xpose.msra.mxu0 0.0
      %4192 = vmatprep.subr.mxu0 0.0
      %4193 = vmatpush1.xpose.msra.mxu0 0.0
      %4194 = vmatprep.subr.mxu0 0.0
      %4195 = vmatpush1.xpose.msra.mxu0 0.0
      %4196 = vmatprep.subr.mxu0 0.0
      %4197 = vmatpush1.xpose.msra.mxu0 0.0
      %4198 = vmatprep.subr.mxu0 0.0
      %4199 = vmatpush1.xpose.msra.mxu0 0.0
      %4200 = vmatprep.subr.mxu0 0.0
      %4201 = vmatpush1.xpose.msra.mxu0 0.0
      %4202 = vmatprep.subr.mxu0 0.0
      %4203 = vmatpush1.xpose.msra.mxu0 %v4169
      %4204 = vmatprep.subr.mxu0 0.0
      %4205 = vmatpush2.xpose.msra.mxu0 0.0
      %4206 = vmatprep.subr.mxu0 0.0
      %4207 = vmatpush2.xpose.msra.mxu0 0.0
      %4208 = vmatprep.subr.mxu0 0.0
      %4209 = vmatpush2.xpose.msra.mxu0 0.0
      %4210 = vmatprep.subr.mxu0 0.0
      %4211 = vmatpush2.xpose.msra.mxu0 0.0
      %4212 = vmatprep.subr.mxu0 0.0
      %4213 = vmatpush2.xpose.msra.mxu0 0.0
      %4214 = vmatprep.subr.mxu0 0.0
      %4215 = vmatpush2.xpose.msra.mxu0 0.0
      %4216 = vmatprep.subr.mxu0 0.0
      %4217 = vmatpush2.xpose.msra.mxu0 0.0
      %4218 = vmatprep.subr.mxu0 0.0
      %4219 = vmatpush2.xpose.msra.mxu0 0.0
      %4220 = vmatprep.subr.mxu0 0.0
      %4221 = vmatpush2.xpose.msra.mxu0 0.0
      %4222 = vmatprep.subr.mxu0 0.0
      %4223 = vmatpush2.xpose.msra.mxu0 0.0
      %4224 = vmatprep.subr.mxu0 0.0
      %4225 = vmatpush2.xpose.msra.mxu0 0.0
      %4226 = vmatprep.subr.mxu0 0.0
      %4227 = vmatpush2.xpose.msra.mxu0 0.0
      %4228 = vmatprep.subr.mxu0 0.0
      %4229 = vmatpush2.xpose.msra.mxu0 0.0
      %4230 = vmatprep.subr.mxu0 0.0
      %4231 = vmatpush2.xpose.msra.mxu0 0.0
      %4232 = vmatprep.subr.mxu0 0.0
      %4233 = vmatpush2.xpose.msra.mxu0 0.0
      %4234 = vmatprep.subr.mxu0 0.0
      %4235 = vmatpush2.xpose.msra.mxu0 0.0
      %4236 = vmatprep.mubr.f32.mxu0 0.0
      %4237 = vmatmul.mubr.f32.gmra.mxu0 %v4169
      %v4238 = vpop.f32.mrf.mxu0
      %v4239 = vadd.f32 0.0, %v4238
      %v4240 = vpop.f32.mrf.mxu0
      %4241 = vdwg.mxu0
      %v4242 = vmul.f32 %v4239, 0.375
      %v4243 = vsub.f32 %v4242, %v98
      %v4245 = vsel %vm101, %v4239, 0
      %4247 = vmatprep.subr.mxu0 0.0
      %4248 = vmatpush1.msra.mxu0 0.0
      %4249 = vmatprep.subr.mxu0 0.0
      %4250 = vmatpush1.msra.mxu0 0.0
      %4251 = vmatprep.subr.mxu0 0.0
      %4252 = vmatpush1.msra.mxu0 0.0
      %4253 = vmatprep.subr.mxu0 0.0
      %4254 = vmatpush1.msra.mxu0 0.0
      %4255 = vmatprep.subr.mxu0 0.0
      %4256 = vmatpush1.msra.mxu0 0.0
      %4257 = vmatprep.subr.mxu0 0.0
      %4258 = vmatpush1.msra.mxu0 0.0
      %4259 = vmatprep.subr.mxu0 0.0
      %4260 = vmatpush1.msra.mxu0 0.0
      %4261 = vmatprep.subr.mxu0 0.0
      %4262 = vmatpush1.msra.mxu0 0.0
      %4263 = vmatprep.subr.mxu0 0.0
      %4264 = vmatpush1.msra.mxu0 0.0
      %4265 = vmatprep.subr.mxu0 0.0
      %4266 = vmatpush1.msra.mxu0 0.0
      %4267 = vmatprep.subr.mxu0 0.0
      %4268 = vmatpush1.msra.mxu0 0.0
      %4269 = vmatprep.subr.mxu0 0.0
      %4270 = vmatpush1.msra.mxu0 0.0
      %4271 = vmatprep.subr.mxu0 0.0
      %4272 = vmatpush1.msra.mxu0 0.0
      %4273 = vmatprep.subr.mxu0 0.0
      %4274 = vmatpush1.msra.mxu0 0.0
      %4275 = vmatprep.subr.mxu0 0.0
      %4276 = vmatpush1.msra.mxu0 0.0
      %4277 = vmatprep.subr.mxu0 0.0
      %4278 = vmatpush1.msra.mxu0 %v4243
      %4279 = vmatprep.subr.mxu0 0.0
      %4280 = vmatpush2.msra.mxu0 0.0
      %4281 = vmatprep.subr.mxu0 0.0
      %4282 = vmatpush2.msra.mxu0 0.0
      %4283 = vmatprep.subr.mxu0 0.0
      %4284 = vmatpush2.msra.mxu0 0.0
      %4285 = vmatprep.subr.mxu0 0.0
      %4286 = vmatpush2.msra.mxu0 0.0
      %4287 = vmatprep.subr.mxu0 0.0
      %4288 = vmatpush2.msra.mxu0 0.0
      %4289 = vmatprep.subr.mxu0 0.0
      %4290 = vmatpush2.msra.mxu0 0.0
      %4291 = vmatprep.subr.mxu0 0.0
      %4292 = vmatpush2.msra.mxu0 0.0
      %4293 = vmatprep.subr.mxu0 0.0
      %4294 = vmatpush2.msra.mxu0 0.0
      %4295 = vmatprep.subr.mxu0 0.0
      %4296 = vmatpush2.msra.mxu0 0.0
      %4297 = vmatprep.subr.mxu0 0.0
      %4298 = vmatpush2.msra.mxu0 0.0
      %4299 = vmatprep.subr.mxu0 0.0
      %4300 = vmatpush2.msra.mxu0 0.0
      %4301 = vmatprep.subr.mxu0 0.0
      %4302 = vmatpush2.msra.mxu0 0.0
      %4303 = vmatprep.subr.mxu0 0.0
      %4304 = vmatpush2.msra.mxu0 0.0
      %4305 = vmatprep.subr.mxu0 0.0
      %4306 = vmatpush2.msra.mxu0 0.0
      %4307 = vmatprep.subr.mxu0 0.0
      %4308 = vmatpush2.msra.mxu0 0.0
      %4309 = vmatprep.subr.mxu0 0.0
      %4310 = vmatpush2.msra.mxu0 0.0
      %4311 = vmatprep.mubr.f32.mxu0 0.0
      %4312 = vmatmul.mubr.f32.gmra.mxu0 %v4245
      %v4313 = vpop.f32.mrf.mxu0
      %v4314 = vadd.f32 %v100, %v4313
      %v4315 = vpop.f32.mrf.mxu0
      %4316 = vdwg.mxu0
      %v4318 = vsel %vm101, %v4314, 0
      %4320 = vmatprep.subr.mxu0 0.0
      %4321 = vmatpush1.msra.mxu0 0.0
      %4322 = vmatprep.subr.mxu0 0.0
      %4323 = vmatpush1.msra.mxu0 0.0
      %4324 = vmatprep.subr.mxu0 0.0
      %4325 = vmatpush1.msra.mxu0 0.0
      %4326 = vmatprep.subr.mxu0 0.0
      %4327 = vmatpush1.msra.mxu0 0.0
      %4328 = vmatprep.subr.mxu0 0.0
      %4329 = vmatpush1.msra.mxu0 0.0
      %4330 = vmatprep.subr.mxu0 0.0
      %4331 = vmatpush1.msra.mxu0 0.0
      %4332 = vmatprep.subr.mxu0 0.0
      %4333 = vmatpush1.msra.mxu0 0.0
      %4334 = vmatprep.subr.mxu0 0.0
      %4335 = vmatpush1.msra.mxu0 0.0
      %4336 = vmatprep.subr.mxu0 0.0
      %4337 = vmatpush1.msra.mxu0 0.0
      %4338 = vmatprep.subr.mxu0 0.0
      %4339 = vmatpush1.msra.mxu0 0.0
      %4340 = vmatprep.subr.mxu0 0.0
      %4341 = vmatpush1.msra.mxu0 0.0
      %4342 = vmatprep.subr.mxu0 0.0
      %4343 = vmatpush1.msra.mxu0 0.0
      %4344 = vmatprep.subr.mxu0 0.0
      %4345 = vmatpush1.msra.mxu0 0.0
      %4346 = vmatprep.subr.mxu0 0.0
      %4347 = vmatpush1.msra.mxu0 0.0
      %4348 = vmatprep.subr.mxu0 0.0
      %4349 = vmatpush1.msra.mxu0 0.0
      %4350 = vmatprep.subr.mxu0 0.0
      %4351 = vmatpush1.msra.mxu0 %v4169
      %4352 = vmatprep.subr.mxu0 0.0
      %4353 = vmatpush2.msra.mxu0 0.0
      %4354 = vmatprep.subr.mxu0 0.0
      %4355 = vmatpush2.msra.mxu0 0.0
      %4356 = vmatprep.subr.mxu0 0.0
      %4357 = vmatpush2.msra.mxu0 0.0
      %4358 = vmatprep.subr.mxu0 0.0
      %4359 = vmatpush2.msra.mxu0 0.0
      %4360 = vmatprep.subr.mxu0 0.0
      %4361 = vmatpush2.msra.mxu0 0.0
      %4362 = vmatprep.subr.mxu0 0.0
      %4363 = vmatpush2.msra.mxu0 0.0
      %4364 = vmatprep.subr.mxu0 0.0
      %4365 = vmatpush2.msra.mxu0 0.0
      %4366 = vmatprep.subr.mxu0 0.0
      %4367 = vmatpush2.msra.mxu0 0.0
      %4368 = vmatprep.subr.mxu0 0.0
      %4369 = vmatpush2.msra.mxu0 0.0
      %4370 = vmatprep.subr.mxu0 0.0
      %4371 = vmatpush2.msra.mxu0 0.0
      %4372 = vmatprep.subr.mxu0 0.0
      %4373 = vmatpush2.msra.mxu0 0.0
      %4374 = vmatprep.subr.mxu0 0.0
      %4375 = vmatpush2.msra.mxu0 0.0
      %4376 = vmatprep.subr.mxu0 0.0
      %4377 = vmatpush2.msra.mxu0 0.0
      %4378 = vmatprep.subr.mxu0 0.0
      %4379 = vmatpush2.msra.mxu0 0.0
      %4380 = vmatprep.subr.mxu0 0.0
      %4381 = vmatpush2.msra.mxu0 0.0
      %4382 = vmatprep.subr.mxu0 0.0
      %4383 = vmatpush2.msra.mxu0 0.0
      %4384 = vmatprep.mubr.f32.mxu0 0.0
      %4385 = vmatmul.mubr.f32.gmra.mxu0 %v4318
      %v4386 = vpop.f32.mrf.mxu0
      %v4387 = vadd.f32 0.0, %v4386
      %v4388 = vpop.f32.mrf.mxu0
      %4389 = vdwg.mxu0
      %4390 = vmatprep.subr.mxu0 0.0
      %4391 = vmatpush1.xpose.msra.mxu0 0.0
      %4392 = vmatprep.subr.mxu0 0.0
      %4393 = vmatpush1.xpose.msra.mxu0 0.0
      %4394 = vmatprep.subr.mxu0 0.0
      %4395 = vmatpush1.xpose.msra.mxu0 0.0
      %4396 = vmatprep.subr.mxu0 0.0
      %4397 = vmatpush1.xpose.msra.mxu0 0.0
      %4398 = vmatprep.subr.mxu0 0.0
      %4399 = vmatpush1.xpose.msra.mxu0 0.0
      %4400 = vmatprep.subr.mxu0 0.0
      %4401 = vmatpush1.xpose.msra.mxu0 0.0
      %4402 = vmatprep.subr.mxu0 0.0
      %4403 = vmatpush1.xpose.msra.mxu0 0.0
      %4404 = vmatprep.subr.mxu0 0.0
      %4405 = vmatpush1.xpose.msra.mxu0 0.0
      %4406 = vmatprep.subr.mxu0 0.0
      %4407 = vmatpush1.xpose.msra.mxu0 0.0
      %4408 = vmatprep.subr.mxu0 0.0
      %4409 = vmatpush1.xpose.msra.mxu0 0.0
      %4410 = vmatprep.subr.mxu0 0.0
      %4411 = vmatpush1.xpose.msra.mxu0 0.0
      %4412 = vmatprep.subr.mxu0 0.0
      %4413 = vmatpush1.xpose.msra.mxu0 0.0
      %4414 = vmatprep.subr.mxu0 0.0
      %4415 = vmatpush1.xpose.msra.mxu0 0.0
      %4416 = vmatprep.subr.mxu0 0.0
      %4417 = vmatpush1.xpose.msra.mxu0 0.0
      %4418 = vmatprep.subr.mxu0 0.0
      %4419 = vmatpush1.xpose.msra.mxu0 0.0
      %4420 = vmatprep.subr.mxu0 0.0
      %4421 = vmatpush1.xpose.msra.mxu0 %v4387
      %4422 = vmatprep.subr.mxu0 0.0
      %4423 = vmatpush2.xpose.msra.mxu0 0.0
      %4424 = vmatprep.subr.mxu0 0.0
      %4425 = vmatpush2.xpose.msra.mxu0 0.0
      %4426 = vmatprep.subr.mxu0 0.0
      %4427 = vmatpush2.xpose.msra.mxu0 0.0
      %4428 = vmatprep.subr.mxu0 0.0
      %4429 = vmatpush2.xpose.msra.mxu0 0.0
      %4430 = vmatprep.subr.mxu0 0.0
      %4431 = vmatpush2.xpose.msra.mxu0 0.0
      %4432 = vmatprep.subr.mxu0 0.0
      %4433 = vmatpush2.xpose.msra.mxu0 0.0
      %4434 = vmatprep.subr.mxu0 0.0
      %4435 = vmatpush2.xpose.msra.mxu0 0.0
      %4436 = vmatprep.subr.mxu0 0.0
      %4437 = vmatpush2.xpose.msra.mxu0 0.0
      %4438 = vmatprep.subr.mxu0 0.0
      %4439 = vmatpush2.xpose.msra.mxu0 0.0
      %4440 = vmatprep.subr.mxu0 0.0
      %4441 = vmatpush2.xpose.msra.mxu0 0.0
      %4442 = vmatprep.subr.mxu0 0.0
      %4443 = vmatpush2.xpose.msra.mxu0 0.0
      %4444 = vmatprep.subr.mxu0 0.0
      %4445 = vmatpush2.xpose.msra.mxu0 0.0
      %4446 = vmatprep.subr.mxu0 0.0
      %4447 = vmatpush2.xpose.msra.mxu0 0.0
      %4448 = vmatprep.subr.mxu0 0.0
      %4449 = vmatpush2.xpose.msra.mxu0 0.0
      %4450 = vmatprep.subr.mxu0 0.0
      %4451 = vmatpush2.xpose.msra.mxu0 0.0
      %4452 = vmatprep.subr.mxu0 0.0
      %4453 = vmatpush2.xpose.msra.mxu0 0.0
      %4454 = vmatprep.mubr.f32.mxu0 0.0
      %4455 = vmatmul.mubr.f32.gmra.mxu0 %v4387
      %v4456 = vpop.f32.mrf.mxu0
      %v4457 = vadd.f32 0.0, %v4456
      %v4458 = vpop.f32.mrf.mxu0
      %4459 = vdwg.mxu0
      %v4460 = vmul.f32 %v4457, 0.375
      %v4461 = vsub.f32 %v4460, %v98
      %v4463 = vsel %vm101, %v4457, 0
      %4465 = vmatprep.subr.mxu0 0.0
      %4466 = vmatpush1.msra.mxu0 0.0
      %4467 = vmatprep.subr.mxu0 0.0
      %4468 = vmatpush1.msra.mxu0 0.0
      %4469 = vmatprep.subr.mxu0 0.0
      %4470 = vmatpush1.msra.mxu0 0.0
      %4471 = vmatprep.subr.mxu0 0.0
      %4472 = vmatpush1.msra.mxu0 0.0
      %4473 = vmatprep.subr.mxu0 0.0
      %4474 = vmatpush1.msra.mxu0 0.0
      %4475 = vmatprep.subr.mxu0 0.0
      %4476 = vmatpush1.msra.mxu0 0.0
      %4477 = vmatprep.subr.mxu0 0.0
      %4478 = vmatpush1.msra.mxu0 0.0
      %4479 = vmatprep.subr.mxu0 0.0
      %4480 = vmatpush1.msra.mxu0 0.0
      %4481 = vmatprep.subr.mxu0 0.0
      %4482 = vmatpush1.msra.mxu0 0.0
      %4483 = vmatprep.subr.mxu0 0.0
      %4484 = vmatpush1.msra.mxu0 0.0
      %4485 = vmatprep.subr.mxu0 0.0
      %4486 = vmatpush1.msra.mxu0 0.0
      %4487 = vmatprep.subr.mxu0 0.0
      %4488 = vmatpush1.msra.mxu0 0.0
      %4489 = vmatprep.subr.mxu0 0.0
      %4490 = vmatpush1.msra.mxu0 0.0
      %4491 = vmatprep.subr.mxu0 0.0
      %4492 = vmatpush1.msra.mxu0 0.0
      %4493 = vmatprep.subr.mxu0 0.0
      %4494 = vmatpush1.msra.mxu0 0.0
      %4495 = vmatprep.subr.mxu0 0.0
      %4496 = vmatpush1.msra.mxu0 %v4461
      %4497 = vmatprep.subr.mxu0 0.0
      %4498 = vmatpush2.msra.mxu0 0.0
      %4499 = vmatprep.subr.mxu0 0.0
      %4500 = vmatpush2.msra.mxu0 0.0
      %4501 = vmatprep.subr.mxu0 0.0
      %4502 = vmatpush2.msra.mxu0 0.0
      %4503 = vmatprep.subr.mxu0 0.0
      %4504 = vmatpush2.msra.mxu0 0.0
      %4505 = vmatprep.subr.mxu0 0.0
      %4506 = vmatpush2.msra.mxu0 0.0
      %4507 = vmatprep.subr.mxu0 0.0
      %4508 = vmatpush2.msra.mxu0 0.0
      %4509 = vmatprep.subr.mxu0 0.0
      %4510 = vmatpush2.msra.mxu0 0.0
      %4511 = vmatprep.subr.mxu0 0.0
      %4512 = vmatpush2.msra.mxu0 0.0
      %4513 = vmatprep.subr.mxu0 0.0
      %4514 = vmatpush2.msra.mxu0 0.0
      %4515 = vmatprep.subr.mxu0 0.0
      %4516 = vmatpush2.msra.mxu0 0.0
      %4517 = vmatprep.subr.mxu0 0.0
      %4518 = vmatpush2.msra.mxu0 0.0
      %4519 = vmatprep.subr.mxu0 0.0
      %4520 = vmatpush2.msra.mxu0 0.0
      %4521 = vmatprep.subr.mxu0 0.0
      %4522 = vmatpush2.msra.mxu0 0.0
      %4523 = vmatprep.subr.mxu0 0.0
      %4524 = vmatpush2.msra.mxu0 0.0
      %4525 = vmatprep.subr.mxu0 0.0
      %4526 = vmatpush2.msra.mxu0 0.0
      %4527 = vmatprep.subr.mxu0 0.0
      %4528 = vmatpush2.msra.mxu0 0.0
      %4529 = vmatprep.mubr.f32.mxu0 0.0
      %4530 = vmatmul.mubr.f32.gmra.mxu0 %v4463
      %v4531 = vpop.f32.mrf.mxu0
      %v4532 = vadd.f32 %v100, %v4531
      %v4533 = vpop.f32.mrf.mxu0
      %4534 = vdwg.mxu0
      %v4536 = vsel %vm101, %v4532, 0
      %4538 = vmatprep.subr.mxu0 0.0
      %4539 = vmatpush1.msra.mxu0 0.0
      %4540 = vmatprep.subr.mxu0 0.0
      %4541 = vmatpush1.msra.mxu0 0.0
      %4542 = vmatprep.subr.mxu0 0.0
      %4543 = vmatpush1.msra.mxu0 0.0
      %4544 = vmatprep.subr.mxu0 0.0
      %4545 = vmatpush1.msra.mxu0 0.0
      %4546 = vmatprep.subr.mxu0 0.0
      %4547 = vmatpush1.msra.mxu0 0.0
      %4548 = vmatprep.subr.mxu0 0.0
      %4549 = vmatpush1.msra.mxu0 0.0
      %4550 = vmatprep.subr.mxu0 0.0
      %4551 = vmatpush1.msra.mxu0 0.0
      %4552 = vmatprep.subr.mxu0 0.0
      %4553 = vmatpush1.msra.mxu0 0.0
      %4554 = vmatprep.subr.mxu0 0.0
      %4555 = vmatpush1.msra.mxu0 0.0
      %4556 = vmatprep.subr.mxu0 0.0
      %4557 = vmatpush1.msra.mxu0 0.0
      %4558 = vmatprep.subr.mxu0 0.0
      %4559 = vmatpush1.msra.mxu0 0.0
      %4560 = vmatprep.subr.mxu0 0.0
      %4561 = vmatpush1.msra.mxu0 0.0
      %4562 = vmatprep.subr.mxu0 0.0
      %4563 = vmatpush1.msra.mxu0 0.0
      %4564 = vmatprep.subr.mxu0 0.0
      %4565 = vmatpush1.msra.mxu0 0.0
      %4566 = vmatprep.subr.mxu0 0.0
      %4567 = vmatpush1.msra.mxu0 0.0
      %4568 = vmatprep.subr.mxu0 0.0
      %4569 = vmatpush1.msra.mxu0 %v4387
      %4570 = vmatprep.subr.mxu0 0.0
      %4571 = vmatpush2.msra.mxu0 0.0
      %4572 = vmatprep.subr.mxu0 0.0
      %4573 = vmatpush2.msra.mxu0 0.0
      %4574 = vmatprep.subr.mxu0 0.0
      %4575 = vmatpush2.msra.mxu0 0.0
      %4576 = vmatprep.subr.mxu0 0.0
      %4577 = vmatpush2.msra.mxu0 0.0
      %4578 = vmatprep.subr.mxu0 0.0
      %4579 = vmatpush2.msra.mxu0 0.0
      %4580 = vmatprep.subr.mxu0 0.0
      %4581 = vmatpush2.msra.mxu0 0.0
      %4582 = vmatprep.subr.mxu0 0.0
      %4583 = vmatpush2.msra.mxu0 0.0
      %4584 = vmatprep.subr.mxu0 0.0
      %4585 = vmatpush2.msra.mxu0 0.0
      %4586 = vmatprep.subr.mxu0 0.0
      %4587 = vmatpush2.msra.mxu0 0.0
      %4588 = vmatprep.subr.mxu0 0.0
      %4589 = vmatpush2.msra.mxu0 0.0
      %4590 = vmatprep.subr.mxu0 0.0
      %4591 = vmatpush2.msra.mxu0 0.0
      %4592 = vmatprep.subr.mxu0 0.0
      %4593 = vmatpush2.msra.mxu0 0.0
      %4594 = vmatprep.subr.mxu0 0.0
      %4595 = vmatpush2.msra.mxu0 0.0
      %4596 = vmatprep.subr.mxu0 0.0
      %4597 = vmatpush2.msra.mxu0 0.0
      %4598 = vmatprep.subr.mxu0 0.0
      %4599 = vmatpush2.msra.mxu0 0.0
      %4600 = vmatprep.subr.mxu0 0.0
      %4601 = vmatpush2.msra.mxu0 0.0
      %4602 = vmatprep.mubr.f32.mxu0 0.0
      %4603 = vmatmul.mubr.f32.gmra.mxu0 %v4536
      %v4604 = vpop.f32.mrf.mxu0
      %v4605 = vadd.f32 0.0, %v4604
      %v4606 = vpop.f32.mrf.mxu0
      %4607 = vdwg.mxu0
      %4608 = vmatprep.subr.mxu0 0.0
      %4609 = vmatpush1.xpose.msra.mxu0 0.0
      %4610 = vmatprep.subr.mxu0 0.0
      %4611 = vmatpush1.xpose.msra.mxu0 0.0
      %4612 = vmatprep.subr.mxu0 0.0
      %4613 = vmatpush1.xpose.msra.mxu0 0.0
      %4614 = vmatprep.subr.mxu0 0.0
      %4615 = vmatpush1.xpose.msra.mxu0 0.0
      %4616 = vmatprep.subr.mxu0 0.0
      %4617 = vmatpush1.xpose.msra.mxu0 0.0
      %4618 = vmatprep.subr.mxu0 0.0
      %4619 = vmatpush1.xpose.msra.mxu0 0.0
      %4620 = vmatprep.subr.mxu0 0.0
      %4621 = vmatpush1.xpose.msra.mxu0 0.0
      %4622 = vmatprep.subr.mxu0 0.0
      %4623 = vmatpush1.xpose.msra.mxu0 0.0
      %4624 = vmatprep.subr.mxu0 0.0
      %4625 = vmatpush1.xpose.msra.mxu0 0.0
      %4626 = vmatprep.subr.mxu0 0.0
      %4627 = vmatpush1.xpose.msra.mxu0 0.0
      %4628 = vmatprep.subr.mxu0 0.0
      %4629 = vmatpush1.xpose.msra.mxu0 0.0
      %4630 = vmatprep.subr.mxu0 0.0
      %4631 = vmatpush1.xpose.msra.mxu0 0.0
      %4632 = vmatprep.subr.mxu0 0.0
      %4633 = vmatpush1.xpose.msra.mxu0 0.0
      %4634 = vmatprep.subr.mxu0 0.0
      %4635 = vmatpush1.xpose.msra.mxu0 0.0
      %4636 = vmatprep.subr.mxu0 0.0
      %4637 = vmatpush1.xpose.msra.mxu0 0.0
      %4638 = vmatprep.subr.mxu0 0.0
      %4639 = vmatpush1.xpose.msra.mxu0 %v4605
      %4640 = vmatprep.subr.mxu0 0.0
      %4641 = vmatpush2.xpose.msra.mxu0 0.0
      %4642 = vmatprep.subr.mxu0 0.0
      %4643 = vmatpush2.xpose.msra.mxu0 0.0
      %4644 = vmatprep.subr.mxu0 0.0
      %4645 = vmatpush2.xpose.msra.mxu0 0.0
      %4646 = vmatprep.subr.mxu0 0.0
      %4647 = vmatpush2.xpose.msra.mxu0 0.0
      %4648 = vmatprep.subr.mxu0 0.0
      %4649 = vmatpush2.xpose.msra.mxu0 0.0
      %4650 = vmatprep.subr.mxu0 0.0
      %4651 = vmatpush2.xpose.msra.mxu0 0.0
      %4652 = vmatprep.subr.mxu0 0.0
      %4653 = vmatpush2.xpose.msra.mxu0 0.0
      %4654 = vmatprep.subr.mxu0 0.0
      %4655 = vmatpush2.xpose.msra.mxu0 0.0
      %4656 = vmatprep.subr.mxu0 0.0
      %4657 = vmatpush2.xpose.msra.mxu0 0.0
      %4658 = vmatprep.subr.mxu0 0.0
      %4659 = vmatpush2.xpose.msra.mxu0 0.0
      %4660 = vmatprep.subr.mxu0 0.0
      %4661 = vmatpush2.xpose.msra.mxu0 0.0
      %4662 = vmatprep.subr.mxu0 0.0
      %4663 = vmatpush2.xpose.msra.mxu0 0.0
      %4664 = vmatprep.subr.mxu0 0.0
      %4665 = vmatpush2.xpose.msra.mxu0 0.0
      %4666 = vmatprep.subr.mxu0 0.0
      %4667 = vmatpush2.xpose.msra.mxu0 0.0
      %4668 = vmatprep.subr.mxu0 0.0
      %4669 = vmatpush2.xpose.msra.mxu0 0.0
      %4670 = vmatprep.subr.mxu0 0.0
      %4671 = vmatpush2.xpose.msra.mxu0 0.0
      %4672 = vmatprep.mubr.f32.mxu0 0.0
      %4673 = vmatmul.mubr.f32.gmra.mxu0 %v4605
      %v4674 = vpop.f32.mrf.mxu0
      %v4675 = vadd.f32 0.0, %v4674
      %v4676 = vpop.f32.mrf.mxu0
      %4677 = vdwg.mxu0
      %v4678 = vmul.f32 %v4675, 0.375
      %v4679 = vsub.f32 %v4678, %v98
      %v4681 = vsel %vm101, %v4675, 0
      %4683 = vmatprep.subr.mxu0 0.0
      %4684 = vmatpush1.msra.mxu0 0.0
      %4685 = vmatprep.subr.mxu0 0.0
      %4686 = vmatpush1.msra.mxu0 0.0
      %4687 = vmatprep.subr.mxu0 0.0
      %4688 = vmatpush1.msra.mxu0 0.0
      %4689 = vmatprep.subr.mxu0 0.0
      %4690 = vmatpush1.msra.mxu0 0.0
      %4691 = vmatprep.subr.mxu0 0.0
      %4692 = vmatpush1.msra.mxu0 0.0
      %4693 = vmatprep.subr.mxu0 0.0
      %4694 = vmatpush1.msra.mxu0 0.0
      %4695 = vmatprep.subr.mxu0 0.0
      %4696 = vmatpush1.msra.mxu0 0.0
      %4697 = vmatprep.subr.mxu0 0.0
      %4698 = vmatpush1.msra.mxu0 0.0
      %4699 = vmatprep.subr.mxu0 0.0
      %4700 = vmatpush1.msra.mxu0 0.0
      %4701 = vmatprep.subr.mxu0 0.0
      %4702 = vmatpush1.msra.mxu0 0.0
      %4703 = vmatprep.subr.mxu0 0.0
      %4704 = vmatpush1.msra.mxu0 0.0
      %4705 = vmatprep.subr.mxu0 0.0
      %4706 = vmatpush1.msra.mxu0 0.0
      %4707 = vmatprep.subr.mxu0 0.0
      %4708 = vmatpush1.msra.mxu0 0.0
      %4709 = vmatprep.subr.mxu0 0.0
      %4710 = vmatpush1.msra.mxu0 0.0
      %4711 = vmatprep.subr.mxu0 0.0
      %4712 = vmatpush1.msra.mxu0 0.0
      %4713 = vmatprep.subr.mxu0 0.0
      %4714 = vmatpush1.msra.mxu0 %v4679
      %4715 = vmatprep.subr.mxu0 0.0
      %4716 = vmatpush2.msra.mxu0 0.0
      %4717 = vmatprep.subr.mxu0 0.0
      %4718 = vmatpush2.msra.mxu0 0.0
      %4719 = vmatprep.subr.mxu0 0.0
      %4720 = vmatpush2.msra.mxu0 0.0
      %4721 = vmatprep.subr.mxu0 0.0
      %4722 = vmatpush2.msra.mxu0 0.0
      %4723 = vmatprep.subr.mxu0 0.0
      %4724 = vmatpush2.msra.mxu0 0.0
      %4725 = vmatprep.subr.mxu0 0.0
      %4726 = vmatpush2.msra.mxu0 0.0
      %4727 = vmatprep.subr.mxu0 0.0
      %4728 = vmatpush2.msra.mxu0 0.0
      %4729 = vmatprep.subr.mxu0 0.0
      %4730 = vmatpush2.msra.mxu0 0.0
      %4731 = vmatprep.subr.mxu0 0.0
      %4732 = vmatpush2.msra.mxu0 0.0
      %4733 = vmatprep.subr.mxu0 0.0
      %4734 = vmatpush2.msra.mxu0 0.0
      %4735 = vmatprep.subr.mxu0 0.0
      %4736 = vmatpush2.msra.mxu0 0.0
      %4737 = vmatprep.subr.mxu0 0.0
      %4738 = vmatpush2.msra.mxu0 0.0
      %4739 = vmatprep.subr.mxu0 0.0
      %4740 = vmatpush2.msra.mxu0 0.0
      %4741 = vmatprep.subr.mxu0 0.0
      %4742 = vmatpush2.msra.mxu0 0.0
      %4743 = vmatprep.subr.mxu0 0.0
      %4744 = vmatpush2.msra.mxu0 0.0
      %4745 = vmatprep.subr.mxu0 0.0
      %4746 = vmatpush2.msra.mxu0 0.0
      %4747 = vmatprep.mubr.f32.mxu0 0.0
      %4748 = vmatmul.mubr.f32.gmra.mxu0 %v4681
      %v4749 = vpop.f32.mrf.mxu0
      %v4750 = vadd.f32 %v100, %v4749
      %v4751 = vpop.f32.mrf.mxu0
      %4752 = vdwg.mxu0
      %v4754 = vsel %vm101, %v4750, 0
      %4756 = vmatprep.subr.mxu0 0.0
      %4757 = vmatpush1.msra.mxu0 0.0
      %4758 = vmatprep.subr.mxu0 0.0
      %4759 = vmatpush1.msra.mxu0 0.0
      %4760 = vmatprep.subr.mxu0 0.0
      %4761 = vmatpush1.msra.mxu0 0.0
      %4762 = vmatprep.subr.mxu0 0.0
      %4763 = vmatpush1.msra.mxu0 0.0
      %4764 = vmatprep.subr.mxu0 0.0
      %4765 = vmatpush1.msra.mxu0 0.0
      %4766 = vmatprep.subr.mxu0 0.0
      %4767 = vmatpush1.msra.mxu0 0.0
      %4768 = vmatprep.subr.mxu0 0.0
      %4769 = vmatpush1.msra.mxu0 0.0
      %4770 = vmatprep.subr.mxu0 0.0
      %4771 = vmatpush1.msra.mxu0 0.0
      %4772 = vmatprep.subr.mxu0 0.0
      %4773 = vmatpush1.msra.mxu0 0.0
      %4774 = vmatprep.subr.mxu0 0.0
      %4775 = vmatpush1.msra.mxu0 0.0
      %4776 = vmatprep.subr.mxu0 0.0
      %4777 = vmatpush1.msra.mxu0 0.0
      %4778 = vmatprep.subr.mxu0 0.0
      %4779 = vmatpush1.msra.mxu0 0.0
      %4780 = vmatprep.subr.mxu0 0.0
      %4781 = vmatpush1.msra.mxu0 0.0
      %4782 = vmatprep.subr.mxu0 0.0
      %4783 = vmatpush1.msra.mxu0 0.0
      %4784 = vmatprep.subr.mxu0 0.0
      %4785 = vmatpush1.msra.mxu0 0.0
      %4786 = vmatprep.subr.mxu0 0.0
      %4787 = vmatpush1.msra.mxu0 %v4605
      %4788 = vmatprep.subr.mxu0 0.0
      %4789 = vmatpush2.msra.mxu0 0.0
      %4790 = vmatprep.subr.mxu0 0.0
      %4791 = vmatpush2.msra.mxu0 0.0
      %4792 = vmatprep.subr.mxu0 0.0
      %4793 = vmatpush2.msra.mxu0 0.0
      %4794 = vmatprep.subr.mxu0 0.0
      %4795 = vmatpush2.msra.mxu0 0.0
      %4796 = vmatprep.subr.mxu0 0.0
      %4797 = vmatpush2.msra.mxu0 0.0
      %4798 = vmatprep.subr.mxu0 0.0
      %4799 = vmatpush2.msra.mxu0 0.0
      %4800 = vmatprep.subr.mxu0 0.0
      %4801 = vmatpush2.msra.mxu0 0.0
      %4802 = vmatprep.subr.mxu0 0.0
      %4803 = vmatpush2.msra.mxu0 0.0
      %4804 = vmatprep.subr.mxu0 0.0
      %4805 = vmatpush2.msra.mxu0 0.0
      %4806 = vmatprep.subr.mxu0 0.0
      %4807 = vmatpush2.msra.mxu0 0.0
      %4808 = vmatprep.subr.mxu0 0.0
      %4809 = vmatpush2.msra.mxu0 0.0
      %4810 = vmatprep.subr.mxu0 0.0
      %4811 = vmatpush2.msra.mxu0 0.0
      %4812 = vmatprep.subr.mxu0 0.0
      %4813 = vmatpush2.msra.mxu0 0.0
      %4814 = vmatprep.subr.mxu0 0.0
      %4815 = vmatpush2.msra.mxu0 0.0
      %4816 = vmatprep.subr.mxu0 0.0
      %4817 = vmatpush2.msra.mxu0 0.0
      %4818 = vmatprep.subr.mxu0 0.0
      %4819 = vmatpush2.msra.mxu0 0.0
      %4820 = vmatprep.mubr.f32.mxu0 0.0
      %4821 = vmatmul.mubr.f32.gmra.mxu0 %v4754
      %v4822 = vpop.f32.mrf.mxu0
      %v4823 = vadd.f32 0.0, %v4822
      %v4824 = vpop.f32.mrf.mxu0
      %4825 = vdwg.mxu0
      %4826 = vmatprep.subr.mxu0 0.0
      %4827 = vmatpush1.xpose.msra.mxu0 0.0
      %4828 = vmatprep.subr.mxu0 0.0
      %4829 = vmatpush1.xpose.msra.mxu0 0.0
      %4830 = vmatprep.subr.mxu0 0.0
      %4831 = vmatpush1.xpose.msra.mxu0 0.0
      %4832 = vmatprep.subr.mxu0 0.0
      %4833 = vmatpush1.xpose.msra.mxu0 0.0
      %4834 = vmatprep.subr.mxu0 0.0
      %4835 = vmatpush1.xpose.msra.mxu0 0.0
      %4836 = vmatprep.subr.mxu0 0.0
      %4837 = vmatpush1.xpose.msra.mxu0 0.0
      %4838 = vmatprep.subr.mxu0 0.0
      %4839 = vmatpush1.xpose.msra.mxu0 0.0
      %4840 = vmatprep.subr.mxu0 0.0
      %4841 = vmatpush1.xpose.msra.mxu0 0.0
      %4842 = vmatprep.subr.mxu0 0.0
      %4843 = vmatpush1.xpose.msra.mxu0 0.0
      %4844 = vmatprep.subr.mxu0 0.0
      %4845 = vmatpush1.xpose.msra.mxu0 0.0
      %4846 = vmatprep.subr.mxu0 0.0
      %4847 = vmatpush1.xpose.msra.mxu0 0.0
      %4848 = vmatprep.subr.mxu0 0.0
      %4849 = vmatpush1.xpose.msra.mxu0 0.0
      %4850 = vmatprep.subr.mxu0 0.0
      %4851 = vmatpush1.xpose.msra.mxu0 0.0
      %4852 = vmatprep.subr.mxu0 0.0
      %4853 = vmatpush1.xpose.msra.mxu0 0.0
      %4854 = vmatprep.subr.mxu0 0.0
      %4855 = vmatpush1.xpose.msra.mxu0 0.0
      %4856 = vmatprep.subr.mxu0 0.0
      %4857 = vmatpush1.xpose.msra.mxu0 %v4823
      %4858 = vmatprep.subr.mxu0 0.0
      %4859 = vmatpush2.xpose.msra.mxu0 0.0
      %4860 = vmatprep.subr.mxu0 0.0
      %4861 = vmatpush2.xpose.msra.mxu0 0.0
      %4862 = vmatprep.subr.mxu0 0.0
      %4863 = vmatpush2.xpose.msra.mxu0 0.0
      %4864 = vmatprep.subr.mxu0 0.0
      %4865 = vmatpush2.xpose.msra.mxu0 0.0
      %4866 = vmatprep.subr.mxu0 0.0
      %4867 = vmatpush2.xpose.msra.mxu0 0.0
      %4868 = vmatprep.subr.mxu0 0.0
      %4869 = vmatpush2.xpose.msra.mxu0 0.0
      %4870 = vmatprep.subr.mxu0 0.0
      %4871 = vmatpush2.xpose.msra.mxu0 0.0
      %4872 = vmatprep.subr.mxu0 0.0
      %4873 = vmatpush2.xpose.msra.mxu0 0.0
      %4874 = vmatprep.subr.mxu0 0.0
      %4875 = vmatpush2.xpose.msra.mxu0 0.0
      %4876 = vmatprep.subr.mxu0 0.0
      %4877 = vmatpush2.xpose.msra.mxu0 0.0
      %4878 = vmatprep.subr.mxu0 0.0
      %4879 = vmatpush2.xpose.msra.mxu0 0.0
      %4880 = vmatprep.subr.mxu0 0.0
      %4881 = vmatpush2.xpose.msra.mxu0 0.0
      %4882 = vmatprep.subr.mxu0 0.0
      %4883 = vmatpush2.xpose.msra.mxu0 0.0
      %4884 = vmatprep.subr.mxu0 0.0
      %4885 = vmatpush2.xpose.msra.mxu0 0.0
      %4886 = vmatprep.subr.mxu0 0.0
      %4887 = vmatpush2.xpose.msra.mxu0 0.0
      %4888 = vmatprep.subr.mxu0 0.0
      %4889 = vmatpush2.xpose.msra.mxu0 0.0
      %4890 = vmatprep.mubr.f32.mxu0 0.0
      %4891 = vmatmul.mubr.f32.gmra.mxu0 %v4823
      %v4892 = vpop.f32.mrf.mxu0
      %v4893 = vadd.f32 0.0, %v4892
      %v4894 = vpop.f32.mrf.mxu0
      %4895 = vdwg.mxu0
      %v4896 = vmul.f32 %v4893, 0.375
      %v4897 = vsub.f32 %v4896, %v98
      %v4899 = vsel %vm101, %v4893, 0
      %4901 = vmatprep.subr.mxu0 0.0
      %4902 = vmatpush1.msra.mxu0 0.0
      %4903 = vmatprep.subr.mxu0 0.0
      %4904 = vmatpush1.msra.mxu0 0.0
      %4905 = vmatprep.subr.mxu0 0.0
      %4906 = vmatpush1.msra.mxu0 0.0
      %4907 = vmatprep.subr.mxu0 0.0
      %4908 = vmatpush1.msra.mxu0 0.0
      %4909 = vmatprep.subr.mxu0 0.0
      %4910 = vmatpush1.msra.mxu0 0.0
      %4911 = vmatprep.subr.mxu0 0.0
      %4912 = vmatpush1.msra.mxu0 0.0
      %4913 = vmatprep.subr.mxu0 0.0
      %4914 = vmatpush1.msra.mxu0 0.0
      %4915 = vmatprep.subr.mxu0 0.0
      %4916 = vmatpush1.msra.mxu0 0.0
      %4917 = vmatprep.subr.mxu0 0.0
      %4918 = vmatpush1.msra.mxu0 0.0
      %4919 = vmatprep.subr.mxu0 0.0
      %4920 = vmatpush1.msra.mxu0 0.0
      %4921 = vmatprep.subr.mxu0 0.0
      %4922 = vmatpush1.msra.mxu0 0.0
      %4923 = vmatprep.subr.mxu0 0.0
      %4924 = vmatpush1.msra.mxu0 0.0
      %4925 = vmatprep.subr.mxu0 0.0
      %4926 = vmatpush1.msra.mxu0 0.0
      %4927 = vmatprep.subr.mxu0 0.0
      %4928 = vmatpush1.msra.mxu0 0.0
      %4929 = vmatprep.subr.mxu0 0.0
      %4930 = vmatpush1.msra.mxu0 0.0
      %4931 = vmatprep.subr.mxu0 0.0
      %4932 = vmatpush1.msra.mxu0 %v4897
      %4933 = vmatprep.subr.mxu0 0.0
      %4934 = vmatpush2.msra.mxu0 0.0
      %4935 = vmatprep.subr.mxu0 0.0
      %4936 = vmatpush2.msra.mxu0 0.0
      %4937 = vmatprep.subr.mxu0 0.0
      %4938 = vmatpush2.msra.mxu0 0.0
      %4939 = vmatprep.subr.mxu0 0.0
      %4940 = vmatpush2.msra.mxu0 0.0
      %4941 = vmatprep.subr.mxu0 0.0
      %4942 = vmatpush2.msra.mxu0 0.0
      %4943 = vmatprep.subr.mxu0 0.0
      %4944 = vmatpush2.msra.mxu0 0.0
      %4945 = vmatprep.subr.mxu0 0.0
      %4946 = vmatpush2.msra.mxu0 0.0
      %4947 = vmatprep.subr.mxu0 0.0
      %4948 = vmatpush2.msra.mxu0 0.0
      %4949 = vmatprep.subr.mxu0 0.0
      %4950 = vmatpush2.msra.mxu0 0.0
      %4951 = vmatprep.subr.mxu0 0.0
      %4952 = vmatpush2.msra.mxu0 0.0
      %4953 = vmatprep.subr.mxu0 0.0
      %4954 = vmatpush2.msra.mxu0 0.0
      %4955 = vmatprep.subr.mxu0 0.0
      %4956 = vmatpush2.msra.mxu0 0.0
      %4957 = vmatprep.subr.mxu0 0.0
      %4958 = vmatpush2.msra.mxu0 0.0
      %4959 = vmatprep.subr.mxu0 0.0
      %4960 = vmatpush2.msra.mxu0 0.0
      %4961 = vmatprep.subr.mxu0 0.0
      %4962 = vmatpush2.msra.mxu0 0.0
      %4963 = vmatprep.subr.mxu0 0.0
      %4964 = vmatpush2.msra.mxu0 0.0
      %4965 = vmatprep.mubr.f32.mxu0 0.0
      %4966 = vmatmul.mubr.f32.gmra.mxu0 %v4899
      %v4967 = vpop.f32.mrf.mxu0
      %v4968 = vadd.f32 %v100, %v4967
      %v4969 = vpop.f32.mrf.mxu0
      %4970 = vdwg.mxu0
      %v4972 = vsel %vm101, %v4968, 0
      %4974 = vmatprep.subr.mxu0 0.0
      %4975 = vmatpush1.msra.mxu0 0.0
      %4976 = vmatprep.subr.mxu0 0.0
      %4977 = vmatpush1.msra.mxu0 0.0
      %4978 = vmatprep.subr.mxu0 0.0
      %4979 = vmatpush1.msra.mxu0 0.0
      %4980 = vmatprep.subr.mxu0 0.0
      %4981 = vmatpush1.msra.mxu0 0.0
      %4982 = vmatprep.subr.mxu0 0.0
      %4983 = vmatpush1.msra.mxu0 0.0
      %4984 = vmatprep.subr.mxu0 0.0
      %4985 = vmatpush1.msra.mxu0 0.0
      %4986 = vmatprep.subr.mxu0 0.0
      %4987 = vmatpush1.msra.mxu0 0.0
      %4988 = vmatprep.subr.mxu0 0.0
      %4989 = vmatpush1.msra.mxu0 0.0
      %4990 = vmatprep.subr.mxu0 0.0
      %4991 = vmatpush1.msra.mxu0 0.0
      %4992 = vmatprep.subr.mxu0 0.0
      %4993 = vmatpush1.msra.mxu0 0.0
      %4994 = vmatprep.subr.mxu0 0.0
      %4995 = vmatpush1.msra.mxu0 0.0
      %4996 = vmatprep.subr.mxu0 0.0
      %4997 = vmatpush1.msra.mxu0 0.0
      %4998 = vmatprep.subr.mxu0 0.0
      %4999 = vmatpush1.msra.mxu0 0.0
      %5000 = vmatprep.subr.mxu0 0.0
      %5001 = vmatpush1.msra.mxu0 0.0
      %5002 = vmatprep.subr.mxu0 0.0
      %5003 = vmatpush1.msra.mxu0 0.0
      %5004 = vmatprep.subr.mxu0 0.0
      %5005 = vmatpush1.msra.mxu0 %v4823
      %5006 = vmatprep.subr.mxu0 0.0
      %5007 = vmatpush2.msra.mxu0 0.0
      %5008 = vmatprep.subr.mxu0 0.0
      %5009 = vmatpush2.msra.mxu0 0.0
      %5010 = vmatprep.subr.mxu0 0.0
      %5011 = vmatpush2.msra.mxu0 0.0
      %5012 = vmatprep.subr.mxu0 0.0
      %5013 = vmatpush2.msra.mxu0 0.0
      %5014 = vmatprep.subr.mxu0 0.0
      %5015 = vmatpush2.msra.mxu0 0.0
      %5016 = vmatprep.subr.mxu0 0.0
      %5017 = vmatpush2.msra.mxu0 0.0
      %5018 = vmatprep.subr.mxu0 0.0
      %5019 = vmatpush2.msra.mxu0 0.0
      %5020 = vmatprep.subr.mxu0 0.0
      %5021 = vmatpush2.msra.mxu0 0.0
      %5022 = vmatprep.subr.mxu0 0.0
      %5023 = vmatpush2.msra.mxu0 0.0
      %5024 = vmatprep.subr.mxu0 0.0
      %5025 = vmatpush2.msra.mxu0 0.0
      %5026 = vmatprep.subr.mxu0 0.0
      %5027 = vmatpush2.msra.mxu0 0.0
      %5028 = vmatprep.subr.mxu0 0.0
      %5029 = vmatpush2.msra.mxu0 0.0
      %5030 = vmatprep.subr.mxu0 0.0
      %5031 = vmatpush2.msra.mxu0 0.0
      %5032 = vmatprep.subr.mxu0 0.0
      %5033 = vmatpush2.msra.mxu0 0.0
      %5034 = vmatprep.subr.mxu0 0.0
      %5035 = vmatpush2.msra.mxu0 0.0
      %5036 = vmatprep.subr.mxu0 0.0
      %5037 = vmatpush2.msra.mxu0 0.0
      %5038 = vmatprep.mubr.f32.mxu0 0.0
      %5039 = vmatmul.mubr.f32.gmra.mxu0 %v4972
      %v5040 = vpop.f32.mrf.mxu0
      %v5041 = vadd.f32 0.0, %v5040
      %v5042 = vpop.f32.mrf.mxu0
      %5043 = vdwg.mxu0
      %5044 = vmatprep.subr.mxu0 0.0
      %5045 = vmatpush1.xpose.msra.mxu0 0.0
      %5046 = vmatprep.subr.mxu0 0.0
      %5047 = vmatpush1.xpose.msra.mxu0 0.0
      %5048 = vmatprep.subr.mxu0 0.0
      %5049 = vmatpush1.xpose.msra.mxu0 0.0
      %5050 = vmatprep.subr.mxu0 0.0
      %5051 = vmatpush1.xpose.msra.mxu0 0.0
      %5052 = vmatprep.subr.mxu0 0.0
      %5053 = vmatpush1.xpose.msra.mxu0 0.0
      %5054 = vmatprep.subr.mxu0 0.0
      %5055 = vmatpush1.xpose.msra.mxu0 0.0
      %5056 = vmatprep.subr.mxu0 0.0
      %5057 = vmatpush1.xpose.msra.mxu0 0.0
      %5058 = vmatprep.subr.mxu0 0.0
      %5059 = vmatpush1.xpose.msra.mxu0 0.0
      %5060 = vmatprep.subr.mxu0 0.0
      %5061 = vmatpush1.xpose.msra.mxu0 0.0
      %5062 = vmatprep.subr.mxu0 0.0
      %5063 = vmatpush1.xpose.msra.mxu0 0.0
      %5064 = vmatprep.subr.mxu0 0.0
      %5065 = vmatpush1.xpose.msra.mxu0 0.0
      %5066 = vmatprep.subr.mxu0 0.0
      %5067 = vmatpush1.xpose.msra.mxu0 0.0
      %5068 = vmatprep.subr.mxu0 0.0
      %5069 = vmatpush1.xpose.msra.mxu0 0.0
      %5070 = vmatprep.subr.mxu0 0.0
      %5071 = vmatpush1.xpose.msra.mxu0 0.0
      %5072 = vmatprep.subr.mxu0 0.0
      %5073 = vmatpush1.xpose.msra.mxu0 0.0
      %5074 = vmatprep.subr.mxu0 0.0
      %5075 = vmatpush1.xpose.msra.mxu0 %v5041
      %5076 = vmatprep.subr.mxu0 0.0
      %5077 = vmatpush2.xpose.msra.mxu0 0.0
      %5078 = vmatprep.subr.mxu0 0.0
      %5079 = vmatpush2.xpose.msra.mxu0 0.0
      %5080 = vmatprep.subr.mxu0 0.0
      %5081 = vmatpush2.xpose.msra.mxu0 0.0
      %5082 = vmatprep.subr.mxu0 0.0
      %5083 = vmatpush2.xpose.msra.mxu0 0.0
      %5084 = vmatprep.subr.mxu0 0.0
      %5085 = vmatpush2.xpose.msra.mxu0 0.0
      %5086 = vmatprep.subr.mxu0 0.0
      %5087 = vmatpush2.xpose.msra.mxu0 0.0
      %5088 = vmatprep.subr.mxu0 0.0
      %5089 = vmatpush2.xpose.msra.mxu0 0.0
      %5090 = vmatprep.subr.mxu0 0.0
      %5091 = vmatpush2.xpose.msra.mxu0 0.0
      %5092 = vmatprep.subr.mxu0 0.0
      %5093 = vmatpush2.xpose.msra.mxu0 0.0
      %5094 = vmatprep.subr.mxu0 0.0
      %5095 = vmatpush2.xpose.msra.mxu0 0.0
      %5096 = vmatprep.subr.mxu0 0.0
      %5097 = vmatpush2.xpose.msra.mxu0 0.0
      %5098 = vmatprep.subr.mxu0 0.0
      %5099 = vmatpush2.xpose.msra.mxu0 0.0
      %5100 = vmatprep.subr.mxu0 0.0
      %5101 = vmatpush2.xpose.msra.mxu0 0.0
      %5102 = vmatprep.subr.mxu0 0.0
      %5103 = vmatpush2.xpose.msra.mxu0 0.0
      %5104 = vmatprep.subr.mxu0 0.0
      %5105 = vmatpush2.xpose.msra.mxu0 0.0
      %5106 = vmatprep.subr.mxu0 0.0
      %5107 = vmatpush2.xpose.msra.mxu0 0.0
      %5108 = vmatprep.mubr.f32.mxu0 0.0
      %5109 = vmatmul.mubr.f32.gmra.mxu0 %v5041
      %v5110 = vpop.f32.mrf.mxu0
      %v5111 = vadd.f32 0.0, %v5110
      %v5112 = vpop.f32.mrf.mxu0
      %5113 = vdwg.mxu0
      %v5114 = vmul.f32 %v5111, 0.375
      %v5115 = vsub.f32 %v5114, %v98
      %v5117 = vsel %vm101, %v5111, 0
      %5119 = vmatprep.subr.mxu0 0.0
      %5120 = vmatpush1.msra.mxu0 0.0
      %5121 = vmatprep.subr.mxu0 0.0
      %5122 = vmatpush1.msra.mxu0 0.0
      %5123 = vmatprep.subr.mxu0 0.0
      %5124 = vmatpush1.msra.mxu0 0.0
      %5125 = vmatprep.subr.mxu0 0.0
      %5126 = vmatpush1.msra.mxu0 0.0
      %5127 = vmatprep.subr.mxu0 0.0
      %5128 = vmatpush1.msra.mxu0 0.0
      %5129 = vmatprep.subr.mxu0 0.0
      %5130 = vmatpush1.msra.mxu0 0.0
      %5131 = vmatprep.subr.mxu0 0.0
      %5132 = vmatpush1.msra.mxu0 0.0
      %5133 = vmatprep.subr.mxu0 0.0
      %5134 = vmatpush1.msra.mxu0 0.0
      %5135 = vmatprep.subr.mxu0 0.0
      %5136 = vmatpush1.msra.mxu0 0.0
      %5137 = vmatprep.subr.mxu0 0.0
      %5138 = vmatpush1.msra.mxu0 0.0
      %5139 = vmatprep.subr.mxu0 0.0
      %5140 = vmatpush1.msra.mxu0 0.0
      %5141 = vmatprep.subr.mxu0 0.0
      %5142 = vmatpush1.msra.mxu0 0.0
      %5143 = vmatprep.subr.mxu0 0.0
      %5144 = vmatpush1.msra.mxu0 0.0
      %5145 = vmatprep.subr.mxu0 0.0
      %5146 = vmatpush1.msra.mxu0 0.0
      %5147 = vmatprep.subr.mxu0 0.0
      %5148 = vmatpush1.msra.mxu0 0.0
      %5149 = vmatprep.subr.mxu0 0.0
      %5150 = vmatpush1.msra.mxu0 %v5115
      %5151 = vmatprep.subr.mxu0 0.0
      %5152 = vmatpush2.msra.mxu0 0.0
      %5153 = vmatprep.subr.mxu0 0.0
      %5154 = vmatpush2.msra.mxu0 0.0
      %5155 = vmatprep.subr.mxu0 0.0
      %5156 = vmatpush2.msra.mxu0 0.0
      %5157 = vmatprep.subr.mxu0 0.0
      %5158 = vmatpush2.msra.mxu0 0.0
      %5159 = vmatprep.subr.mxu0 0.0
      %5160 = vmatpush2.msra.mxu0 0.0
      %5161 = vmatprep.subr.mxu0 0.0
      %5162 = vmatpush2.msra.mxu0 0.0
      %5163 = vmatprep.subr.mxu0 0.0
      %5164 = vmatpush2.msra.mxu0 0.0
      %5165 = vmatprep.subr.mxu0 0.0
      %5166 = vmatpush2.msra.mxu0 0.0
      %5167 = vmatprep.subr.mxu0 0.0
      %5168 = vmatpush2.msra.mxu0 0.0
      %5169 = vmatprep.subr.mxu0 0.0
      %5170 = vmatpush2.msra.mxu0 0.0
      %5171 = vmatprep.subr.mxu0 0.0
      %5172 = vmatpush2.msra.mxu0 0.0
      %5173 = vmatprep.subr.mxu0 0.0
      %5174 = vmatpush2.msra.mxu0 0.0
      %5175 = vmatprep.subr.mxu0 0.0
      %5176 = vmatpush2.msra.mxu0 0.0
      %5177 = vmatprep.subr.mxu0 0.0
      %5178 = vmatpush2.msra.mxu0 0.0
      %5179 = vmatprep.subr.mxu0 0.0
      %5180 = vmatpush2.msra.mxu0 0.0
      %5181 = vmatprep.subr.mxu0 0.0
      %5182 = vmatpush2.msra.mxu0 0.0
      %5183 = vmatprep.mubr.f32.mxu0 0.0
      %5184 = vmatmul.mubr.f32.gmra.mxu0 %v5117
      %v5185 = vpop.f32.mrf.mxu0
      %v5186 = vadd.f32 %v100, %v5185
      %v5187 = vpop.f32.mrf.mxu0
      %5188 = vdwg.mxu0
      %v5190 = vsel %vm101, %v5186, 0
      %5192 = vmatprep.subr.mxu0 0.0
      %5193 = vmatpush1.msra.mxu0 0.0
      %5194 = vmatprep.subr.mxu0 0.0
      %5195 = vmatpush1.msra.mxu0 0.0
      %5196 = vmatprep.subr.mxu0 0.0
      %5197 = vmatpush1.msra.mxu0 0.0
      %5198 = vmatprep.subr.mxu0 0.0
      %5199 = vmatpush1.msra.mxu0 0.0
      %5200 = vmatprep.subr.mxu0 0.0
      %5201 = vmatpush1.msra.mxu0 0.0
      %5202 = vmatprep.subr.mxu0 0.0
      %5203 = vmatpush1.msra.mxu0 0.0
      %5204 = vmatprep.subr.mxu0 0.0
      %5205 = vmatpush1.msra.mxu0 0.0
      %5206 = vmatprep.subr.mxu0 0.0
      %5207 = vmatpush1.msra.mxu0 0.0
      %5208 = vmatprep.subr.mxu0 0.0
      %5209 = vmatpush1.msra.mxu0 0.0
      %5210 = vmatprep.subr.mxu0 0.0
      %5211 = vmatpush1.msra.mxu0 0.0
      %5212 = vmatprep.subr.mxu0 0.0
      %5213 = vmatpush1.msra.mxu0 0.0
      %5214 = vmatprep.subr.mxu0 0.0
      %5215 = vmatpush1.msra.mxu0 0.0
      %5216 = vmatprep.subr.mxu0 0.0
      %5217 = vmatpush1.msra.mxu0 0.0
      %5218 = vmatprep.subr.mxu0 0.0
      %5219 = vmatpush1.msra.mxu0 0.0
      %5220 = vmatprep.subr.mxu0 0.0
      %5221 = vmatpush1.msra.mxu0 0.0
      %5222 = vmatprep.subr.mxu0 0.0
      %5223 = vmatpush1.msra.mxu0 %v5041
      %5224 = vmatprep.subr.mxu0 0.0
      %5225 = vmatpush2.msra.mxu0 0.0
      %5226 = vmatprep.subr.mxu0 0.0
      %5227 = vmatpush2.msra.mxu0 0.0
      %5228 = vmatprep.subr.mxu0 0.0
      %5229 = vmatpush2.msra.mxu0 0.0
      %5230 = vmatprep.subr.mxu0 0.0
      %5231 = vmatpush2.msra.mxu0 0.0
      %5232 = vmatprep.subr.mxu0 0.0
      %5233 = vmatpush2.msra.mxu0 0.0
      %5234 = vmatprep.subr.mxu0 0.0
      %5235 = vmatpush2.msra.mxu0 0.0
      %5236 = vmatprep.subr.mxu0 0.0
      %5237 = vmatpush2.msra.mxu0 0.0
      %5238 = vmatprep.subr.mxu0 0.0
      %5239 = vmatpush2.msra.mxu0 0.0
      %5240 = vmatprep.subr.mxu0 0.0
      %5241 = vmatpush2.msra.mxu0 0.0
      %5242 = vmatprep.subr.mxu0 0.0
      %5243 = vmatpush2.msra.mxu0 0.0
      %5244 = vmatprep.subr.mxu0 0.0
      %5245 = vmatpush2.msra.mxu0 0.0
      %5246 = vmatprep.subr.mxu0 0.0
      %5247 = vmatpush2.msra.mxu0 0.0
      %5248 = vmatprep.subr.mxu0 0.0
      %5249 = vmatpush2.msra.mxu0 0.0
      %5250 = vmatprep.subr.mxu0 0.0
      %5251 = vmatpush2.msra.mxu0 0.0
      %5252 = vmatprep.subr.mxu0 0.0
      %5253 = vmatpush2.msra.mxu0 0.0
      %5254 = vmatprep.subr.mxu0 0.0
      %5255 = vmatpush2.msra.mxu0 0.0
      %5256 = vmatprep.mubr.f32.mxu0 0.0
      %5257 = vmatmul.mubr.f32.gmra.mxu0 %v5190
      %v5258 = vpop.f32.mrf.mxu0
      %v5259 = vadd.f32 0.0, %v5258
      %v5260 = vpop.f32.mrf.mxu0
      %5261 = vdwg.mxu0
      %5262 = vmatprep.subr.mxu0 0.0
      %5263 = vmatpush1.xpose.msra.mxu0 0.0
      %5264 = vmatprep.subr.mxu0 0.0
      %5265 = vmatpush1.xpose.msra.mxu0 0.0
      %5266 = vmatprep.subr.mxu0 0.0
      %5267 = vmatpush1.xpose.msra.mxu0 0.0
      %5268 = vmatprep.subr.mxu0 0.0
      %5269 = vmatpush1.xpose.msra.mxu0 0.0
      %5270 = vmatprep.subr.mxu0 0.0
      %5271 = vmatpush1.xpose.msra.mxu0 0.0
      %5272 = vmatprep.subr.mxu0 0.0
      %5273 = vmatpush1.xpose.msra.mxu0 0.0
      %5274 = vmatprep.subr.mxu0 0.0
      %5275 = vmatpush1.xpose.msra.mxu0 0.0
      %5276 = vmatprep.subr.mxu0 0.0
      %5277 = vmatpush1.xpose.msra.mxu0 0.0
      %5278 = vmatprep.subr.mxu0 0.0
      %5279 = vmatpush1.xpose.msra.mxu0 0.0
      %5280 = vmatprep.subr.mxu0 0.0
      %5281 = vmatpush1.xpose.msra.mxu0 0.0
      %5282 = vmatprep.subr.mxu0 0.0
      %5283 = vmatpush1.xpose.msra.mxu0 0.0
      %5284 = vmatprep.subr.mxu0 0.0
      %5285 = vmatpush1.xpose.msra.mxu0 0.0
      %5286 = vmatprep.subr.mxu0 0.0
      %5287 = vmatpush1.xpose.msra.mxu0 0.0
      %5288 = vmatprep.subr.mxu0 0.0
      %5289 = vmatpush1.xpose.msra.mxu0 0.0
      %5290 = vmatprep.subr.mxu0 0.0
      %5291 = vmatpush1.xpose.msra.mxu0 0.0
      %5292 = vmatprep.subr.mxu0 0.0
      %5293 = vmatpush1.xpose.msra.mxu0 %v5259
      %5294 = vmatprep.subr.mxu0 0.0
      %5295 = vmatpush2.xpose.msra.mxu0 0.0
      %5296 = vmatprep.subr.mxu0 0.0
      %5297 = vmatpush2.xpose.msra.mxu0 0.0
      %5298 = vmatprep.subr.mxu0 0.0
      %5299 = vmatpush2.xpose.msra.mxu0 0.0
      %5300 = vmatprep.subr.mxu0 0.0
      %5301 = vmatpush2.xpose.msra.mxu0 0.0
      %5302 = vmatprep.subr.mxu0 0.0
      %5303 = vmatpush2.xpose.msra.mxu0 0.0
      %5304 = vmatprep.subr.mxu0 0.0
      %5305 = vmatpush2.xpose.msra.mxu0 0.0
      %5306 = vmatprep.subr.mxu0 0.0
      %5307 = vmatpush2.xpose.msra.mxu0 0.0
      %5308 = vmatprep.subr.mxu0 0.0
      %5309 = vmatpush2.xpose.msra.mxu0 0.0
      %5310 = vmatprep.subr.mxu0 0.0
      %5311 = vmatpush2.xpose.msra.mxu0 0.0
      %5312 = vmatprep.subr.mxu0 0.0
      %5313 = vmatpush2.xpose.msra.mxu0 0.0
      %5314 = vmatprep.subr.mxu0 0.0
      %5315 = vmatpush2.xpose.msra.mxu0 0.0
      %5316 = vmatprep.subr.mxu0 0.0
      %5317 = vmatpush2.xpose.msra.mxu0 0.0
      %5318 = vmatprep.subr.mxu0 0.0
      %5319 = vmatpush2.xpose.msra.mxu0 0.0
      %5320 = vmatprep.subr.mxu0 0.0
      %5321 = vmatpush2.xpose.msra.mxu0 0.0
      %5322 = vmatprep.subr.mxu0 0.0
      %5323 = vmatpush2.xpose.msra.mxu0 0.0
      %5324 = vmatprep.subr.mxu0 0.0
      %5325 = vmatpush2.xpose.msra.mxu0 0.0
      %5326 = vmatprep.mubr.f32.mxu0 0.0
      %5327 = vmatmul.mubr.f32.gmra.mxu0 %v5259
      %v5328 = vpop.f32.mrf.mxu0
      %v5329 = vadd.f32 0.0, %v5328
      %v5330 = vpop.f32.mrf.mxu0
      %5331 = vdwg.mxu0
      %v5332 = vmul.f32 %v5329, 0.375
      %v5333 = vsub.f32 %v5332, %v98
      %v5335 = vsel %vm101, %v5329, 0
      %5337 = vmatprep.subr.mxu0 0.0
      %5338 = vmatpush1.msra.mxu0 0.0
      %5339 = vmatprep.subr.mxu0 0.0
      %5340 = vmatpush1.msra.mxu0 0.0
      %5341 = vmatprep.subr.mxu0 0.0
      %5342 = vmatpush1.msra.mxu0 0.0
      %5343 = vmatprep.subr.mxu0 0.0
      %5344 = vmatpush1.msra.mxu0 0.0
      %5345 = vmatprep.subr.mxu0 0.0
      %5346 = vmatpush1.msra.mxu0 0.0
      %5347 = vmatprep.subr.mxu0 0.0
      %5348 = vmatpush1.msra.mxu0 0.0
      %5349 = vmatprep.subr.mxu0 0.0
      %5350 = vmatpush1.msra.mxu0 0.0
      %5351 = vmatprep.subr.mxu0 0.0
      %5352 = vmatpush1.msra.mxu0 0.0
      %5353 = vmatprep.subr.mxu0 0.0
      %5354 = vmatpush1.msra.mxu0 0.0
      %5355 = vmatprep.subr.mxu0 0.0
      %5356 = vmatpush1.msra.mxu0 0.0
      %5357 = vmatprep.subr.mxu0 0.0
      %5358 = vmatpush1.msra.mxu0 0.0
      %5359 = vmatprep.subr.mxu0 0.0
      %5360 = vmatpush1.msra.mxu0 0.0
      %5361 = vmatprep.subr.mxu0 0.0
      %5362 = vmatpush1.msra.mxu0 0.0
      %5363 = vmatprep.subr.mxu0 0.0
      %5364 = vmatpush1.msra.mxu0 0.0
      %5365 = vmatprep.subr.mxu0 0.0
      %5366 = vmatpush1.msra.mxu0 0.0
      %5367 = vmatprep.subr.mxu0 0.0
      %5368 = vmatpush1.msra.mxu0 %v5333
      %5369 = vmatprep.subr.mxu0 0.0
      %5370 = vmatpush2.msra.mxu0 0.0
      %5371 = vmatprep.subr.mxu0 0.0
      %5372 = vmatpush2.msra.mxu0 0.0
      %5373 = vmatprep.subr.mxu0 0.0
      %5374 = vmatpush2.msra.mxu0 0.0
      %5375 = vmatprep.subr.mxu0 0.0
      %5376 = vmatpush2.msra.mxu0 0.0
      %5377 = vmatprep.subr.mxu0 0.0
      %5378 = vmatpush2.msra.mxu0 0.0
      %5379 = vmatprep.subr.mxu0 0.0
      %5380 = vmatpush2.msra.mxu0 0.0
      %5381 = vmatprep.subr.mxu0 0.0
      %5382 = vmatpush2.msra.mxu0 0.0
      %5383 = vmatprep.subr.mxu0 0.0
      %5384 = vmatpush2.msra.mxu0 0.0
      %5385 = vmatprep.subr.mxu0 0.0
      %5386 = vmatpush2.msra.mxu0 0.0
      %5387 = vmatprep.subr.mxu0 0.0
      %5388 = vmatpush2.msra.mxu0 0.0
      %5389 = vmatprep.subr.mxu0 0.0
      %5390 = vmatpush2.msra.mxu0 0.0
      %5391 = vmatprep.subr.mxu0 0.0
      %5392 = vmatpush2.msra.mxu0 0.0
      %5393 = vmatprep.subr.mxu0 0.0
      %5394 = vmatpush2.msra.mxu0 0.0
      %5395 = vmatprep.subr.mxu0 0.0
      %5396 = vmatpush2.msra.mxu0 0.0
      %5397 = vmatprep.subr.mxu0 0.0
      %5398 = vmatpush2.msra.mxu0 0.0
      %5399 = vmatprep.subr.mxu0 0.0
      %5400 = vmatpush2.msra.mxu0 0.0
      %5401 = vmatprep.mubr.f32.mxu0 0.0
      %5402 = vmatmul.mubr.f32.gmra.mxu0 %v5335
      %v5403 = vpop.f32.mrf.mxu0
      %v5404 = vadd.f32 %v100, %v5403
      %v5405 = vpop.f32.mrf.mxu0
      %5406 = vdwg.mxu0
      %v5408 = vsel %vm101, %v5404, 0
      %5410 = vmatprep.subr.mxu0 0.0
      %5411 = vmatpush1.msra.mxu0 0.0
      %5412 = vmatprep.subr.mxu0 0.0
      %5413 = vmatpush1.msra.mxu0 0.0
      %5414 = vmatprep.subr.mxu0 0.0
      %5415 = vmatpush1.msra.mxu0 0.0
      %5416 = vmatprep.subr.mxu0 0.0
      %5417 = vmatpush1.msra.mxu0 0.0
      %5418 = vmatprep.subr.mxu0 0.0
      %5419 = vmatpush1.msra.mxu0 0.0
      %5420 = vmatprep.subr.mxu0 0.0
      %5421 = vmatpush1.msra.mxu0 0.0
      %5422 = vmatprep.subr.mxu0 0.0
      %5423 = vmatpush1.msra.mxu0 0.0
      %5424 = vmatprep.subr.mxu0 0.0
      %5425 = vmatpush1.msra.mxu0 0.0
      %5426 = vmatprep.subr.mxu0 0.0
      %5427 = vmatpush1.msra.mxu0 0.0
      %5428 = vmatprep.subr.mxu0 0.0
      %5429 = vmatpush1.msra.mxu0 0.0
      %5430 = vmatprep.subr.mxu0 0.0
      %5431 = vmatpush1.msra.mxu0 0.0
      %5432 = vmatprep.subr.mxu0 0.0
      %5433 = vmatpush1.msra.mxu0 0.0
      %5434 = vmatprep.subr.mxu0 0.0
      %5435 = vmatpush1.msra.mxu0 0.0
      %5436 = vmatprep.subr.mxu0 0.0
      %5437 = vmatpush1.msra.mxu0 0.0
      %5438 = vmatprep.subr.mxu0 0.0
      %5439 = vmatpush1.msra.mxu0 0.0
      %5440 = vmatprep.subr.mxu0 0.0
      %5441 = vmatpush1.msra.mxu0 %v5259
      %5442 = vmatprep.subr.mxu0 0.0
      %5443 = vmatpush2.msra.mxu0 0.0
      %5444 = vmatprep.subr.mxu0 0.0
      %5445 = vmatpush2.msra.mxu0 0.0
      %5446 = vmatprep.subr.mxu0 0.0
      %5447 = vmatpush2.msra.mxu0 0.0
      %5448 = vmatprep.subr.mxu0 0.0
      %5449 = vmatpush2.msra.mxu0 0.0
      %5450 = vmatprep.subr.mxu0 0.0
      %5451 = vmatpush2.msra.mxu0 0.0
      %5452 = vmatprep.subr.mxu0 0.0
      %5453 = vmatpush2.msra.mxu0 0.0
      %5454 = vmatprep.subr.mxu0 0.0
      %5455 = vmatpush2.msra.mxu0 0.0
      %5456 = vmatprep.subr.mxu0 0.0
      %5457 = vmatpush2.msra.mxu0 0.0
      %5458 = vmatprep.subr.mxu0 0.0
      %5459 = vmatpush2.msra.mxu0 0.0
      %5460 = vmatprep.subr.mxu0 0.0
      %5461 = vmatpush2.msra.mxu0 0.0
      %5462 = vmatprep.subr.mxu0 0.0
      %5463 = vmatpush2.msra.mxu0 0.0
      %5464 = vmatprep.subr.mxu0 0.0
      %5465 = vmatpush2.msra.mxu0 0.0
      %5466 = vmatprep.subr.mxu0 0.0
      %5467 = vmatpush2.msra.mxu0 0.0
      %5468 = vmatprep.subr.mxu0 0.0
      %5469 = vmatpush2.msra.mxu0 0.0
      %5470 = vmatprep.subr.mxu0 0.0
      %5471 = vmatpush2.msra.mxu0 0.0
      %5472 = vmatprep.subr.mxu0 0.0
      %5473 = vmatpush2.msra.mxu0 0.0
      %5474 = vmatprep.mubr.f32.mxu0 0.0
      %5475 = vmatmul.mubr.f32.gmra.mxu0 %v5408
      %v5476 = vpop.f32.mrf.mxu0
      %v5477 = vadd.f32 0.0, %v5476
      %v5478 = vpop.f32.mrf.mxu0
      %5479 = vdwg.mxu0
      %v5480 = vld [vmem:[%s1] sm:$0xff]
      %v5481 = vld [vmem:[%s1 + $0x8] sm:$0xff]
      %v5483 = vsel %vm101, %v5480, 0
      %v5486 = vsel %vm101, %v5481, 0
      %5488 = vmatprep.subr.mxu0 0.0
      %5489 = vmatpush1.msra.mxu0 0.0
      %5490 = vmatprep.subr.mxu0 0.0
      %5491 = vmatpush1.msra.mxu0 0.0
      %5492 = vmatprep.subr.mxu0 0.0
      %5493 = vmatpush1.msra.mxu0 0.0
      %5494 = vmatprep.subr.mxu0 0.0
      %5495 = vmatpush1.msra.mxu0 0.0
      %5496 = vmatprep.subr.mxu0 0.0
      %5497 = vmatpush1.msra.mxu0 0.0
      %5498 = vmatprep.subr.mxu0 0.0
      %5499 = vmatpush1.msra.mxu0 0.0
      %5500 = vmatprep.subr.mxu0 0.0
      %5501 = vmatpush1.msra.mxu0 0.0
      %5502 = vmatprep.subr.mxu0 0.0
      %5503 = vmatpush1.msra.mxu0 0.0
      %5504 = vmatprep.subr.mxu0 0.0
      %5505 = vmatpush1.msra.mxu0 0.0
      %5506 = vmatprep.subr.mxu0 0.0
      %5507 = vmatpush1.msra.mxu0 0.0
      %5508 = vmatprep.subr.mxu0 0.0
      %5509 = vmatpush1.msra.mxu0 0.0
      %5510 = vmatprep.subr.mxu0 0.0
      %5511 = vmatpush1.msra.mxu0 0.0
      %5512 = vmatprep.subr.mxu0 0.0
      %5513 = vmatpush1.msra.mxu0 0.0
      %5514 = vmatprep.subr.mxu0 0.0
      %5515 = vmatpush1.msra.mxu0 0.0
      %5516 = vmatprep.subr.mxu0 0.0
      %5517 = vmatpush1.msra.mxu0 0.0
      %5518 = vmatprep.subr.mxu0 0.0
      %5519 = vmatpush1.msra.mxu0 %v5477
      %5520 = vmatprep.subr.mxu0 0.0
      %5521 = vmatpush2.msra.mxu0 0.0
      %5522 = vmatprep.subr.mxu0 0.0
      %5523 = vmatpush2.msra.mxu0 0.0
      %5524 = vmatprep.subr.mxu0 0.0
      %5525 = vmatpush2.msra.mxu0 0.0
      %5526 = vmatprep.subr.mxu0 0.0
      %5527 = vmatpush2.msra.mxu0 0.0
      %5528 = vmatprep.subr.mxu0 0.0
      %5529 = vmatpush2.msra.mxu0 0.0
      %5530 = vmatprep.subr.mxu0 0.0
      %5531 = vmatpush2.msra.mxu0 0.0
      %5532 = vmatprep.subr.mxu0 0.0
      %5533 = vmatpush2.msra.mxu0 0.0
      %5534 = vmatprep.subr.mxu0 0.0
      %5535 = vmatpush2.msra.mxu0 0.0
      %5536 = vmatprep.subr.mxu0 0.0
      %5537 = vmatpush2.msra.mxu0 0.0
      %5538 = vmatprep.subr.mxu0 0.0
      %5539 = vmatpush2.msra.mxu0 0.0
      %5540 = vmatprep.subr.mxu0 0.0
      %5541 = vmatpush2.msra.mxu0 0.0
      %5542 = vmatprep.subr.mxu0 0.0
      %5543 = vmatpush2.msra.mxu0 0.0
      %5544 = vmatprep.subr.mxu0 0.0
      %5545 = vmatpush2.msra.mxu0 0.0
      %5546 = vmatprep.subr.mxu0 0.0
      %5547 = vmatpush2.msra.mxu0 0.0
      %5548 = vmatprep.subr.mxu0 0.0
      %5549 = vmatpush2.msra.mxu0 0.0
      %5550 = vmatprep.subr.mxu0 0.0
      %5551 = vmatpush2.msra.mxu0 0.0
      %5552 = vmatprep.mubr.f32.mxu0 0.0
      %5553 = vmatmul.mubr.f32.gmra.mxu0 %v5483
      %v5554 = vpop.f32.mrf.mxu0
      %v5555 = vadd.f32 0.0, %v5554
      %v5556 = vpop.f32.mrf.mxu0
      %5557 = vmatprep.mubr.f32.mxu0 0.0
      %5558 = vmatmul.mubr.f32.gmra.mxu0 %v5486
      %v5559 = vpop.f32.mrf.mxu0
      %v5560 = vadd.f32 0.0, %v5559
      %v5561 = vpop.f32.mrf.mxu0
      %5562 = vdwg.mxu0
      %5563 = vst [vmem:[#allocation2] sm:$0xff] %v5555
      %5564 = vst [vmem:[#allocation2 + $0x8] sm:$0xff] %v5560
    $region17: #{tpu_custom_call.1} parent=1 // pred_fallthru
      _
    %v5565 = vld [vmem:[%s2] sm:$0xff]
    %v5566 = vld [vmem:[%s2 + $0x8] sm:$0xff]
    %v5567 = vld [vmem:[#allocation2] sm:$0xff]
    %v5568 = vld [vmem:[#allocation2 + $0x8] sm:$0xff]
    %vm5569 = vcmask 130048
    %v5571 = vsel %vm5569, %v5565, 0
    %v5574 = vsel %vm5569, %v5566, 0
    %5576 = vmatprep.subr.mxu0 0.0
    %5577 = vmatpush1.msra.mxu0 0.0
    %5578 = vmatprep.subr.mxu0 0.0
    %5579 = vmatpush1.msra.mxu0 0.0
    %5580 = vmatprep.subr.mxu0 0.0
    %5581 = vmatpush1.msra.mxu0 0.0
    %5582 = vmatprep.subr.mxu0 0.0
    %5583 = vmatpush1.msra.mxu0 0.0
    %5584 = vmatprep.subr.mxu0 0.0
    %5585 = vmatpush1.msra.mxu0 0.0
    %5586 = vmatprep.subr.mxu0 0.0
    %5587 = vmatpush1.msra.mxu0 0.0
    %5588 = vmatprep.subr.mxu0 0.0
    %5589 = vmatpush1.msra.mxu0 0.0
    %5590 = vmatprep.subr.mxu0 0.0
    %5591 = vmatpush1.msra.mxu0 0.0
    %5592 = vmatprep.subr.mxu0 0.0
    %5593 = vmatpush1.msra.mxu0 0.0
    %5594 = vmatprep.subr.mxu0 0.0
    %5595 = vmatpush1.msra.mxu0 0.0
    %5596 = vmatprep.subr.mxu0 0.0
    %5597 = vmatpush1.msra.mxu0 0.0
    %5598 = vmatprep.subr.mxu0 0.0
    %5599 = vmatpush1.msra.mxu0 0.0
    %5600 = vmatprep.subr.mxu0 0.0
    %5601 = vmatpush1.msra.mxu0 0.0
    %5602 = vmatprep.subr.mxu0 0.0
    %5603 = vmatpush1.msra.mxu0 0.0
    %5604 = vmatprep.subr.mxu0 0.0
    %5605 = vmatpush1.msra.mxu0 %v5568
    %5606 = vmatprep.subr.mxu0 0.0
    %5607 = vmatpush1.msra.mxu0 %v5567
    %5608 = vmatprep.subr.mxu0 0.0
    %5609 = vmatpush2.msra.mxu0 0.0
    %5610 = vmatprep.subr.mxu0 0.0
    %5611 = vmatpush2.msra.mxu0 0.0
    %5612 = vmatprep.subr.mxu0 0.0
    %5613 = vmatpush2.msra.mxu0 0.0
    %5614 = vmatprep.subr.mxu0 0.0
    %5615 = vmatpush2.msra.mxu0 0.0
    %5616 = vmatprep.subr.mxu0 0.0
    %5617 = vmatpush2.msra.mxu0 0.0
    %5618 = vmatprep.subr.mxu0 0.0
    %5619 = vmatpush2.msra.mxu0 0.0
    %5620 = vmatprep.subr.mxu0 0.0
    %5621 = vmatpush2.msra.mxu0 0.0
    %5622 = vmatprep.subr.mxu0 0.0
    %5623 = vmatpush2.msra.mxu0 0.0
    %5624 = vmatprep.subr.mxu0 0.0
    %5625 = vmatpush2.msra.mxu0 0.0
    %5626 = vmatprep.subr.mxu0 0.0
    %5627 = vmatpush2.msra.mxu0 0.0
    %5628 = vmatprep.subr.mxu0 0.0
    %5629 = vmatpush2.msra.mxu0 0.0
    %5630 = vmatprep.subr.mxu0 0.0
    %5631 = vmatpush2.msra.mxu0 0.0
    %5632 = vmatprep.subr.mxu0 0.0
    %5633 = vmatpush2.msra.mxu0 0.0
    %5634 = vmatprep.subr.mxu0 0.0
    %5635 = vmatpush2.msra.mxu0 0.0
    %5636 = vmatprep.subr.mxu0 0.0
    %5637 = vmatpush2.msra.mxu0 0.0
    %5638 = vmatprep.subr.mxu0 0.0
    %5639 = vmatpush2.msra.mxu0 0.0
    %5640 = vmatprep.mubr.f32.mxu0 0.0
    %5641 = vmatmul.mubr.f32.gmra.mxu0 %v5571
    %v5642 = vpop.f32.mrf.mxu0
    %v5643 = vadd.f32 0.0, %v5642
    %v5644 = vpop.f32.mrf.mxu0
    %5645 = vmatprep.mubr.f32.mxu0 0.0
    %5646 = vmatmul.mubr.f32.gmra.mxu0 %v5574
    %v5647 = vpop.f32.mrf.mxu0
    %v5648 = vadd.f32 0.0, %v5647
    %v5649 = vpop.f32.mrf.mxu0
    %5650 = vdwg.mxu0
    %v5651 = vmax.f32 %v5643, 0.0
    %v5652 = vmax.f32 %v5648, 0.0
    %5653 = vst [vmem:[#allocation3] sm:$0xff] %v5651
    %5654 = vst [vmem:[#allocation3 + $0x8] sm:$0xff] %v5652
    // Predicated region
    $region18: #{tpu_custom_call.1} parent=1 // pred_check
      _
    $region19: #{tpu_custom_call.1} parent=1 // pred_check_branch
      %5656 = sbr.rel (0) target = $region21
    $region20: #{tpu_custom_call.1} parent=1 // pred_region
      %s5658 = ssub.s32 256, 256
      %5659 = vsyncadd [#allocation4], %s5658
      %s5660 = sshll.u32 [#allocation3], 4
      %s5661 = int_to_ptr.vmem [resolvable:$true] %s5660
      %5666 = dma.vmem_to_hbm [thread:$0]  %s5661, 256, %s3, [#allocation4], 128, 128, 8
    $region21: #{tpu_custom_call.1} parent=1 // pred_fallthru
      _
    // Predicated region
    $region22: #{tpu_custom_call.1} parent=1 // pred_check
      _
    $region23: #{tpu_custom_call.1} parent=1 // pred_check_branch
      %5668 = sbr.rel (0) target = $region25
    $region24: #{tpu_custom_call.1} parent=1 // pred_region
      %5669 = dma.done [#allocation4], 256
    $region25: #{tpu_custom_call.1} parent=1 // pred_fallthru
      _
    %5670 = vsyncpa [#allocation4], 1

</llo_original>
